<compile_context>
chip_gen: v7x
topology: tpu7x:2x2x1
jax: 0.10.0
libtpu: 0.0.40
codegen_flags: <defaults>
</compile_context>

<pallas_src>
import functools

import jax
import jax.numpy as jnp
from jax import lax
from jax.experimental import pallas as pl
from jax.experimental.pallas import tpu as pltpu

_BIG = 1e30     # "route not yet populated" sentinel (same as reference init)
_KNOCK = 4e30   # knockout / mask sentinel (> _BIG; growth stays << f32 max)


def _row_topk(x, k):
    """x (R, L) -> (R, k): the k smallest values of every row, ascending.

    Vectorized across the R sublanes: k masked lane-min sweeps, 2 lane (XLU)
    reductions each, no serial dependence between rows.
    """
    R, L = x.shape
    col = lax.broadcasted_iota(jnp.int32, (R, L), 1)
    col_k = lax.broadcasted_iota(jnp.int32, (R, k), 1)
    vals = jnp.zeros((R, k), jnp.float32)
    for p in range(k):
        m = jnp.min(x, axis=-1, keepdims=True)                      # (R,1)
        vals = jnp.where(col_k == p, m, vals)
        # knock out exactly one (the first) occurrence of the minimum
        pos = jnp.min(jnp.where(x <= m, col, L), axis=-1, keepdims=True)
        x = jnp.where(col == pos, _KNOCK, x)
    return vals


def _combine(a, b, k):
    """Min-plus top-k combine of two (R,k) ascending lists -> (R,k) ascending.

    topK(A (+) B) with (+) the Minkowski (min-plus) sum is associative and
    commutative, so a log-depth tree over time rows is exact.  The k*k
    candidate block is laid along lanes so each knockout is one lane
    reduction.  Column broadcasts use masked lane-mins (no sub-vreg lane
    slicing, no vector integer div/mod).
    """
    R = a.shape[0]
    kk = k * k
    col_k = lax.broadcasted_iota(jnp.int32, (R, k), 1)
    col_kk = lax.broadcasted_iota(jnp.int32, (R, kk), 1)
    cand = jnp.zeros((R, kk), jnp.float32)
    for i in range(k):
        a_i = jnp.min(jnp.where(col_k == i, a, _KNOCK), axis=-1, keepdims=True)
        b_i = jnp.min(jnp.where(col_k == i, b, _KNOCK), axis=-1, keepdims=True)
        lhs_is_i = (col_kk >= i * k) & (col_kk < (i + 1) * k)   # col // k == i
        rhs_is_i = col_kk == i                                   # col %  k == i
        for m in range(1, k):
            rhs_is_i = rhs_is_i | (col_kk == m * k + i)
        cand = jnp.where(lhs_is_i, cand + a_i, cand)
        cand = jnp.where(rhs_is_i, cand + b_i, cand)
    return _row_topk(cand, k)


def _lexicon_ctc_kernel(x_ref, idx_ref, gscore_ref, beam_ref,
                        tree_s, acc_s, beam_s, *, K: int, T_valid: int):
    """Blocks: x (1,TBLK,C), idx (1,TBLK,1), gscore (1,1,1), beam (1,1,K)."""
    s = pl.program_id(1)                 # time-split index
    t = pl.program_id(2)                 # time-tile index within the split
    nt = pl.num_programs(2)

    x = x_ref[0]                                    # (TBLK, C) f32
    TBLK, C = x.shape

    mn = jnp.min(x, axis=-1, keepdims=True)         # (TBLK,1)
    mx = jnp.max(x, axis=-1, keepdims=True)
    rng = mx - mn                                   # unguarded, like PyTorch
    log_rng = jnp.log(rng)

    # ---- greedy best path ------------------------------------------------
    col = lax.broadcasted_iota(jnp.int32, (TBLK, C), 1)
    idx = jnp.min(jnp.where(x >= mx, col, C), axis=-1, keepdims=True)
    idx_ref[0] = idx.astype(idx_ref.dtype)

    # rows past the true sequence length (tile padding) are masked out
    tile_global = s * nt + t
    row = lax.broadcasted_iota(jnp.int32, (TBLK, 1), 0) + tile_global * TBLK
    valid = row < T_valid                           # (TBLK,1)

    # at the argmax, nl == log(rng) - log(rng + 0.001) analytically
    row_best = jnp.where(valid, log_rng - jnp.log(rng + 0.001), 0.0)
    tile_best = jnp.sum(row_best, axis=0, keepdims=True)            # (1,1)

    @pl.when(t == 0)
    def _():
        acc_s[...] = jnp.zeros_like(acc_s)
        col_k = lax.broadcasted_iota(jnp.int32, (1, K), 1)
        beam_s[...] = jnp.where(col_k == 0, 0.0, _BIG).astype(beam_s.dtype)

    acc_s[...] += tile_best

    # ---- per-row K smallest -log(norm), vectorized over TBLK sublanes -----
    # -log((x - mn + 0.001)/(mx - mn)) == log(rng) - log(x - mn + 0.001)
    nl = log_rng - jnp.log(x - mn + 0.001)
    ident = jnp.where(col == 0, 0.0, _BIG)          # min-plus identity row
    nl = jnp.where(valid, nl, ident)                # padded rows -> identity
    tree_s[...] = _row_topk(nl, K)                  # (TBLK, K); never hits HBM

    # ---- log-depth associative tree reduce over the time rows -------------
    r = TBLK
    while r > 1:                                    # static, unrolled at trace
        h = r // 2
        a = tree_s[pl.ds(0, h), :]
        b = tree_s[pl.ds(h, h), :]
        tree_s[pl.ds(0, h), :] = _combine(a, b, K)
        r = h

    # fold this tile into the running carry: one tiny (K,K) combine
    beam_s[...] = _combine(beam_s[...], tree_s[pl.ds(0, 1), :], K)

    @pl.when(t == nt - 1)
    def _():
        gscore_ref[0] = acc_s[...]
        beam_ref[0] = beam_s[...]
    # TODO(synk): emit per-step backpointers if full route reconstruction
    #             (tokens2text + lexicon scoring) is ever needed on-device.


def _minplus_topk_host(a, b, k):
    """Plain-JAX min-plus top-k merge of two (B,k) ascending score lists."""
    cand = (a[:, :, None] + b[:, None, :]).reshape(a.shape[0], k * k)
    neg, _ = lax.top_k(-cand, k)
    return -neg


def lexicon_ctc_decode(emission: jnp.ndarray, *, k: int = 4,
                       t_blk: int | None = None, time_splits: int = 1):
    """emission (B,T,C) f32 ->
         greedy_idx (B,T) i32, greedy_score (B,) f32, beam_scores (B,k) asc.

    `time_splits > 1` splits the time axis into independent partial beam
    reductions merged on the host (set 2 on v7x so both TensorCores work even
    for B=1; leave at 1 on single-TC v5e/v6e).
    """
    B, T, C = emission.shape
    assert C >= k, "need at least k labels for a k-best beam"
    assert time_splits >= 1
    emission = emission.astype(jnp.float32)

    if t_blk is None:
        t_blk = min(256, pl.next_power_of_2(max(T, 8)))
    t_blk = max(8, pl.next_power_of_2(t_blk))   # power of two -> exact halving
    S = time_splits
    T_pad = pl.cdiv(T, t_blk * S) * t_blk * S
    if T_pad != T:
        emission = jnp.pad(emission, ((0, 0), (0, T_pad - T), (0, 0)))
    nt_s = T_pad // (t_blk * S)

    kernel = functools.partial(_lexicon_ctc_kernel, K=k, T_valid=T)
    idx, gscore, beam = pl.pallas_call(
        kernel,
        out_shape=(
            jax.ShapeDtypeStruct((B, T_pad, 1), jnp.int32),
            jax.ShapeDtypeStruct((B, S, 1), jnp.float32),
            jax.ShapeDtypeStruct((B, S, k), jnp.float32),
        ),
        grid=(B, S, nt_s),
        in_specs=[pl.BlockSpec((1, t_blk, C),
                               lambda b, s, t: (b, s * nt_s + t, 0))],
        out_specs=(
            pl.BlockSpec((1, t_blk, 1), lambda b, s, t: (b, s * nt_s + t, 0)),
            pl.BlockSpec((1, 1, 1), lambda b, s, t: (b, s, 0)),
            pl.BlockSpec((1, 1, k), lambda b, s, t: (b, s, 0)),
        ),
        scratch_shapes=[
            pltpu.VMEM((t_blk, k), jnp.float32),   # per-row top-k lists / tree
            pltpu.VMEM((1, 1), jnp.float32),       # greedy score accumulator
            pltpu.VMEM((1, k), jnp.float32),       # beam carry (lane-major)
        ],
        compiler_params=pltpu.CompilerParams(
            dimension_semantics=("parallel", "parallel", "arbitrary")),
        cost_estimate=pl.CostEstimate(
            flops=24 * B * T_pad * C,
            transcendentals=B * T_pad * (C + 2),
            bytes_accessed=B * T_pad * C * 4 + B * T_pad * 4
                           + B * S * (k + 1) * 4),
    )(emission)

    greedy_idx = idx[:, :T, 0]
    greedy_score = jnp.sum(gscore[:, :, 0], axis=1)
    beam_scores = beam[:, 0, :]
    for si in range(1, S):
        beam_scores = _minplus_topk_host(beam_scores, beam[:, si, :], k)
    return greedy_idx, greedy_score, beam_scores
    # TODO(synk): route -> text (tokens2text, unique_consecutive de-dup) and
    #             lexicon word-membership scoring are string/set operations
    #             with no Pallas/TPU equivalent.


def _reference(emission, k=4):
    """Pure-JAX mirror of slow_forward's tensor math (divide-then-log form)."""
    mn = jnp.min(emission, axis=-1, keepdims=True)
    mx = jnp.max(emission, axis=-1, keepdims=True)
    nl = -jnp.log((emission - mn + 0.001) / (mx - mn))
    idx = jnp.argmax(emission, axis=-1)
    gscore = jnp.sum(jnp.min(nl, axis=-1), axis=-1)
    B, T, C = emission.shape

    def step(scores, nl_t):
        cand = (scores[:, :, None] + nl_t[:, None, :]).reshape(B, k * C)
        neg_top, _ = lax.top_k(-cand, k)
        return -neg_top, None

    init = jnp.concatenate(
        [jnp.zeros((B, 1), jnp.float32), jnp.full((B, k - 1), _BIG, jnp.float32)],
        axis=1)
    beam, _ = lax.scan(step, init, jnp.swapaxes(nl, 0, 1))
    return idx, gscore, beam


if __name__ == "__main__":
    B, T, C, K = 2, 24, 32, 4      # batch=2, time=24, num_labels=32, beam K=4
    key = jax.random.PRNGKey(0)
    emission = jax.random.normal(key, (B, T, C), dtype=jnp.float32)

    idx_exp, score_exp, beam_exp = _reference(emission, k=K)

    # 1) default tile (single padded tile), 2) multi-tile carry,
    # 3) time-split partial reductions + host merge (v7x dual-TC path).
    for kwargs in ({}, {"t_blk": 8}, {"t_blk": 8, "time_splits": 2}):
        gi, gs, bs = jax.block_until_ready(
            lexicon_ctc_decode(emission, k=K, **kwargs))
        assert gi.shape == (B, T) and bs.shape == (B, K), kwargs
        assert jnp.array_equal(gi, idx_exp), kwargs
        assert jnp.allclose(gs, score_exp, rtol=1e-5, atol=1e-4), kwargs
        assert jnp.allclose(bs, beam_exp, rtol=1e-5, atol=1e-4), kwargs

    print("KERNEL_OK")
</pallas_src>

<mosaic_0001>
module attributes {stable_mosaic.version = 11 : i64} {
  func.func @_lexicon_ctc_kernel(%arg0: i32, %arg1: i32, %arg2: i32, %arg3: memref<1x32x32xf32, #tpu.memory_space<vmem>>, %arg4: memref<1x32x1xi32, #tpu.memory_space<vmem>>, %arg5: memref<1x1x1xf32, #tpu.memory_space<vmem>>, %arg6: memref<1x1x4xf32, #tpu.memory_space<vmem>>, %arg7: memref<32x4xf32, #tpu.memory_space<vmem>>, %arg8: memref<1x1xf32, #tpu.memory_space<vmem>>, %arg9: memref<1x4xf32, #tpu.memory_space<vmem>>) attributes {dimension_semantics = [#tpu.dimension_semantics<parallel>, #tpu.dimension_semantics<parallel>, #tpu.dimension_semantics<arbitrary>], iteration_bounds = array<i64: 2, 1, 1>, scalar_prefetch = 0 : i64, scratch_operands = 3 : i64, tpu.core_type = #tpu.core_type<tc>, window_params = [{transform_indices = @transform_0, window_bounds = array<i64: 1, 32, 32>}, {transform_indices = @transform_1, window_bounds = array<i64: 1, 32, 1>}, {transform_indices = @transform_2, window_bounds = array<i64: 1, 1, 1>}, {transform_indices = @transform_3, window_bounds = array<i64: 1, 1, 4>}]} {
    %c0 = arith.constant 0 : index
    %c0_0 = arith.constant 0 : index
    %c0_1 = arith.constant 0 : index
    %0 = vector.load %arg3[%c0, %c0_0, %c0_1] : memref<1x32x32xf32, #tpu.memory_space<vmem>>, vector<1x32x32xf32>
    %1 = vector.shape_cast %0 : vector<1x32x32xf32> to vector<32x32xf32>
    %cst = arith.constant dense<0x7F800000> : vector<32xf32>
    %2 = vector.multi_reduction <minimumf>, %1, %cst [1] : vector<32x32xf32> to vector<32xf32>
    %3 = vector.shape_cast %2 : vector<32xf32> to vector<32x1xf32>
    %cst_2 = arith.constant dense<0xFF800000> : vector<32xf32>
    %4 = vector.multi_reduction <maximumf>, %1, %cst_2 [1] : vector<32x32xf32> to vector<32xf32>
    %5 = vector.shape_cast %4 : vector<32xf32> to vector<32x1xf32>
    %6 = arith.subf %5, %3 : vector<32x1xf32>
    %7 = math.log %6 : vector<32x1xf32>
    %8 = tpu.iota {dimensions = array<i32: 1>} : vector<32x32xi32>
    %9 = vector.broadcast %5 : vector<32x1xf32> to vector<32x32xf32>
    %10 = arith.cmpf oge, %1, %9 : vector<32x32xf32>
    %c32_i32 = arith.constant 32 : i32
    %11 = vector.broadcast %c32_i32 : i32 to vector<32x32xi32>
    %12 = arith.select %10, %8, %11 : vector<32x32xi1>, vector<32x32xi32>
    %cst_3 = arith.constant dense<2147483647> : vector<32xi32>
    %13 = vector.multi_reduction <minsi>, %12, %cst_3 [1] : vector<32x32xi32> to vector<32xi32>
    %14 = vector.shape_cast %13 : vector<32xi32> to vector<32x1xi32>
    %c0_4 = arith.constant 0 : index
    %c0_5 = arith.constant 0 : index
    %c0_6 = arith.constant 0 : index
    %15 = vector.load %arg4[%c0_4, %c0_5, %c0_6] : memref<1x32x1xi32, #tpu.memory_space<vmem>>, vector<1x32x1xi32>
    %16 = vector.shape_cast %15 : vector<1x32x1xi32> to vector<32x1xi32>
    %17 = vector.shape_cast %14 : vector<32x1xi32> to vector<1x32x1xi32>
    tpu.vector_store %arg4[%c0_4, %c0_5, %c0_6], %17 {strides = array<i32>} : memref<1x32x1xi32, #tpu.memory_space<vmem>>, vector<1x32x1xi32>,
    %c1_i32 = arith.constant 1 : i32
    %18 = arith.muli %arg1, %c1_i32 : i32
    %19 = arith.addi %18, %arg2 : i32
    %20 = tpu.iota {dimensions = array<i32: 0>} : vector<32x1xi32>
    %c32_i32_7 = arith.constant 32 : i32
    %21 = arith.muli %19, %c32_i32_7 : i32
    %22 = vector.broadcast %21 : i32 to vector<32x1xi32>
    %23 = arith.addi %20, %22 : vector<32x1xi32>
    %c24_i32 = arith.constant 24 : i32
    %24 = vector.broadcast %c24_i32 : i32 to vector<32x1xi32>
    %25 = arith.cmpi slt, %23, %24 : vector<32x1xi32>
    %cst_8 = arith.constant 1.000000e-03 : f32
    %26 = vector.broadcast %cst_8 : f32 to vector<32x1xf32>
    %27 = arith.addf %6, %26 : vector<32x1xf32>
    %28 = math.log %27 : vector<32x1xf32>
    %29 = arith.subf %7, %28 : vector<32x1xf32>
    %cst_9 = arith.constant 0.000000e+00 : f32
    %30 = vector.broadcast %cst_9 : f32 to vector<32x1xf32>
    %31 = arith.select %25, %29, %30 : vector<32x1xi1>, vector<32x1xf32>
    %cst_10 = arith.constant dense<0.000000e+00> : vector<1xf32>
    %32 = vector.multi_reduction <add>, %31, %cst_10 [0] : vector<32x1xf32> to vector<1xf32>
    %33 = vector.shape_cast %32 : vector<1xf32> to vector<1x1xf32>
    %c0_i32 = arith.constant 0 : i32
    %34 = arith.cmpi eq, %arg2, %c0_i32 : i32
    %35 = arith.extui %34 : i1 to i32
    %c0_i32_11 = arith.constant 0 : i32
    %36 = arith.cmpi ne, %35, %c0_i32_11 : i32
    scf.if %36 {
      %cst_460 = arith.constant 0.000000e+00 : f32
      %1338 = vector.broadcast %cst_460 : f32 to vector<1x1xf32>
      %c0_461 = arith.constant 0 : index
      %c0_462 = arith.constant 0 : index
      %1339 = vector.load %arg8[%c0_461, %c0_462] : memref<1x1xf32, #tpu.memory_space<vmem>>, vector<1x1xf32>
      tpu.vector_store %arg8[%c0_461, %c0_462], %1338 {strides = array<i32>} : memref<1x1xf32, #tpu.memory_space<vmem>>, vector<1x1xf32>,
      %1340 = tpu.iota {dimensions = array<i32: 1>} : vector<1x4xi32>
      %c0_i32_463 = arith.constant 0 : i32
      %1341 = vector.broadcast %c0_i32_463 : i32 to vector<1x4xi32>
      %1342 = arith.cmpi eq, %1340, %1341 : vector<1x4xi32>
      %cst_464 = arith.constant 0.000000e+00 : f32
      %cst_465 = arith.constant 1.000000e+30 : f32
      %1343 = vector.broadcast %cst_464 : f32 to vector<1x4xf32>
      %1344 = vector.broadcast %cst_465 : f32 to vector<1x4xf32>
      %1345 = arith.select %1342, %1343, %1344 : vector<1x4xi1>, vector<1x4xf32>
      %c0_466 = arith.constant 0 : index
      %c0_467 = arith.constant 0 : index
      %1346 = vector.load %arg9[%c0_466, %c0_467] : memref<1x4xf32, #tpu.memory_space<vmem>>, vector<1x4xf32>
      tpu.vector_store %arg9[%c0_466, %c0_467], %1345 {strides = array<i32>} : memref<1x4xf32, #tpu.memory_space<vmem>>, vector<1x4xf32>,
    } else {
    }
    %c0_12 = arith.constant 0 : index
    %c0_13 = arith.constant 0 : index
    %37 = vector.load %arg8[%c0_12, %c0_13] : memref<1x1xf32, #tpu.memory_space<vmem>>, vector<1x1xf32>
    %38 = arith.addf %37, %33 : vector<1x1xf32>
    %c0_14 = arith.constant 0 : index
    %c0_15 = arith.constant 0 : index
    %39 = vector.load %arg8[%c0_14, %c0_15] : memref<1x1xf32, #tpu.memory_space<vmem>>, vector<1x1xf32>
    tpu.vector_store %arg8[%c0_14, %c0_15], %38 {strides = array<i32>} : memref<1x1xf32, #tpu.memory_space<vmem>>, vector<1x1xf32>,
    %40 = vector.broadcast %3 : vector<32x1xf32> to vector<32x32xf32>
    %41 = arith.subf %1, %40 : vector<32x32xf32>
    %cst_16 = arith.constant 1.000000e-03 : f32
    %42 = vector.broadcast %cst_16 : f32 to vector<32x32xf32>
    %43 = arith.addf %41, %42 : vector<32x32xf32>
    %44 = math.log %43 : vector<32x32xf32>
    %45 = vector.broadcast %7 : vector<32x1xf32> to vector<32x32xf32>
    %46 = arith.subf %45, %44 : vector<32x32xf32>
    %c0_i32_17 = arith.constant 0 : i32
    %47 = vector.broadcast %c0_i32_17 : i32 to vector<32x32xi32>
    %48 = arith.cmpi eq, %8, %47 : vector<32x32xi32>
    %cst_18 = arith.constant 0.000000e+00 : f32
    %cst_19 = arith.constant 1.000000e+30 : f32
    %49 = vector.broadcast %cst_18 : f32 to vector<32x32xf32>
    %50 = vector.broadcast %cst_19 : f32 to vector<32x32xf32>
    %51 = arith.select %48, %49, %50 : vector<32x32xi1>, vector<32x32xf32>
    %52 = vector.shape_cast %25 : vector<32x1xi1> to vector<32x1xi1>
    %53 = vector.broadcast %52 : vector<32x1xi1> to vector<32x32xi1>
    %54 = arith.select %53, %46, %51 : vector<32x32xi1>, vector<32x32xf32>
    %55 = tpu.iota {dimensions = array<i32: 1>} : vector<32x32xi32>
    %56 = tpu.iota {dimensions = array<i32: 1>} : vector<32x4xi32>
    %cst_20 = arith.constant 0.000000e+00 : f32
    %57 = vector.broadcast %cst_20 : f32 to vector<32x4xf32>
    %cst_21 = arith.constant dense<0x7F800000> : vector<32xf32>
    %58 = vector.multi_reduction <minimumf>, %54, %cst_21 [1] : vector<32x32xf32> to vector<32xf32>
    %59 = vector.shape_cast %58 : vector<32xf32> to vector<32x1xf32>
    %c0_i32_22 = arith.constant 0 : i32
    %60 = vector.broadcast %c0_i32_22 : i32 to vector<32x4xi32>
    %61 = arith.cmpi eq, %56, %60 : vector<32x4xi32>
    %62 = vector.shape_cast %59 : vector<32x1xf32> to vector<32x1xf32>
    %63 = vector.broadcast %62 : vector<32x1xf32> to vector<32x4xf32>
    %64 = arith.select %61, %63, %57 : vector<32x4xi1>, vector<32x4xf32>
    %65 = vector.broadcast %59 : vector<32x1xf32> to vector<32x32xf32>
    %66 = arith.cmpf ole, %54, %65 : vector<32x32xf32>
    %c32_i32_23 = arith.constant 32 : i32
    %67 = vector.broadcast %c32_i32_23 : i32 to vector<32x32xi32>
    %68 = arith.select %66, %55, %67 : vector<32x32xi1>, vector<32x32xi32>
    %cst_24 = arith.constant dense<2147483647> : vector<32xi32>
    %69 = vector.multi_reduction <minsi>, %68, %cst_24 [1] : vector<32x32xi32> to vector<32xi32>
    %70 = vector.shape_cast %69 : vector<32xi32> to vector<32x1xi32>
    %71 = vector.broadcast %70 : vector<32x1xi32> to vector<32x32xi32>
    %72 = arith.cmpi eq, %55, %71 : vector<32x32xi32>
    %cst_25 = arith.constant 4.000000e+30 : f32
    %73 = vector.broadcast %cst_25 : f32 to vector<32x32xf32>
    %74 = arith.select %72, %73, %54 : vector<32x32xi1>, vector<32x32xf32>
    %cst_26 = arith.constant dense<0x7F800000> : vector<32xf32>
    %75 = vector.multi_reduction <minimumf>, %74, %cst_26 [1] : vector<32x32xf32> to vector<32xf32>
    %76 = vector.shape_cast %75 : vector<32xf32> to vector<32x1xf32>
    %c1_i32_27 = arith.constant 1 : i32
    %77 = vector.broadcast %c1_i32_27 : i32 to vector<32x4xi32>
    %78 = arith.cmpi eq, %56, %77 : vector<32x4xi32>
    %79 = vector.shape_cast %76 : vector<32x1xf32> to vector<32x1xf32>
    %80 = vector.broadcast %79 : vector<32x1xf32> to vector<32x4xf32>
    %81 = arith.select %78, %80, %64 : vector<32x4xi1>, vector<32x4xf32>
    %82 = vector.broadcast %76 : vector<32x1xf32> to vector<32x32xf32>
    %83 = arith.cmpf ole, %74, %82 : vector<32x32xf32>
    %c32_i32_28 = arith.constant 32 : i32
    %84 = vector.broadcast %c32_i32_28 : i32 to vector<32x32xi32>
    %85 = arith.select %83, %55, %84 : vector<32x32xi1>, vector<32x32xi32>
    %cst_29 = arith.constant dense<2147483647> : vector<32xi32>
    %86 = vector.multi_reduction <minsi>, %85, %cst_29 [1] : vector<32x32xi32> to vector<32xi32>
    %87 = vector.shape_cast %86 : vector<32xi32> to vector<32x1xi32>
    %88 = vector.broadcast %87 : vector<32x1xi32> to vector<32x32xi32>
    %89 = arith.cmpi eq, %55, %88 : vector<32x32xi32>
    %cst_30 = arith.constant 4.000000e+30 : f32
    %90 = vector.broadcast %cst_30 : f32 to vector<32x32xf32>
    %91 = arith.select %89, %90, %74 : vector<32x32xi1>, vector<32x32xf32>
    %cst_31 = arith.constant dense<0x7F800000> : vector<32xf32>
    %92 = vector.multi_reduction <minimumf>, %91, %cst_31 [1] : vector<32x32xf32> to vector<32xf32>
    %93 = vector.shape_cast %92 : vector<32xf32> to vector<32x1xf32>
    %c2_i32 = arith.constant 2 : i32
    %94 = vector.broadcast %c2_i32 : i32 to vector<32x4xi32>
    %95 = arith.cmpi eq, %56, %94 : vector<32x4xi32>
    %96 = vector.shape_cast %93 : vector<32x1xf32> to vector<32x1xf32>
    %97 = vector.broadcast %96 : vector<32x1xf32> to vector<32x4xf32>
    %98 = arith.select %95, %97, %81 : vector<32x4xi1>, vector<32x4xf32>
    %99 = vector.broadcast %93 : vector<32x1xf32> to vector<32x32xf32>
    %100 = arith.cmpf ole, %91, %99 : vector<32x32xf32>
    %c32_i32_32 = arith.constant 32 : i32
    %101 = vector.broadcast %c32_i32_32 : i32 to vector<32x32xi32>
    %102 = arith.select %100, %55, %101 : vector<32x32xi1>, vector<32x32xi32>
    %cst_33 = arith.constant dense<2147483647> : vector<32xi32>
    %103 = vector.multi_reduction <minsi>, %102, %cst_33 [1] : vector<32x32xi32> to vector<32xi32>
    %104 = vector.shape_cast %103 : vector<32xi32> to vector<32x1xi32>
    %105 = vector.broadcast %104 : vector<32x1xi32> to vector<32x32xi32>
    %106 = arith.cmpi eq, %55, %105 : vector<32x32xi32>
    %cst_34 = arith.constant 4.000000e+30 : f32
    %107 = vector.broadcast %cst_34 : f32 to vector<32x32xf32>
    %108 = arith.select %106, %107, %91 : vector<32x32xi1>, vector<32x32xf32>
    %cst_35 = arith.constant dense<0x7F800000> : vector<32xf32>
    %109 = vector.multi_reduction <minimumf>, %108, %cst_35 [1] : vector<32x32xf32> to vector<32xf32>
    %110 = vector.shape_cast %109 : vector<32xf32> to vector<32x1xf32>
    %c3_i32 = arith.constant 3 : i32
    %111 = vector.broadcast %c3_i32 : i32 to vector<32x4xi32>
    %112 = arith.cmpi eq, %56, %111 : vector<32x4xi32>
    %113 = vector.shape_cast %110 : vector<32x1xf32> to vector<32x1xf32>
    %114 = vector.broadcast %113 : vector<32x1xf32> to vector<32x4xf32>
    %115 = arith.select %112, %114, %98 : vector<32x4xi1>, vector<32x4xf32>
    %c0_36 = arith.constant 0 : index
    %c0_37 = arith.constant 0 : index
    %116 = vector.load %arg7[%c0_36, %c0_37] : memref<32x4xf32, #tpu.memory_space<vmem>>, vector<32x4xf32>
    tpu.vector_store %arg7[%c0_36, %c0_37], %115 {strides = array<i32>} : memref<32x4xf32, #tpu.memory_space<vmem>>, vector<32x4xf32>,
    %c0_38 = arith.constant 0 : index
    %c0_39 = arith.constant 0 : index
    %117 = vector.load %arg7[%c0_38, %c0_39] : memref<32x4xf32, #tpu.memory_space<vmem>>, vector<16x4xf32>
    %c16 = arith.constant 16 : index
    %c0_40 = arith.constant 0 : index
    %118 = vector.load %arg7[%c16, %c0_40] : memref<32x4xf32, #tpu.memory_space<vmem>>, vector<16x4xf32>
    %119 = tpu.iota {dimensions = array<i32: 1>} : vector<16x4xi32>
    %120 = tpu.iota {dimensions = array<i32: 1>} : vector<16x16xi32>
    %cst_41 = arith.constant 0.000000e+00 : f32
    %121 = vector.broadcast %cst_41 : f32 to vector<16x16xf32>
    %c0_i32_42 = arith.constant 0 : i32
    %122 = vector.broadcast %c0_i32_42 : i32 to vector<16x4xi32>
    %123 = arith.cmpi eq, %119, %122 : vector<16x4xi32>
    %cst_43 = arith.constant 4.000000e+30 : f32
    %124 = vector.broadcast %cst_43 : f32 to vector<16x4xf32>
    %125 = arith.select %123, %117, %124 : vector<16x4xi1>, vector<16x4xf32>
    %cst_44 = arith.constant dense<0x7F800000> : vector<16xf32>
    %126 = vector.multi_reduction <minimumf>, %125, %cst_44 [1] : vector<16x4xf32> to vector<16xf32>
    %127 = vector.shape_cast %126 : vector<16xf32> to vector<16x1xf32>
    %c0_i32_45 = arith.constant 0 : i32
    %128 = vector.broadcast %c0_i32_45 : i32 to vector<16x4xi32>
    %129 = arith.cmpi eq, %119, %128 : vector<16x4xi32>
    %cst_46 = arith.constant 4.000000e+30 : f32
    %130 = vector.broadcast %cst_46 : f32 to vector<16x4xf32>
    %131 = arith.select %129, %118, %130 : vector<16x4xi1>, vector<16x4xf32>
    %cst_47 = arith.constant dense<0x7F800000> : vector<16xf32>
    %132 = vector.multi_reduction <minimumf>, %131, %cst_47 [1] : vector<16x4xf32> to vector<16xf32>
    %133 = vector.shape_cast %132 : vector<16xf32> to vector<16x1xf32>
    %c0_i32_48 = arith.constant 0 : i32
    %134 = vector.broadcast %c0_i32_48 : i32 to vector<16x16xi32>
    %135 = arith.cmpi sge, %120, %134 : vector<16x16xi32>
    %c4_i32 = arith.constant 4 : i32
    %136 = vector.broadcast %c4_i32 : i32 to vector<16x16xi32>
    %137 = arith.cmpi slt, %120, %136 : vector<16x16xi32>
    %138 = arith.andi %135, %137 : vector<16x16xi1>
    %c0_i32_49 = arith.constant 0 : i32
    %139 = vector.broadcast %c0_i32_49 : i32 to vector<16x16xi32>
    %140 = arith.cmpi eq, %120, %139 : vector<16x16xi32>
    %c4_i32_50 = arith.constant 4 : i32
    %141 = vector.broadcast %c4_i32_50 : i32 to vector<16x16xi32>
    %142 = arith.cmpi eq, %120, %141 : vector<16x16xi32>
    %143 = arith.ori %140, %142 : vector<16x16xi1>
    %c8_i32 = arith.constant 8 : i32
    %144 = vector.broadcast %c8_i32 : i32 to vector<16x16xi32>
    %145 = arith.cmpi eq, %120, %144 : vector<16x16xi32>
    %146 = arith.ori %143, %145 : vector<16x16xi1>
    %c12_i32 = arith.constant 12 : i32
    %147 = vector.broadcast %c12_i32 : i32 to vector<16x16xi32>
    %148 = arith.cmpi eq, %120, %147 : vector<16x16xi32>
    %149 = arith.ori %146, %148 : vector<16x16xi1>
    %150 = vector.broadcast %127 : vector<16x1xf32> to vector<16x16xf32>
    %151 = arith.addf %121, %150 : vector<16x16xf32>
    %152 = arith.select %138, %151, %121 : vector<16x16xi1>, vector<16x16xf32>
    %153 = vector.broadcast %133 : vector<16x1xf32> to vector<16x16xf32>
    %154 = arith.addf %152, %153 : vector<16x16xf32>
    %155 = arith.select %149, %154, %152 : vector<16x16xi1>, vector<16x16xf32>
    %c1_i32_51 = arith.constant 1 : i32
    %156 = vector.broadcast %c1_i32_51 : i32 to vector<16x4xi32>
    %157 = arith.cmpi eq, %119, %156 : vector<16x4xi32>
    %cst_52 = arith.constant 4.000000e+30 : f32
    %158 = vector.broadcast %cst_52 : f32 to vector<16x4xf32>
    %159 = arith.select %157, %117, %158 : vector<16x4xi1>, vector<16x4xf32>
    %cst_53 = arith.constant dense<0x7F800000> : vector<16xf32>
    %160 = vector.multi_reduction <minimumf>, %159, %cst_53 [1] : vector<16x4xf32> to vector<16xf32>
    %161 = vector.shape_cast %160 : vector<16xf32> to vector<16x1xf32>
    %c1_i32_54 = arith.constant 1 : i32
    %162 = vector.broadcast %c1_i32_54 : i32 to vector<16x4xi32>
    %163 = arith.cmpi eq, %119, %162 : vector<16x4xi32>
    %cst_55 = arith.constant 4.000000e+30 : f32
    %164 = vector.broadcast %cst_55 : f32 to vector<16x4xf32>
    %165 = arith.select %163, %118, %164 : vector<16x4xi1>, vector<16x4xf32>
    %cst_56 = arith.constant dense<0x7F800000> : vector<16xf32>
    %166 = vector.multi_reduction <minimumf>, %165, %cst_56 [1] : vector<16x4xf32> to vector<16xf32>
    %167 = vector.shape_cast %166 : vector<16xf32> to vector<16x1xf32>
    %c4_i32_57 = arith.constant 4 : i32
    %168 = vector.broadcast %c4_i32_57 : i32 to vector<16x16xi32>
    %169 = arith.cmpi sge, %120, %168 : vector<16x16xi32>
    %c8_i32_58 = arith.constant 8 : i32
    %170 = vector.broadcast %c8_i32_58 : i32 to vector<16x16xi32>
    %171 = arith.cmpi slt, %120, %170 : vector<16x16xi32>
    %172 = arith.andi %169, %171 : vector<16x16xi1>
    %c1_i32_59 = arith.constant 1 : i32
    %173 = vector.broadcast %c1_i32_59 : i32 to vector<16x16xi32>
    %174 = arith.cmpi eq, %120, %173 : vector<16x16xi32>
    %c5_i32 = arith.constant 5 : i32
    %175 = vector.broadcast %c5_i32 : i32 to vector<16x16xi32>
    %176 = arith.cmpi eq, %120, %175 : vector<16x16xi32>
    %177 = arith.ori %174, %176 : vector<16x16xi1>
    %c9_i32 = arith.constant 9 : i32
    %178 = vector.broadcast %c9_i32 : i32 to vector<16x16xi32>
    %179 = arith.cmpi eq, %120, %178 : vector<16x16xi32>
    %180 = arith.ori %177, %179 : vector<16x16xi1>
    %c13_i32 = arith.constant 13 : i32
    %181 = vector.broadcast %c13_i32 : i32 to vector<16x16xi32>
    %182 = arith.cmpi eq, %120, %181 : vector<16x16xi32>
    %183 = arith.ori %180, %182 : vector<16x16xi1>
    %184 = vector.broadcast %161 : vector<16x1xf32> to vector<16x16xf32>
    %185 = arith.addf %155, %184 : vector<16x16xf32>
    %186 = arith.select %172, %185, %155 : vector<16x16xi1>, vector<16x16xf32>
    %187 = vector.broadcast %167 : vector<16x1xf32> to vector<16x16xf32>
    %188 = arith.addf %186, %187 : vector<16x16xf32>
    %189 = arith.select %183, %188, %186 : vector<16x16xi1>, vector<16x16xf32>
    %c2_i32_60 = arith.constant 2 : i32
    %190 = vector.broadcast %c2_i32_60 : i32 to vector<16x4xi32>
    %191 = arith.cmpi eq, %119, %190 : vector<16x4xi32>
    %cst_61 = arith.constant 4.000000e+30 : f32
    %192 = vector.broadcast %cst_61 : f32 to vector<16x4xf32>
    %193 = arith.select %191, %117, %192 : vector<16x4xi1>, vector<16x4xf32>
    %cst_62 = arith.constant dense<0x7F800000> : vector<16xf32>
    %194 = vector.multi_reduction <minimumf>, %193, %cst_62 [1] : vector<16x4xf32> to vector<16xf32>
    %195 = vector.shape_cast %194 : vector<16xf32> to vector<16x1xf32>
    %c2_i32_63 = arith.constant 2 : i32
    %196 = vector.broadcast %c2_i32_63 : i32 to vector<16x4xi32>
    %197 = arith.cmpi eq, %119, %196 : vector<16x4xi32>
    %cst_64 = arith.constant 4.000000e+30 : f32
    %198 = vector.broadcast %cst_64 : f32 to vector<16x4xf32>
    %199 = arith.select %197, %118, %198 : vector<16x4xi1>, vector<16x4xf32>
    %cst_65 = arith.constant dense<0x7F800000> : vector<16xf32>
    %200 = vector.multi_reduction <minimumf>, %199, %cst_65 [1] : vector<16x4xf32> to vector<16xf32>
    %201 = vector.shape_cast %200 : vector<16xf32> to vector<16x1xf32>
    %c8_i32_66 = arith.constant 8 : i32
    %202 = vector.broadcast %c8_i32_66 : i32 to vector<16x16xi32>
    %203 = arith.cmpi sge, %120, %202 : vector<16x16xi32>
    %c12_i32_67 = arith.constant 12 : i32
    %204 = vector.broadcast %c12_i32_67 : i32 to vector<16x16xi32>
    %205 = arith.cmpi slt, %120, %204 : vector<16x16xi32>
    %206 = arith.andi %203, %205 : vector<16x16xi1>
    %c2_i32_68 = arith.constant 2 : i32
    %207 = vector.broadcast %c2_i32_68 : i32 to vector<16x16xi32>
    %208 = arith.cmpi eq, %120, %207 : vector<16x16xi32>
    %c6_i32 = arith.constant 6 : i32
    %209 = vector.broadcast %c6_i32 : i32 to vector<16x16xi32>
    %210 = arith.cmpi eq, %120, %209 : vector<16x16xi32>
    %211 = arith.ori %208, %210 : vector<16x16xi1>
    %c10_i32 = arith.constant 10 : i32
    %212 = vector.broadcast %c10_i32 : i32 to vector<16x16xi32>
    %213 = arith.cmpi eq, %120, %212 : vector<16x16xi32>
    %214 = arith.ori %211, %213 : vector<16x16xi1>
    %c14_i32 = arith.constant 14 : i32
    %215 = vector.broadcast %c14_i32 : i32 to vector<16x16xi32>
    %216 = arith.cmpi eq, %120, %215 : vector<16x16xi32>
    %217 = arith.ori %214, %216 : vector<16x16xi1>
    %218 = vector.broadcast %195 : vector<16x1xf32> to vector<16x16xf32>
    %219 = arith.addf %189, %218 : vector<16x16xf32>
    %220 = arith.select %206, %219, %189 : vector<16x16xi1>, vector<16x16xf32>
    %221 = vector.broadcast %201 : vector<16x1xf32> to vector<16x16xf32>
    %222 = arith.addf %220, %221 : vector<16x16xf32>
    %223 = arith.select %217, %222, %220 : vector<16x16xi1>, vector<16x16xf32>
    %c3_i32_69 = arith.constant 3 : i32
    %224 = vector.broadcast %c3_i32_69 : i32 to vector<16x4xi32>
    %225 = arith.cmpi eq, %119, %224 : vector<16x4xi32>
    %cst_70 = arith.constant 4.000000e+30 : f32
    %226 = vector.broadcast %cst_70 : f32 to vector<16x4xf32>
    %227 = arith.select %225, %117, %226 : vector<16x4xi1>, vector<16x4xf32>
    %cst_71 = arith.constant dense<0x7F800000> : vector<16xf32>
    %228 = vector.multi_reduction <minimumf>, %227, %cst_71 [1] : vector<16x4xf32> to vector<16xf32>
    %229 = vector.shape_cast %228 : vector<16xf32> to vector<16x1xf32>
    %c3_i32_72 = arith.constant 3 : i32
    %230 = vector.broadcast %c3_i32_72 : i32 to vector<16x4xi32>
    %231 = arith.cmpi eq, %119, %230 : vector<16x4xi32>
    %cst_73 = arith.constant 4.000000e+30 : f32
    %232 = vector.broadcast %cst_73 : f32 to vector<16x4xf32>
    %233 = arith.select %231, %118, %232 : vector<16x4xi1>, vector<16x4xf32>
    %cst_74 = arith.constant dense<0x7F800000> : vector<16xf32>
    %234 = vector.multi_reduction <minimumf>, %233, %cst_74 [1] : vector<16x4xf32> to vector<16xf32>
    %235 = vector.shape_cast %234 : vector<16xf32> to vector<16x1xf32>
    %c12_i32_75 = arith.constant 12 : i32
    %236 = vector.broadcast %c12_i32_75 : i32 to vector<16x16xi32>
    %237 = arith.cmpi sge, %120, %236 : vector<16x16xi32>
    %c16_i32 = arith.constant 16 : i32
    %238 = vector.broadcast %c16_i32 : i32 to vector<16x16xi32>
    %239 = arith.cmpi slt, %120, %238 : vector<16x16xi32>
    %240 = arith.andi %237, %239 : vector<16x16xi1>
    %c3_i32_76 = arith.constant 3 : i32
    %241 = vector.broadcast %c3_i32_76 : i32 to vector<16x16xi32>
    %242 = arith.cmpi eq, %120, %241 : vector<16x16xi32>
    %c7_i32 = arith.constant 7 : i32
    %243 = vector.broadcast %c7_i32 : i32 to vector<16x16xi32>
    %244 = arith.cmpi eq, %120, %243 : vector<16x16xi32>
    %245 = arith.ori %242, %244 : vector<16x16xi1>
    %c11_i32 = arith.constant 11 : i32
    %246 = vector.broadcast %c11_i32 : i32 to vector<16x16xi32>
    %247 = arith.cmpi eq, %120, %246 : vector<16x16xi32>
    %248 = arith.ori %245, %247 : vector<16x16xi1>
    %c15_i32 = arith.constant 15 : i32
    %249 = vector.broadcast %c15_i32 : i32 to vector<16x16xi32>
    %250 = arith.cmpi eq, %120, %249 : vector<16x16xi32>
    %251 = arith.ori %248, %250 : vector<16x16xi1>
    %252 = vector.broadcast %229 : vector<16x1xf32> to vector<16x16xf32>
    %253 = arith.addf %223, %252 : vector<16x16xf32>
    %254 = arith.select %240, %253, %223 : vector<16x16xi1>, vector<16x16xf32>
    %255 = vector.broadcast %235 : vector<16x1xf32> to vector<16x16xf32>
    %256 = arith.addf %254, %255 : vector<16x16xf32>
    %257 = arith.select %251, %256, %254 : vector<16x16xi1>, vector<16x16xf32>
    %258 = tpu.iota {dimensions = array<i32: 1>} : vector<16x16xi32>
    %259 = tpu.iota {dimensions = array<i32: 1>} : vector<16x4xi32>
    %cst_77 = arith.constant 0.000000e+00 : f32
    %260 = vector.broadcast %cst_77 : f32 to vector<16x4xf32>
    %cst_78 = arith.constant dense<0x7F800000> : vector<16xf32>
    %261 = vector.multi_reduction <minimumf>, %257, %cst_78 [1] : vector<16x16xf32> to vector<16xf32>
    %262 = vector.shape_cast %261 : vector<16xf32> to vector<16x1xf32>
    %c0_i32_79 = arith.constant 0 : i32
    %263 = vector.broadcast %c0_i32_79 : i32 to vector<16x4xi32>
    %264 = arith.cmpi eq, %259, %263 : vector<16x4xi32>
    %265 = vector.shape_cast %262 : vector<16x1xf32> to vector<16x1xf32>
    %266 = vector.broadcast %265 : vector<16x1xf32> to vector<16x4xf32>
    %267 = arith.select %264, %266, %260 : vector<16x4xi1>, vector<16x4xf32>
    %268 = vector.broadcast %262 : vector<16x1xf32> to vector<16x16xf32>
    %269 = arith.cmpf ole, %257, %268 : vector<16x16xf32>
    %c16_i32_80 = arith.constant 16 : i32
    %270 = vector.broadcast %c16_i32_80 : i32 to vector<16x16xi32>
    %271 = arith.select %269, %258, %270 : vector<16x16xi1>, vector<16x16xi32>
    %cst_81 = arith.constant dense<2147483647> : vector<16xi32>
    %272 = vector.multi_reduction <minsi>, %271, %cst_81 [1] : vector<16x16xi32> to vector<16xi32>
    %273 = vector.shape_cast %272 : vector<16xi32> to vector<16x1xi32>
    %274 = vector.broadcast %273 : vector<16x1xi32> to vector<16x16xi32>
    %275 = arith.cmpi eq, %258, %274 : vector<16x16xi32>
    %cst_82 = arith.constant 4.000000e+30 : f32
    %276 = vector.broadcast %cst_82 : f32 to vector<16x16xf32>
    %277 = arith.select %275, %276, %257 : vector<16x16xi1>, vector<16x16xf32>
    %cst_83 = arith.constant dense<0x7F800000> : vector<16xf32>
    %278 = vector.multi_reduction <minimumf>, %277, %cst_83 [1] : vector<16x16xf32> to vector<16xf32>
    %279 = vector.shape_cast %278 : vector<16xf32> to vector<16x1xf32>
    %c1_i32_84 = arith.constant 1 : i32
    %280 = vector.broadcast %c1_i32_84 : i32 to vector<16x4xi32>
    %281 = arith.cmpi eq, %259, %280 : vector<16x4xi32>
    %282 = vector.shape_cast %279 : vector<16x1xf32> to vector<16x1xf32>
    %283 = vector.broadcast %282 : vector<16x1xf32> to vector<16x4xf32>
    %284 = arith.select %281, %283, %267 : vector<16x4xi1>, vector<16x4xf32>
    %285 = vector.broadcast %279 : vector<16x1xf32> to vector<16x16xf32>
    %286 = arith.cmpf ole, %277, %285 : vector<16x16xf32>
    %c16_i32_85 = arith.constant 16 : i32
    %287 = vector.broadcast %c16_i32_85 : i32 to vector<16x16xi32>
    %288 = arith.select %286, %258, %287 : vector<16x16xi1>, vector<16x16xi32>
    %cst_86 = arith.constant dense<2147483647> : vector<16xi32>
    %289 = vector.multi_reduction <minsi>, %288, %cst_86 [1] : vector<16x16xi32> to vector<16xi32>
    %290 = vector.shape_cast %289 : vector<16xi32> to vector<16x1xi32>
    %291 = vector.broadcast %290 : vector<16x1xi32> to vector<16x16xi32>
    %292 = arith.cmpi eq, %258, %291 : vector<16x16xi32>
    %cst_87 = arith.constant 4.000000e+30 : f32
    %293 = vector.broadcast %cst_87 : f32 to vector<16x16xf32>
    %294 = arith.select %292, %293, %277 : vector<16x16xi1>, vector<16x16xf32>
    %cst_88 = arith.constant dense<0x7F800000> : vector<16xf32>
    %295 = vector.multi_reduction <minimumf>, %294, %cst_88 [1] : vector<16x16xf32> to vector<16xf32>
    %296 = vector.shape_cast %295 : vector<16xf32> to vector<16x1xf32>
    %c2_i32_89 = arith.constant 2 : i32
    %297 = vector.broadcast %c2_i32_89 : i32 to vector<16x4xi32>
    %298 = arith.cmpi eq, %259, %297 : vector<16x4xi32>
    %299 = vector.shape_cast %296 : vector<16x1xf32> to vector<16x1xf32>
    %300 = vector.broadcast %299 : vector<16x1xf32> to vector<16x4xf32>
    %301 = arith.select %298, %300, %284 : vector<16x4xi1>, vector<16x4xf32>
    %302 = vector.broadcast %296 : vector<16x1xf32> to vector<16x16xf32>
    %303 = arith.cmpf ole, %294, %302 : vector<16x16xf32>
    %c16_i32_90 = arith.constant 16 : i32
    %304 = vector.broadcast %c16_i32_90 : i32 to vector<16x16xi32>
    %305 = arith.select %303, %258, %304 : vector<16x16xi1>, vector<16x16xi32>
    %cst_91 = arith.constant dense<2147483647> : vector<16xi32>
    %306 = vector.multi_reduction <minsi>, %305, %cst_91 [1] : vector<16x16xi32> to vector<16xi32>
    %307 = vector.shape_cast %306 : vector<16xi32> to vector<16x1xi32>
    %308 = vector.broadcast %307 : vector<16x1xi32> to vector<16x16xi32>
    %309 = arith.cmpi eq, %258, %308 : vector<16x16xi32>
    %cst_92 = arith.constant 4.000000e+30 : f32
    %310 = vector.broadcast %cst_92 : f32 to vector<16x16xf32>
    %311 = arith.select %309, %310, %294 : vector<16x16xi1>, vector<16x16xf32>
    %cst_93 = arith.constant dense<0x7F800000> : vector<16xf32>
    %312 = vector.multi_reduction <minimumf>, %311, %cst_93 [1] : vector<16x16xf32> to vector<16xf32>
    %313 = vector.shape_cast %312 : vector<16xf32> to vector<16x1xf32>
    %c3_i32_94 = arith.constant 3 : i32
    %314 = vector.broadcast %c3_i32_94 : i32 to vector<16x4xi32>
    %315 = arith.cmpi eq, %259, %314 : vector<16x4xi32>
    %316 = vector.shape_cast %313 : vector<16x1xf32> to vector<16x1xf32>
    %317 = vector.broadcast %316 : vector<16x1xf32> to vector<16x4xf32>
    %318 = arith.select %315, %317, %301 : vector<16x4xi1>, vector<16x4xf32>
    %c0_95 = arith.constant 0 : index
    %c0_96 = arith.constant 0 : index
    %319 = vector.load %arg7[%c0_95, %c0_96] : memref<32x4xf32, #tpu.memory_space<vmem>>, vector<16x4xf32>
    tpu.vector_store %arg7[%c0_95, %c0_96], %318 {strides = array<i32>} : memref<32x4xf32, #tpu.memory_space<vmem>>, vector<16x4xf32>,
    %c0_97 = arith.constant 0 : index
    %c0_98 = arith.constant 0 : index
    %320 = vector.load %arg7[%c0_97, %c0_98] : memref<32x4xf32, #tpu.memory_space<vmem>>, vector<8x4xf32>
    %c8 = arith.constant 8 : index
    %c0_99 = arith.constant 0 : index
    %321 = vector.load %arg7[%c8, %c0_99] : memref<32x4xf32, #tpu.memory_space<vmem>>, vector<8x4xf32>
    %322 = tpu.iota {dimensions = array<i32: 1>} : vector<8x4xi32>
    %323 = tpu.iota {dimensions = array<i32: 1>} : vector<8x16xi32>
    %cst_100 = arith.constant 0.000000e+00 : f32
    %324 = vector.broadcast %cst_100 : f32 to vector<8x16xf32>
    %c0_i32_101 = arith.constant 0 : i32
    %325 = vector.broadcast %c0_i32_101 : i32 to vector<8x4xi32>
    %326 = arith.cmpi eq, %322, %325 : vector<8x4xi32>
    %cst_102 = arith.constant 4.000000e+30 : f32
    %327 = vector.broadcast %cst_102 : f32 to vector<8x4xf32>
    %328 = arith.select %326, %320, %327 : vector<8x4xi1>, vector<8x4xf32>
    %cst_103 = arith.constant dense<0x7F800000> : vector<8xf32>
    %329 = vector.multi_reduction <minimumf>, %328, %cst_103 [1] : vector<8x4xf32> to vector<8xf32>
    %330 = vector.shape_cast %329 : vector<8xf32> to vector<8x1xf32>
    %c0_i32_104 = arith.constant 0 : i32
    %331 = vector.broadcast %c0_i32_104 : i32 to vector<8x4xi32>
    %332 = arith.cmpi eq, %322, %331 : vector<8x4xi32>
    %cst_105 = arith.constant 4.000000e+30 : f32
    %333 = vector.broadcast %cst_105 : f32 to vector<8x4xf32>
    %334 = arith.select %332, %321, %333 : vector<8x4xi1>, vector<8x4xf32>
    %cst_106 = arith.constant dense<0x7F800000> : vector<8xf32>
    %335 = vector.multi_reduction <minimumf>, %334, %cst_106 [1] : vector<8x4xf32> to vector<8xf32>
    %336 = vector.shape_cast %335 : vector<8xf32> to vector<8x1xf32>
    %c0_i32_107 = arith.constant 0 : i32
    %337 = vector.broadcast %c0_i32_107 : i32 to vector<8x16xi32>
    %338 = arith.cmpi sge, %323, %337 : vector<8x16xi32>
    %c4_i32_108 = arith.constant 4 : i32
    %339 = vector.broadcast %c4_i32_108 : i32 to vector<8x16xi32>
    %340 = arith.cmpi slt, %323, %339 : vector<8x16xi32>
    %341 = arith.andi %338, %340 : vector<8x16xi1>
    %c0_i32_109 = arith.constant 0 : i32
    %342 = vector.broadcast %c0_i32_109 : i32 to vector<8x16xi32>
    %343 = arith.cmpi eq, %323, %342 : vector<8x16xi32>
    %c4_i32_110 = arith.constant 4 : i32
    %344 = vector.broadcast %c4_i32_110 : i32 to vector<8x16xi32>
    %345 = arith.cmpi eq, %323, %344 : vector<8x16xi32>
    %346 = arith.ori %343, %345 : vector<8x16xi1>
    %c8_i32_111 = arith.constant 8 : i32
    %347 = vector.broadcast %c8_i32_111 : i32 to vector<8x16xi32>
    %348 = arith.cmpi eq, %323, %347 : vector<8x16xi32>
    %349 = arith.ori %346, %348 : vector<8x16xi1>
    %c12_i32_112 = arith.constant 12 : i32
    %350 = vector.broadcast %c12_i32_112 : i32 to vector<8x16xi32>
    %351 = arith.cmpi eq, %323, %350 : vector<8x16xi32>
    %352 = arith.ori %349, %351 : vector<8x16xi1>
    %353 = vector.broadcast %330 : vector<8x1xf32> to vector<8x16xf32>
    %354 = arith.addf %324, %353 : vector<8x16xf32>
    %355 = arith.select %341, %354, %324 : vector<8x16xi1>, vector<8x16xf32>
    %356 = vector.broadcast %336 : vector<8x1xf32> to vector<8x16xf32>
    %357 = arith.addf %355, %356 : vector<8x16xf32>
    %358 = arith.select %352, %357, %355 : vector<8x16xi1>, vector<8x16xf32>
    %c1_i32_113 = arith.constant 1 : i32
    %359 = vector.broadcast %c1_i32_113 : i32 to vector<8x4xi32>
    %360 = arith.cmpi eq, %322, %359 : vector<8x4xi32>
    %cst_114 = arith.constant 4.000000e+30 : f32
    %361 = vector.broadcast %cst_114 : f32 to vector<8x4xf32>
    %362 = arith.select %360, %320, %361 : vector<8x4xi1>, vector<8x4xf32>
    %cst_115 = arith.constant dense<0x7F800000> : vector<8xf32>
    %363 = vector.multi_reduction <minimumf>, %362, %cst_115 [1] : vector<8x4xf32> to vector<8xf32>
    %364 = vector.shape_cast %363 : vector<8xf32> to vector<8x1xf32>
    %c1_i32_116 = arith.constant 1 : i32
    %365 = vector.broadcast %c1_i32_116 : i32 to vector<8x4xi32>
    %366 = arith.cmpi eq, %322, %365 : vector<8x4xi32>
    %cst_117 = arith.constant 4.000000e+30 : f32
    %367 = vector.broadcast %cst_117 : f32 to vector<8x4xf32>
    %368 = arith.select %366, %321, %367 : vector<8x4xi1>, vector<8x4xf32>
    %cst_118 = arith.constant dense<0x7F800000> : vector<8xf32>
    %369 = vector.multi_reduction <minimumf>, %368, %cst_118 [1] : vector<8x4xf32> to vector<8xf32>
    %370 = vector.shape_cast %369 : vector<8xf32> to vector<8x1xf32>
    %c4_i32_119 = arith.constant 4 : i32
    %371 = vector.broadcast %c4_i32_119 : i32 to vector<8x16xi32>
    %372 = arith.cmpi sge, %323, %371 : vector<8x16xi32>
    %c8_i32_120 = arith.constant 8 : i32
    %373 = vector.broadcast %c8_i32_120 : i32 to vector<8x16xi32>
    %374 = arith.cmpi slt, %323, %373 : vector<8x16xi32>
    %375 = arith.andi %372, %374 : vector<8x16xi1>
    %c1_i32_121 = arith.constant 1 : i32
    %376 = vector.broadcast %c1_i32_121 : i32 to vector<8x16xi32>
    %377 = arith.cmpi eq, %323, %376 : vector<8x16xi32>
    %c5_i32_122 = arith.constant 5 : i32
    %378 = vector.broadcast %c5_i32_122 : i32 to vector<8x16xi32>
    %379 = arith.cmpi eq, %323, %378 : vector<8x16xi32>
    %380 = arith.ori %377, %379 : vector<8x16xi1>
    %c9_i32_123 = arith.constant 9 : i32
    %381 = vector.broadcast %c9_i32_123 : i32 to vector<8x16xi32>
    %382 = arith.cmpi eq, %323, %381 : vector<8x16xi32>
    %383 = arith.ori %380, %382 : vector<8x16xi1>
    %c13_i32_124 = arith.constant 13 : i32
    %384 = vector.broadcast %c13_i32_124 : i32 to vector<8x16xi32>
    %385 = arith.cmpi eq, %323, %384 : vector<8x16xi32>
    %386 = arith.ori %383, %385 : vector<8x16xi1>
    %387 = vector.broadcast %364 : vector<8x1xf32> to vector<8x16xf32>
    %388 = arith.addf %358, %387 : vector<8x16xf32>
    %389 = arith.select %375, %388, %358 : vector<8x16xi1>, vector<8x16xf32>
    %390 = vector.broadcast %370 : vector<8x1xf32> to vector<8x16xf32>
    %391 = arith.addf %389, %390 : vector<8x16xf32>
    %392 = arith.select %386, %391, %389 : vector<8x16xi1>, vector<8x16xf32>
    %c2_i32_125 = arith.constant 2 : i32
    %393 = vector.broadcast %c2_i32_125 : i32 to vector<8x4xi32>
    %394 = arith.cmpi eq, %322, %393 : vector<8x4xi32>
    %cst_126 = arith.constant 4.000000e+30 : f32
    %395 = vector.broadcast %cst_126 : f32 to vector<8x4xf32>
    %396 = arith.select %394, %320, %395 : vector<8x4xi1>, vector<8x4xf32>
    %cst_127 = arith.constant dense<0x7F800000> : vector<8xf32>
    %397 = vector.multi_reduction <minimumf>, %396, %cst_127 [1] : vector<8x4xf32> to vector<8xf32>
    %398 = vector.shape_cast %397 : vector<8xf32> to vector<8x1xf32>
    %c2_i32_128 = arith.constant 2 : i32
    %399 = vector.broadcast %c2_i32_128 : i32 to vector<8x4xi32>
    %400 = arith.cmpi eq, %322, %399 : vector<8x4xi32>
    %cst_129 = arith.constant 4.000000e+30 : f32
    %401 = vector.broadcast %cst_129 : f32 to vector<8x4xf32>
    %402 = arith.select %400, %321, %401 : vector<8x4xi1>, vector<8x4xf32>
    %cst_130 = arith.constant dense<0x7F800000> : vector<8xf32>
    %403 = vector.multi_reduction <minimumf>, %402, %cst_130 [1] : vector<8x4xf32> to vector<8xf32>
    %404 = vector.shape_cast %403 : vector<8xf32> to vector<8x1xf32>
    %c8_i32_131 = arith.constant 8 : i32
    %405 = vector.broadcast %c8_i32_131 : i32 to vector<8x16xi32>
    %406 = arith.cmpi sge, %323, %405 : vector<8x16xi32>
    %c12_i32_132 = arith.constant 12 : i32
    %407 = vector.broadcast %c12_i32_132 : i32 to vector<8x16xi32>
    %408 = arith.cmpi slt, %323, %407 : vector<8x16xi32>
    %409 = arith.andi %406, %408 : vector<8x16xi1>
    %c2_i32_133 = arith.constant 2 : i32
    %410 = vector.broadcast %c2_i32_133 : i32 to vector<8x16xi32>
    %411 = arith.cmpi eq, %323, %410 : vector<8x16xi32>
    %c6_i32_134 = arith.constant 6 : i32
    %412 = vector.broadcast %c6_i32_134 : i32 to vector<8x16xi32>
    %413 = arith.cmpi eq, %323, %412 : vector<8x16xi32>
    %414 = arith.ori %411, %413 : vector<8x16xi1>
    %c10_i32_135 = arith.constant 10 : i32
    %415 = vector.broadcast %c10_i32_135 : i32 to vector<8x16xi32>
    %416 = arith.cmpi eq, %323, %415 : vector<8x16xi32>
    %417 = arith.ori %414, %416 : vector<8x16xi1>
    %c14_i32_136 = arith.constant 14 : i32
    %418 = vector.broadcast %c14_i32_136 : i32 to vector<8x16xi32>
    %419 = arith.cmpi eq, %323, %418 : vector<8x16xi32>
    %420 = arith.ori %417, %419 : vector<8x16xi1>
    %421 = vector.broadcast %398 : vector<8x1xf32> to vector<8x16xf32>
    %422 = arith.addf %392, %421 : vector<8x16xf32>
    %423 = arith.select %409, %422, %392 : vector<8x16xi1>, vector<8x16xf32>
    %424 = vector.broadcast %404 : vector<8x1xf32> to vector<8x16xf32>
    %425 = arith.addf %423, %424 : vector<8x16xf32>
    %426 = arith.select %420, %425, %423 : vector<8x16xi1>, vector<8x16xf32>
    %c3_i32_137 = arith.constant 3 : i32
    %427 = vector.broadcast %c3_i32_137 : i32 to vector<8x4xi32>
    %428 = arith.cmpi eq, %322, %427 : vector<8x4xi32>
    %cst_138 = arith.constant 4.000000e+30 : f32
    %429 = vector.broadcast %cst_138 : f32 to vector<8x4xf32>
    %430 = arith.select %428, %320, %429 : vector<8x4xi1>, vector<8x4xf32>
    %cst_139 = arith.constant dense<0x7F800000> : vector<8xf32>
    %431 = vector.multi_reduction <minimumf>, %430, %cst_139 [1] : vector<8x4xf32> to vector<8xf32>
    %432 = vector.shape_cast %431 : vector<8xf32> to vector<8x1xf32>
    %c3_i32_140 = arith.constant 3 : i32
    %433 = vector.broadcast %c3_i32_140 : i32 to vector<8x4xi32>
    %434 = arith.cmpi eq, %322, %433 : vector<8x4xi32>
    %cst_141 = arith.constant 4.000000e+30 : f32
    %435 = vector.broadcast %cst_141 : f32 to vector<8x4xf32>
    %436 = arith.select %434, %321, %435 : vector<8x4xi1>, vector<8x4xf32>
    %cst_142 = arith.constant dense<0x7F800000> : vector<8xf32>
    %437 = vector.multi_reduction <minimumf>, %436, %cst_142 [1] : vector<8x4xf32> to vector<8xf32>
    %438 = vector.shape_cast %437 : vector<8xf32> to vector<8x1xf32>
    %c12_i32_143 = arith.constant 12 : i32
    %439 = vector.broadcast %c12_i32_143 : i32 to vector<8x16xi32>
    %440 = arith.cmpi sge, %323, %439 : vector<8x16xi32>
    %c16_i32_144 = arith.constant 16 : i32
    %441 = vector.broadcast %c16_i32_144 : i32 to vector<8x16xi32>
    %442 = arith.cmpi slt, %323, %441 : vector<8x16xi32>
    %443 = arith.andi %440, %442 : vector<8x16xi1>
    %c3_i32_145 = arith.constant 3 : i32
    %444 = vector.broadcast %c3_i32_145 : i32 to vector<8x16xi32>
    %445 = arith.cmpi eq, %323, %444 : vector<8x16xi32>
    %c7_i32_146 = arith.constant 7 : i32
    %446 = vector.broadcast %c7_i32_146 : i32 to vector<8x16xi32>
    %447 = arith.cmpi eq, %323, %446 : vector<8x16xi32>
    %448 = arith.ori %445, %447 : vector<8x16xi1>
    %c11_i32_147 = arith.constant 11 : i32
    %449 = vector.broadcast %c11_i32_147 : i32 to vector<8x16xi32>
    %450 = arith.cmpi eq, %323, %449 : vector<8x16xi32>
    %451 = arith.ori %448, %450 : vector<8x16xi1>
    %c15_i32_148 = arith.constant 15 : i32
    %452 = vector.broadcast %c15_i32_148 : i32 to vector<8x16xi32>
    %453 = arith.cmpi eq, %323, %452 : vector<8x16xi32>
    %454 = arith.ori %451, %453 : vector<8x16xi1>
    %455 = vector.broadcast %432 : vector<8x1xf32> to vector<8x16xf32>
    %456 = arith.addf %426, %455 : vector<8x16xf32>
    %457 = arith.select %443, %456, %426 : vector<8x16xi1>, vector<8x16xf32>
    %458 = vector.broadcast %438 : vector<8x1xf32> to vector<8x16xf32>
    %459 = arith.addf %457, %458 : vector<8x16xf32>
    %460 = arith.select %454, %459, %457 : vector<8x16xi1>, vector<8x16xf32>
    %461 = tpu.iota {dimensions = array<i32: 1>} : vector<8x16xi32>
    %462 = tpu.iota {dimensions = array<i32: 1>} : vector<8x4xi32>
    %cst_149 = arith.constant 0.000000e+00 : f32
    %463 = vector.broadcast %cst_149 : f32 to vector<8x4xf32>
    %cst_150 = arith.constant dense<0x7F800000> : vector<8xf32>
    %464 = vector.multi_reduction <minimumf>, %460, %cst_150 [1] : vector<8x16xf32> to vector<8xf32>
    %465 = vector.shape_cast %464 : vector<8xf32> to vector<8x1xf32>
    %c0_i32_151 = arith.constant 0 : i32
    %466 = vector.broadcast %c0_i32_151 : i32 to vector<8x4xi32>
    %467 = arith.cmpi eq, %462, %466 : vector<8x4xi32>
    %468 = vector.shape_cast %465 : vector<8x1xf32> to vector<8x1xf32>
    %469 = vector.broadcast %468 : vector<8x1xf32> to vector<8x4xf32>
    %470 = arith.select %467, %469, %463 : vector<8x4xi1>, vector<8x4xf32>
    %471 = vector.broadcast %465 : vector<8x1xf32> to vector<8x16xf32>
    %472 = arith.cmpf ole, %460, %471 : vector<8x16xf32>
    %c16_i32_152 = arith.constant 16 : i32
    %473 = vector.broadcast %c16_i32_152 : i32 to vector<8x16xi32>
    %474 = arith.select %472, %461, %473 : vector<8x16xi1>, vector<8x16xi32>
    %cst_153 = arith.constant dense<2147483647> : vector<8xi32>
    %475 = vector.multi_reduction <minsi>, %474, %cst_153 [1] : vector<8x16xi32> to vector<8xi32>
    %476 = vector.shape_cast %475 : vector<8xi32> to vector<8x1xi32>
    %477 = vector.broadcast %476 : vector<8x1xi32> to vector<8x16xi32>
    %478 = arith.cmpi eq, %461, %477 : vector<8x16xi32>
    %cst_154 = arith.constant 4.000000e+30 : f32
    %479 = vector.broadcast %cst_154 : f32 to vector<8x16xf32>
    %480 = arith.select %478, %479, %460 : vector<8x16xi1>, vector<8x16xf32>
    %cst_155 = arith.constant dense<0x7F800000> : vector<8xf32>
    %481 = vector.multi_reduction <minimumf>, %480, %cst_155 [1] : vector<8x16xf32> to vector<8xf32>
    %482 = vector.shape_cast %481 : vector<8xf32> to vector<8x1xf32>
    %c1_i32_156 = arith.constant 1 : i32
    %483 = vector.broadcast %c1_i32_156 : i32 to vector<8x4xi32>
    %484 = arith.cmpi eq, %462, %483 : vector<8x4xi32>
    %485 = vector.shape_cast %482 : vector<8x1xf32> to vector<8x1xf32>
    %486 = vector.broadcast %485 : vector<8x1xf32> to vector<8x4xf32>
    %487 = arith.select %484, %486, %470 : vector<8x4xi1>, vector<8x4xf32>
    %488 = vector.broadcast %482 : vector<8x1xf32> to vector<8x16xf32>
    %489 = arith.cmpf ole, %480, %488 : vector<8x16xf32>
    %c16_i32_157 = arith.constant 16 : i32
    %490 = vector.broadcast %c16_i32_157 : i32 to vector<8x16xi32>
    %491 = arith.select %489, %461, %490 : vector<8x16xi1>, vector<8x16xi32>
    %cst_158 = arith.constant dense<2147483647> : vector<8xi32>
    %492 = vector.multi_reduction <minsi>, %491, %cst_158 [1] : vector<8x16xi32> to vector<8xi32>
    %493 = vector.shape_cast %492 : vector<8xi32> to vector<8x1xi32>
    %494 = vector.broadcast %493 : vector<8x1xi32> to vector<8x16xi32>
    %495 = arith.cmpi eq, %461, %494 : vector<8x16xi32>
    %cst_159 = arith.constant 4.000000e+30 : f32
    %496 = vector.broadcast %cst_159 : f32 to vector<8x16xf32>
    %497 = arith.select %495, %496, %480 : vector<8x16xi1>, vector<8x16xf32>
    %cst_160 = arith.constant dense<0x7F800000> : vector<8xf32>
    %498 = vector.multi_reduction <minimumf>, %497, %cst_160 [1] : vector<8x16xf32> to vector<8xf32>
    %499 = vector.shape_cast %498 : vector<8xf32> to vector<8x1xf32>
    %c2_i32_161 = arith.constant 2 : i32
    %500 = vector.broadcast %c2_i32_161 : i32 to vector<8x4xi32>
    %501 = arith.cmpi eq, %462, %500 : vector<8x4xi32>
    %502 = vector.shape_cast %499 : vector<8x1xf32> to vector<8x1xf32>
    %503 = vector.broadcast %502 : vector<8x1xf32> to vector<8x4xf32>
    %504 = arith.select %501, %503, %487 : vector<8x4xi1>, vector<8x4xf32>
    %505 = vector.broadcast %499 : vector<8x1xf32> to vector<8x16xf32>
    %506 = arith.cmpf ole, %497, %505 : vector<8x16xf32>
    %c16_i32_162 = arith.constant 16 : i32
    %507 = vector.broadcast %c16_i32_162 : i32 to vector<8x16xi32>
    %508 = arith.select %506, %461, %507 : vector<8x16xi1>, vector<8x16xi32>
    %cst_163 = arith.constant dense<2147483647> : vector<8xi32>
    %509 = vector.multi_reduction <minsi>, %508, %cst_163 [1] : vector<8x16xi32> to vector<8xi32>
    %510 = vector.shape_cast %509 : vector<8xi32> to vector<8x1xi32>
    %511 = vector.broadcast %510 : vector<8x1xi32> to vector<8x16xi32>
    %512 = arith.cmpi eq, %461, %511 : vector<8x16xi32>
    %cst_164 = arith.constant 4.000000e+30 : f32
    %513 = vector.broadcast %cst_164 : f32 to vector<8x16xf32>
    %514 = arith.select %512, %513, %497 : vector<8x16xi1>, vector<8x16xf32>
    %cst_165 = arith.constant dense<0x7F800000> : vector<8xf32>
    %515 = vector.multi_reduction <minimumf>, %514, %cst_165 [1] : vector<8x16xf32> to vector<8xf32>
    %516 = vector.shape_cast %515 : vector<8xf32> to vector<8x1xf32>
    %c3_i32_166 = arith.constant 3 : i32
    %517 = vector.broadcast %c3_i32_166 : i32 to vector<8x4xi32>
    %518 = arith.cmpi eq, %462, %517 : vector<8x4xi32>
    %519 = vector.shape_cast %516 : vector<8x1xf32> to vector<8x1xf32>
    %520 = vector.broadcast %519 : vector<8x1xf32> to vector<8x4xf32>
    %521 = arith.select %518, %520, %504 : vector<8x4xi1>, vector<8x4xf32>
    %c0_167 = arith.constant 0 : index
    %c0_168 = arith.constant 0 : index
    %522 = vector.load %arg7[%c0_167, %c0_168] : memref<32x4xf32, #tpu.memory_space<vmem>>, vector<8x4xf32>
    tpu.vector_store %arg7[%c0_167, %c0_168], %521 {strides = array<i32>} : memref<32x4xf32, #tpu.memory_space<vmem>>, vector<8x4xf32>,
    %c0_169 = arith.constant 0 : index
    %c0_170 = arith.constant 0 : index
    %523 = vector.load %arg7[%c0_169, %c0_170] : memref<32x4xf32, #tpu.memory_space<vmem>>, vector<4x4xf32>
    %c4 = arith.constant 4 : index
    %c0_171 = arith.constant 0 : index
    %524 = vector.load %arg7[%c4, %c0_171] : memref<32x4xf32, #tpu.memory_space<vmem>>, vector<4x4xf32>
    %525 = tpu.iota {dimensions = array<i32: 1>} : vector<4x4xi32>
    %526 = tpu.iota {dimensions = array<i32: 1>} : vector<4x16xi32>
    %cst_172 = arith.constant 0.000000e+00 : f32
    %527 = vector.broadcast %cst_172 : f32 to vector<4x16xf32>
    %c0_i32_173 = arith.constant 0 : i32
    %528 = vector.broadcast %c0_i32_173 : i32 to vector<4x4xi32>
    %529 = arith.cmpi eq, %525, %528 : vector<4x4xi32>
    %cst_174 = arith.constant 4.000000e+30 : f32
    %530 = vector.broadcast %cst_174 : f32 to vector<4x4xf32>
    %531 = arith.select %529, %523, %530 : vector<4x4xi1>, vector<4x4xf32>
    %cst_175 = arith.constant dense<0x7F800000> : vector<4xf32>
    %532 = vector.multi_reduction <minimumf>, %531, %cst_175 [1] : vector<4x4xf32> to vector<4xf32>
    %533 = vector.shape_cast %532 : vector<4xf32> to vector<4x1xf32>
    %c0_i32_176 = arith.constant 0 : i32
    %534 = vector.broadcast %c0_i32_176 : i32 to vector<4x4xi32>
    %535 = arith.cmpi eq, %525, %534 : vector<4x4xi32>
    %cst_177 = arith.constant 4.000000e+30 : f32
    %536 = vector.broadcast %cst_177 : f32 to vector<4x4xf32>
    %537 = arith.select %535, %524, %536 : vector<4x4xi1>, vector<4x4xf32>
    %cst_178 = arith.constant dense<0x7F800000> : vector<4xf32>
    %538 = vector.multi_reduction <minimumf>, %537, %cst_178 [1] : vector<4x4xf32> to vector<4xf32>
    %539 = vector.shape_cast %538 : vector<4xf32> to vector<4x1xf32>
    %c0_i32_179 = arith.constant 0 : i32
    %540 = vector.broadcast %c0_i32_179 : i32 to vector<4x16xi32>
    %541 = arith.cmpi sge, %526, %540 : vector<4x16xi32>
    %c4_i32_180 = arith.constant 4 : i32
    %542 = vector.broadcast %c4_i32_180 : i32 to vector<4x16xi32>
    %543 = arith.cmpi slt, %526, %542 : vector<4x16xi32>
    %544 = arith.andi %541, %543 : vector<4x16xi1>
    %c0_i32_181 = arith.constant 0 : i32
    %545 = vector.broadcast %c0_i32_181 : i32 to vector<4x16xi32>
    %546 = arith.cmpi eq, %526, %545 : vector<4x16xi32>
    %c4_i32_182 = arith.constant 4 : i32
    %547 = vector.broadcast %c4_i32_182 : i32 to vector<4x16xi32>
    %548 = arith.cmpi eq, %526, %547 : vector<4x16xi32>
    %549 = arith.ori %546, %548 : vector<4x16xi1>
    %c8_i32_183 = arith.constant 8 : i32
    %550 = vector.broadcast %c8_i32_183 : i32 to vector<4x16xi32>
    %551 = arith.cmpi eq, %526, %550 : vector<4x16xi32>
    %552 = arith.ori %549, %551 : vector<4x16xi1>
    %c12_i32_184 = arith.constant 12 : i32
    %553 = vector.broadcast %c12_i32_184 : i32 to vector<4x16xi32>
    %554 = arith.cmpi eq, %526, %553 : vector<4x16xi32>
    %555 = arith.ori %552, %554 : vector<4x16xi1>
    %556 = vector.broadcast %533 : vector<4x1xf32> to vector<4x16xf32>
    %557 = arith.addf %527, %556 : vector<4x16xf32>
    %558 = arith.select %544, %557, %527 : vector<4x16xi1>, vector<4x16xf32>
    %559 = vector.broadcast %539 : vector<4x1xf32> to vector<4x16xf32>
    %560 = arith.addf %558, %559 : vector<4x16xf32>
    %561 = arith.select %555, %560, %558 : vector<4x16xi1>, vector<4x16xf32>
    %c1_i32_185 = arith.constant 1 : i32
    %562 = vector.broadcast %c1_i32_185 : i32 to vector<4x4xi32>
    %563 = arith.cmpi eq, %525, %562 : vector<4x4xi32>
    %cst_186 = arith.constant 4.000000e+30 : f32
    %564 = vector.broadcast %cst_186 : f32 to vector<4x4xf32>
    %565 = arith.select %563, %523, %564 : vector<4x4xi1>, vector<4x4xf32>
    %cst_187 = arith.constant dense<0x7F800000> : vector<4xf32>
    %566 = vector.multi_reduction <minimumf>, %565, %cst_187 [1] : vector<4x4xf32> to vector<4xf32>
    %567 = vector.shape_cast %566 : vector<4xf32> to vector<4x1xf32>
    %c1_i32_188 = arith.constant 1 : i32
    %568 = vector.broadcast %c1_i32_188 : i32 to vector<4x4xi32>
    %569 = arith.cmpi eq, %525, %568 : vector<4x4xi32>
    %cst_189 = arith.constant 4.000000e+30 : f32
    %570 = vector.broadcast %cst_189 : f32 to vector<4x4xf32>
    %571 = arith.select %569, %524, %570 : vector<4x4xi1>, vector<4x4xf32>
    %cst_190 = arith.constant dense<0x7F800000> : vector<4xf32>
    %572 = vector.multi_reduction <minimumf>, %571, %cst_190 [1] : vector<4x4xf32> to vector<4xf32>
    %573 = vector.shape_cast %572 : vector<4xf32> to vector<4x1xf32>
    %c4_i32_191 = arith.constant 4 : i32
    %574 = vector.broadcast %c4_i32_191 : i32 to vector<4x16xi32>
    %575 = arith.cmpi sge, %526, %574 : vector<4x16xi32>
    %c8_i32_192 = arith.constant 8 : i32
    %576 = vector.broadcast %c8_i32_192 : i32 to vector<4x16xi32>
    %577 = arith.cmpi slt, %526, %576 : vector<4x16xi32>
    %578 = arith.andi %575, %577 : vector<4x16xi1>
    %c1_i32_193 = arith.constant 1 : i32
    %579 = vector.broadcast %c1_i32_193 : i32 to vector<4x16xi32>
    %580 = arith.cmpi eq, %526, %579 : vector<4x16xi32>
    %c5_i32_194 = arith.constant 5 : i32
    %581 = vector.broadcast %c5_i32_194 : i32 to vector<4x16xi32>
    %582 = arith.cmpi eq, %526, %581 : vector<4x16xi32>
    %583 = arith.ori %580, %582 : vector<4x16xi1>
    %c9_i32_195 = arith.constant 9 : i32
    %584 = vector.broadcast %c9_i32_195 : i32 to vector<4x16xi32>
    %585 = arith.cmpi eq, %526, %584 : vector<4x16xi32>
    %586 = arith.ori %583, %585 : vector<4x16xi1>
    %c13_i32_196 = arith.constant 13 : i32
    %587 = vector.broadcast %c13_i32_196 : i32 to vector<4x16xi32>
    %588 = arith.cmpi eq, %526, %587 : vector<4x16xi32>
    %589 = arith.ori %586, %588 : vector<4x16xi1>
    %590 = vector.broadcast %567 : vector<4x1xf32> to vector<4x16xf32>
    %591 = arith.addf %561, %590 : vector<4x16xf32>
    %592 = arith.select %578, %591, %561 : vector<4x16xi1>, vector<4x16xf32>
    %593 = vector.broadcast %573 : vector<4x1xf32> to vector<4x16xf32>
    %594 = arith.addf %592, %593 : vector<4x16xf32>
    %595 = arith.select %589, %594, %592 : vector<4x16xi1>, vector<4x16xf32>
    %c2_i32_197 = arith.constant 2 : i32
    %596 = vector.broadcast %c2_i32_197 : i32 to vector<4x4xi32>
    %597 = arith.cmpi eq, %525, %596 : vector<4x4xi32>
    %cst_198 = arith.constant 4.000000e+30 : f32
    %598 = vector.broadcast %cst_198 : f32 to vector<4x4xf32>
    %599 = arith.select %597, %523, %598 : vector<4x4xi1>, vector<4x4xf32>
    %cst_199 = arith.constant dense<0x7F800000> : vector<4xf32>
    %600 = vector.multi_reduction <minimumf>, %599, %cst_199 [1] : vector<4x4xf32> to vector<4xf32>
    %601 = vector.shape_cast %600 : vector<4xf32> to vector<4x1xf32>
    %c2_i32_200 = arith.constant 2 : i32
    %602 = vector.broadcast %c2_i32_200 : i32 to vector<4x4xi32>
    %603 = arith.cmpi eq, %525, %602 : vector<4x4xi32>
    %cst_201 = arith.constant 4.000000e+30 : f32
    %604 = vector.broadcast %cst_201 : f32 to vector<4x4xf32>
    %605 = arith.select %603, %524, %604 : vector<4x4xi1>, vector<4x4xf32>
    %cst_202 = arith.constant dense<0x7F800000> : vector<4xf32>
    %606 = vector.multi_reduction <minimumf>, %605, %cst_202 [1] : vector<4x4xf32> to vector<4xf32>
    %607 = vector.shape_cast %606 : vector<4xf32> to vector<4x1xf32>
    %c8_i32_203 = arith.constant 8 : i32
    %608 = vector.broadcast %c8_i32_203 : i32 to vector<4x16xi32>
    %609 = arith.cmpi sge, %526, %608 : vector<4x16xi32>
    %c12_i32_204 = arith.constant 12 : i32
    %610 = vector.broadcast %c12_i32_204 : i32 to vector<4x16xi32>
    %611 = arith.cmpi slt, %526, %610 : vector<4x16xi32>
    %612 = arith.andi %609, %611 : vector<4x16xi1>
    %c2_i32_205 = arith.constant 2 : i32
    %613 = vector.broadcast %c2_i32_205 : i32 to vector<4x16xi32>
    %614 = arith.cmpi eq, %526, %613 : vector<4x16xi32>
    %c6_i32_206 = arith.constant 6 : i32
    %615 = vector.broadcast %c6_i32_206 : i32 to vector<4x16xi32>
    %616 = arith.cmpi eq, %526, %615 : vector<4x16xi32>
    %617 = arith.ori %614, %616 : vector<4x16xi1>
    %c10_i32_207 = arith.constant 10 : i32
    %618 = vector.broadcast %c10_i32_207 : i32 to vector<4x16xi32>
    %619 = arith.cmpi eq, %526, %618 : vector<4x16xi32>
    %620 = arith.ori %617, %619 : vector<4x16xi1>
    %c14_i32_208 = arith.constant 14 : i32
    %621 = vector.broadcast %c14_i32_208 : i32 to vector<4x16xi32>
    %622 = arith.cmpi eq, %526, %621 : vector<4x16xi32>
    %623 = arith.ori %620, %622 : vector<4x16xi1>
    %624 = vector.broadcast %601 : vector<4x1xf32> to vector<4x16xf32>
    %625 = arith.addf %595, %624 : vector<4x16xf32>
    %626 = arith.select %612, %625, %595 : vector<4x16xi1>, vector<4x16xf32>
    %627 = vector.broadcast %607 : vector<4x1xf32> to vector<4x16xf32>
    %628 = arith.addf %626, %627 : vector<4x16xf32>
    %629 = arith.select %623, %628, %626 : vector<4x16xi1>, vector<4x16xf32>
    %c3_i32_209 = arith.constant 3 : i32
    %630 = vector.broadcast %c3_i32_209 : i32 to vector<4x4xi32>
    %631 = arith.cmpi eq, %525, %630 : vector<4x4xi32>
    %cst_210 = arith.constant 4.000000e+30 : f32
    %632 = vector.broadcast %cst_210 : f32 to vector<4x4xf32>
    %633 = arith.select %631, %523, %632 : vector<4x4xi1>, vector<4x4xf32>
    %cst_211 = arith.constant dense<0x7F800000> : vector<4xf32>
    %634 = vector.multi_reduction <minimumf>, %633, %cst_211 [1] : vector<4x4xf32> to vector<4xf32>
    %635 = vector.shape_cast %634 : vector<4xf32> to vector<4x1xf32>
    %c3_i32_212 = arith.constant 3 : i32
    %636 = vector.broadcast %c3_i32_212 : i32 to vector<4x4xi32>
    %637 = arith.cmpi eq, %525, %636 : vector<4x4xi32>
    %cst_213 = arith.constant 4.000000e+30 : f32
    %638 = vector.broadcast %cst_213 : f32 to vector<4x4xf32>
    %639 = arith.select %637, %524, %638 : vector<4x4xi1>, vector<4x4xf32>
    %cst_214 = arith.constant dense<0x7F800000> : vector<4xf32>
    %640 = vector.multi_reduction <minimumf>, %639, %cst_214 [1] : vector<4x4xf32> to vector<4xf32>
    %641 = vector.shape_cast %640 : vector<4xf32> to vector<4x1xf32>
    %c12_i32_215 = arith.constant 12 : i32
    %642 = vector.broadcast %c12_i32_215 : i32 to vector<4x16xi32>
    %643 = arith.cmpi sge, %526, %642 : vector<4x16xi32>
    %c16_i32_216 = arith.constant 16 : i32
    %644 = vector.broadcast %c16_i32_216 : i32 to vector<4x16xi32>
    %645 = arith.cmpi slt, %526, %644 : vector<4x16xi32>
    %646 = arith.andi %643, %645 : vector<4x16xi1>
    %c3_i32_217 = arith.constant 3 : i32
    %647 = vector.broadcast %c3_i32_217 : i32 to vector<4x16xi32>
    %648 = arith.cmpi eq, %526, %647 : vector<4x16xi32>
    %c7_i32_218 = arith.constant 7 : i32
    %649 = vector.broadcast %c7_i32_218 : i32 to vector<4x16xi32>
    %650 = arith.cmpi eq, %526, %649 : vector<4x16xi32>
    %651 = arith.ori %648, %650 : vector<4x16xi1>
    %c11_i32_219 = arith.constant 11 : i32
    %652 = vector.broadcast %c11_i32_219 : i32 to vector<4x16xi32>
    %653 = arith.cmpi eq, %526, %652 : vector<4x16xi32>
    %654 = arith.ori %651, %653 : vector<4x16xi1>
    %c15_i32_220 = arith.constant 15 : i32
    %655 = vector.broadcast %c15_i32_220 : i32 to vector<4x16xi32>
    %656 = arith.cmpi eq, %526, %655 : vector<4x16xi32>
    %657 = arith.ori %654, %656 : vector<4x16xi1>
    %658 = vector.broadcast %635 : vector<4x1xf32> to vector<4x16xf32>
    %659 = arith.addf %629, %658 : vector<4x16xf32>
    %660 = arith.select %646, %659, %629 : vector<4x16xi1>, vector<4x16xf32>
    %661 = vector.broadcast %641 : vector<4x1xf32> to vector<4x16xf32>
    %662 = arith.addf %660, %661 : vector<4x16xf32>
    %663 = arith.select %657, %662, %660 : vector<4x16xi1>, vector<4x16xf32>
    %664 = tpu.iota {dimensions = array<i32: 1>} : vector<4x16xi32>
    %665 = tpu.iota {dimensions = array<i32: 1>} : vector<4x4xi32>
    %cst_221 = arith.constant 0.000000e+00 : f32
    %666 = vector.broadcast %cst_221 : f32 to vector<4x4xf32>
    %cst_222 = arith.constant dense<0x7F800000> : vector<4xf32>
    %667 = vector.multi_reduction <minimumf>, %663, %cst_222 [1] : vector<4x16xf32> to vector<4xf32>
    %668 = vector.shape_cast %667 : vector<4xf32> to vector<4x1xf32>
    %c0_i32_223 = arith.constant 0 : i32
    %669 = vector.broadcast %c0_i32_223 : i32 to vector<4x4xi32>
    %670 = arith.cmpi eq, %665, %669 : vector<4x4xi32>
    %671 = vector.shape_cast %668 : vector<4x1xf32> to vector<4x1xf32>
    %672 = vector.broadcast %671 : vector<4x1xf32> to vector<4x4xf32>
    %673 = arith.select %670, %672, %666 : vector<4x4xi1>, vector<4x4xf32>
    %674 = vector.broadcast %668 : vector<4x1xf32> to vector<4x16xf32>
    %675 = arith.cmpf ole, %663, %674 : vector<4x16xf32>
    %c16_i32_224 = arith.constant 16 : i32
    %676 = vector.broadcast %c16_i32_224 : i32 to vector<4x16xi32>
    %677 = arith.select %675, %664, %676 : vector<4x16xi1>, vector<4x16xi32>
    %cst_225 = arith.constant dense<2147483647> : vector<4xi32>
    %678 = vector.multi_reduction <minsi>, %677, %cst_225 [1] : vector<4x16xi32> to vector<4xi32>
    %679 = vector.shape_cast %678 : vector<4xi32> to vector<4x1xi32>
    %680 = vector.broadcast %679 : vector<4x1xi32> to vector<4x16xi32>
    %681 = arith.cmpi eq, %664, %680 : vector<4x16xi32>
    %cst_226 = arith.constant 4.000000e+30 : f32
    %682 = vector.broadcast %cst_226 : f32 to vector<4x16xf32>
    %683 = arith.select %681, %682, %663 : vector<4x16xi1>, vector<4x16xf32>
    %cst_227 = arith.constant dense<0x7F800000> : vector<4xf32>
    %684 = vector.multi_reduction <minimumf>, %683, %cst_227 [1] : vector<4x16xf32> to vector<4xf32>
    %685 = vector.shape_cast %684 : vector<4xf32> to vector<4x1xf32>
    %c1_i32_228 = arith.constant 1 : i32
    %686 = vector.broadcast %c1_i32_228 : i32 to vector<4x4xi32>
    %687 = arith.cmpi eq, %665, %686 : vector<4x4xi32>
    %688 = vector.shape_cast %685 : vector<4x1xf32> to vector<4x1xf32>
    %689 = vector.broadcast %688 : vector<4x1xf32> to vector<4x4xf32>
    %690 = arith.select %687, %689, %673 : vector<4x4xi1>, vector<4x4xf32>
    %691 = vector.broadcast %685 : vector<4x1xf32> to vector<4x16xf32>
    %692 = arith.cmpf ole, %683, %691 : vector<4x16xf32>
    %c16_i32_229 = arith.constant 16 : i32
    %693 = vector.broadcast %c16_i32_229 : i32 to vector<4x16xi32>
    %694 = arith.select %692, %664, %693 : vector<4x16xi1>, vector<4x16xi32>
    %cst_230 = arith.constant dense<2147483647> : vector<4xi32>
    %695 = vector.multi_reduction <minsi>, %694, %cst_230 [1] : vector<4x16xi32> to vector<4xi32>
    %696 = vector.shape_cast %695 : vector<4xi32> to vector<4x1xi32>
    %697 = vector.broadcast %696 : vector<4x1xi32> to vector<4x16xi32>
    %698 = arith.cmpi eq, %664, %697 : vector<4x16xi32>
    %cst_231 = arith.constant 4.000000e+30 : f32
    %699 = vector.broadcast %cst_231 : f32 to vector<4x16xf32>
    %700 = arith.select %698, %699, %683 : vector<4x16xi1>, vector<4x16xf32>
    %cst_232 = arith.constant dense<0x7F800000> : vector<4xf32>
    %701 = vector.multi_reduction <minimumf>, %700, %cst_232 [1] : vector<4x16xf32> to vector<4xf32>
    %702 = vector.shape_cast %701 : vector<4xf32> to vector<4x1xf32>
    %c2_i32_233 = arith.constant 2 : i32
    %703 = vector.broadcast %c2_i32_233 : i32 to vector<4x4xi32>
    %704 = arith.cmpi eq, %665, %703 : vector<4x4xi32>
    %705 = vector.shape_cast %702 : vector<4x1xf32> to vector<4x1xf32>
    %706 = vector.broadcast %705 : vector<4x1xf32> to vector<4x4xf32>
    %707 = arith.select %704, %706, %690 : vector<4x4xi1>, vector<4x4xf32>
    %708 = vector.broadcast %702 : vector<4x1xf32> to vector<4x16xf32>
    %709 = arith.cmpf ole, %700, %708 : vector<4x16xf32>
    %c16_i32_234 = arith.constant 16 : i32
    %710 = vector.broadcast %c16_i32_234 : i32 to vector<4x16xi32>
    %711 = arith.select %709, %664, %710 : vector<4x16xi1>, vector<4x16xi32>
    %cst_235 = arith.constant dense<2147483647> : vector<4xi32>
    %712 = vector.multi_reduction <minsi>, %711, %cst_235 [1] : vector<4x16xi32> to vector<4xi32>
    %713 = vector.shape_cast %712 : vector<4xi32> to vector<4x1xi32>
    %714 = vector.broadcast %713 : vector<4x1xi32> to vector<4x16xi32>
    %715 = arith.cmpi eq, %664, %714 : vector<4x16xi32>
    %cst_236 = arith.constant 4.000000e+30 : f32
    %716 = vector.broadcast %cst_236 : f32 to vector<4x16xf32>
    %717 = arith.select %715, %716, %700 : vector<4x16xi1>, vector<4x16xf32>
    %cst_237 = arith.constant dense<0x7F800000> : vector<4xf32>
    %718 = vector.multi_reduction <minimumf>, %717, %cst_237 [1] : vector<4x16xf32> to vector<4xf32>
    %719 = vector.shape_cast %718 : vector<4xf32> to vector<4x1xf32>
    %c3_i32_238 = arith.constant 3 : i32
    %720 = vector.broadcast %c3_i32_238 : i32 to vector<4x4xi32>
    %721 = arith.cmpi eq, %665, %720 : vector<4x4xi32>
    %722 = vector.shape_cast %719 : vector<4x1xf32> to vector<4x1xf32>
    %723 = vector.broadcast %722 : vector<4x1xf32> to vector<4x4xf32>
    %724 = arith.select %721, %723, %707 : vector<4x4xi1>, vector<4x4xf32>
    %c0_239 = arith.constant 0 : index
    %c0_240 = arith.constant 0 : index
    %725 = vector.load %arg7[%c0_239, %c0_240] : memref<32x4xf32, #tpu.memory_space<vmem>>, vector<4x4xf32>
    tpu.vector_store %arg7[%c0_239, %c0_240], %724 {strides = array<i32>} : memref<32x4xf32, #tpu.memory_space<vmem>>, vector<4x4xf32>,
    %c0_241 = arith.constant 0 : index
    %c0_242 = arith.constant 0 : index
    %726 = vector.load %arg7[%c0_241, %c0_242] : memref<32x4xf32, #tpu.memory_space<vmem>>, vector<2x4xf32>
    %c2 = arith.constant 2 : index
    %c0_243 = arith.constant 0 : index
    %727 = vector.load %arg7[%c2, %c0_243] : memref<32x4xf32, #tpu.memory_space<vmem>>, vector<2x4xf32>
    %728 = tpu.iota {dimensions = array<i32: 1>} : vector<2x4xi32>
    %729 = tpu.iota {dimensions = array<i32: 1>} : vector<2x16xi32>
    %cst_244 = arith.constant 0.000000e+00 : f32
    %730 = vector.broadcast %cst_244 : f32 to vector<2x16xf32>
    %c0_i32_245 = arith.constant 0 : i32
    %731 = vector.broadcast %c0_i32_245 : i32 to vector<2x4xi32>
    %732 = arith.cmpi eq, %728, %731 : vector<2x4xi32>
    %cst_246 = arith.constant 4.000000e+30 : f32
    %733 = vector.broadcast %cst_246 : f32 to vector<2x4xf32>
    %734 = arith.select %732, %726, %733 : vector<2x4xi1>, vector<2x4xf32>
    %cst_247 = arith.constant dense<0x7F800000> : vector<2xf32>
    %735 = vector.multi_reduction <minimumf>, %734, %cst_247 [1] : vector<2x4xf32> to vector<2xf32>
    %736 = vector.shape_cast %735 : vector<2xf32> to vector<2x1xf32>
    %c0_i32_248 = arith.constant 0 : i32
    %737 = vector.broadcast %c0_i32_248 : i32 to vector<2x4xi32>
    %738 = arith.cmpi eq, %728, %737 : vector<2x4xi32>
    %cst_249 = arith.constant 4.000000e+30 : f32
    %739 = vector.broadcast %cst_249 : f32 to vector<2x4xf32>
    %740 = arith.select %738, %727, %739 : vector<2x4xi1>, vector<2x4xf32>
    %cst_250 = arith.constant dense<0x7F800000> : vector<2xf32>
    %741 = vector.multi_reduction <minimumf>, %740, %cst_250 [1] : vector<2x4xf32> to vector<2xf32>
    %742 = vector.shape_cast %741 : vector<2xf32> to vector<2x1xf32>
    %c0_i32_251 = arith.constant 0 : i32
    %743 = vector.broadcast %c0_i32_251 : i32 to vector<2x16xi32>
    %744 = arith.cmpi sge, %729, %743 : vector<2x16xi32>
    %c4_i32_252 = arith.constant 4 : i32
    %745 = vector.broadcast %c4_i32_252 : i32 to vector<2x16xi32>
    %746 = arith.cmpi slt, %729, %745 : vector<2x16xi32>
    %747 = arith.andi %744, %746 : vector<2x16xi1>
    %c0_i32_253 = arith.constant 0 : i32
    %748 = vector.broadcast %c0_i32_253 : i32 to vector<2x16xi32>
    %749 = arith.cmpi eq, %729, %748 : vector<2x16xi32>
    %c4_i32_254 = arith.constant 4 : i32
    %750 = vector.broadcast %c4_i32_254 : i32 to vector<2x16xi32>
    %751 = arith.cmpi eq, %729, %750 : vector<2x16xi32>
    %752 = arith.ori %749, %751 : vector<2x16xi1>
    %c8_i32_255 = arith.constant 8 : i32
    %753 = vector.broadcast %c8_i32_255 : i32 to vector<2x16xi32>
    %754 = arith.cmpi eq, %729, %753 : vector<2x16xi32>
    %755 = arith.ori %752, %754 : vector<2x16xi1>
    %c12_i32_256 = arith.constant 12 : i32
    %756 = vector.broadcast %c12_i32_256 : i32 to vector<2x16xi32>
    %757 = arith.cmpi eq, %729, %756 : vector<2x16xi32>
    %758 = arith.ori %755, %757 : vector<2x16xi1>
    %759 = vector.broadcast %736 : vector<2x1xf32> to vector<2x16xf32>
    %760 = arith.addf %730, %759 : vector<2x16xf32>
    %761 = arith.select %747, %760, %730 : vector<2x16xi1>, vector<2x16xf32>
    %762 = vector.broadcast %742 : vector<2x1xf32> to vector<2x16xf32>
    %763 = arith.addf %761, %762 : vector<2x16xf32>
    %764 = arith.select %758, %763, %761 : vector<2x16xi1>, vector<2x16xf32>
    %c1_i32_257 = arith.constant 1 : i32
    %765 = vector.broadcast %c1_i32_257 : i32 to vector<2x4xi32>
    %766 = arith.cmpi eq, %728, %765 : vector<2x4xi32>
    %cst_258 = arith.constant 4.000000e+30 : f32
    %767 = vector.broadcast %cst_258 : f32 to vector<2x4xf32>
    %768 = arith.select %766, %726, %767 : vector<2x4xi1>, vector<2x4xf32>
    %cst_259 = arith.constant dense<0x7F800000> : vector<2xf32>
    %769 = vector.multi_reduction <minimumf>, %768, %cst_259 [1] : vector<2x4xf32> to vector<2xf32>
    %770 = vector.shape_cast %769 : vector<2xf32> to vector<2x1xf32>
    %c1_i32_260 = arith.constant 1 : i32
    %771 = vector.broadcast %c1_i32_260 : i32 to vector<2x4xi32>
    %772 = arith.cmpi eq, %728, %771 : vector<2x4xi32>
    %cst_261 = arith.constant 4.000000e+30 : f32
    %773 = vector.broadcast %cst_261 : f32 to vector<2x4xf32>
    %774 = arith.select %772, %727, %773 : vector<2x4xi1>, vector<2x4xf32>
    %cst_262 = arith.constant dense<0x7F800000> : vector<2xf32>
    %775 = vector.multi_reduction <minimumf>, %774, %cst_262 [1] : vector<2x4xf32> to vector<2xf32>
    %776 = vector.shape_cast %775 : vector<2xf32> to vector<2x1xf32>
    %c4_i32_263 = arith.constant 4 : i32
    %777 = vector.broadcast %c4_i32_263 : i32 to vector<2x16xi32>
    %778 = arith.cmpi sge, %729, %777 : vector<2x16xi32>
    %c8_i32_264 = arith.constant 8 : i32
    %779 = vector.broadcast %c8_i32_264 : i32 to vector<2x16xi32>
    %780 = arith.cmpi slt, %729, %779 : vector<2x16xi32>
    %781 = arith.andi %778, %780 : vector<2x16xi1>
    %c1_i32_265 = arith.constant 1 : i32
    %782 = vector.broadcast %c1_i32_265 : i32 to vector<2x16xi32>
    %783 = arith.cmpi eq, %729, %782 : vector<2x16xi32>
    %c5_i32_266 = arith.constant 5 : i32
    %784 = vector.broadcast %c5_i32_266 : i32 to vector<2x16xi32>
    %785 = arith.cmpi eq, %729, %784 : vector<2x16xi32>
    %786 = arith.ori %783, %785 : vector<2x16xi1>
    %c9_i32_267 = arith.constant 9 : i32
    %787 = vector.broadcast %c9_i32_267 : i32 to vector<2x16xi32>
    %788 = arith.cmpi eq, %729, %787 : vector<2x16xi32>
    %789 = arith.ori %786, %788 : vector<2x16xi1>
    %c13_i32_268 = arith.constant 13 : i32
    %790 = vector.broadcast %c13_i32_268 : i32 to vector<2x16xi32>
    %791 = arith.cmpi eq, %729, %790 : vector<2x16xi32>
    %792 = arith.ori %789, %791 : vector<2x16xi1>
    %793 = vector.broadcast %770 : vector<2x1xf32> to vector<2x16xf32>
    %794 = arith.addf %764, %793 : vector<2x16xf32>
    %795 = arith.select %781, %794, %764 : vector<2x16xi1>, vector<2x16xf32>
    %796 = vector.broadcast %776 : vector<2x1xf32> to vector<2x16xf32>
    %797 = arith.addf %795, %796 : vector<2x16xf32>
    %798 = arith.select %792, %797, %795 : vector<2x16xi1>, vector<2x16xf32>
    %c2_i32_269 = arith.constant 2 : i32
    %799 = vector.broadcast %c2_i32_269 : i32 to vector<2x4xi32>
    %800 = arith.cmpi eq, %728, %799 : vector<2x4xi32>
    %cst_270 = arith.constant 4.000000e+30 : f32
    %801 = vector.broadcast %cst_270 : f32 to vector<2x4xf32>
    %802 = arith.select %800, %726, %801 : vector<2x4xi1>, vector<2x4xf32>
    %cst_271 = arith.constant dense<0x7F800000> : vector<2xf32>
    %803 = vector.multi_reduction <minimumf>, %802, %cst_271 [1] : vector<2x4xf32> to vector<2xf32>
    %804 = vector.shape_cast %803 : vector<2xf32> to vector<2x1xf32>
    %c2_i32_272 = arith.constant 2 : i32
    %805 = vector.broadcast %c2_i32_272 : i32 to vector<2x4xi32>
    %806 = arith.cmpi eq, %728, %805 : vector<2x4xi32>
    %cst_273 = arith.constant 4.000000e+30 : f32
    %807 = vector.broadcast %cst_273 : f32 to vector<2x4xf32>
    %808 = arith.select %806, %727, %807 : vector<2x4xi1>, vector<2x4xf32>
    %cst_274 = arith.constant dense<0x7F800000> : vector<2xf32>
    %809 = vector.multi_reduction <minimumf>, %808, %cst_274 [1] : vector<2x4xf32> to vector<2xf32>
    %810 = vector.shape_cast %809 : vector<2xf32> to vector<2x1xf32>
    %c8_i32_275 = arith.constant 8 : i32
    %811 = vector.broadcast %c8_i32_275 : i32 to vector<2x16xi32>
    %812 = arith.cmpi sge, %729, %811 : vector<2x16xi32>
    %c12_i32_276 = arith.constant 12 : i32
    %813 = vector.broadcast %c12_i32_276 : i32 to vector<2x16xi32>
    %814 = arith.cmpi slt, %729, %813 : vector<2x16xi32>
    %815 = arith.andi %812, %814 : vector<2x16xi1>
    %c2_i32_277 = arith.constant 2 : i32
    %816 = vector.broadcast %c2_i32_277 : i32 to vector<2x16xi32>
    %817 = arith.cmpi eq, %729, %816 : vector<2x16xi32>
    %c6_i32_278 = arith.constant 6 : i32
    %818 = vector.broadcast %c6_i32_278 : i32 to vector<2x16xi32>
    %819 = arith.cmpi eq, %729, %818 : vector<2x16xi32>
    %820 = arith.ori %817, %819 : vector<2x16xi1>
    %c10_i32_279 = arith.constant 10 : i32
    %821 = vector.broadcast %c10_i32_279 : i32 to vector<2x16xi32>
    %822 = arith.cmpi eq, %729, %821 : vector<2x16xi32>
    %823 = arith.ori %820, %822 : vector<2x16xi1>
    %c14_i32_280 = arith.constant 14 : i32
    %824 = vector.broadcast %c14_i32_280 : i32 to vector<2x16xi32>
    %825 = arith.cmpi eq, %729, %824 : vector<2x16xi32>
    %826 = arith.ori %823, %825 : vector<2x16xi1>
    %827 = vector.broadcast %804 : vector<2x1xf32> to vector<2x16xf32>
    %828 = arith.addf %798, %827 : vector<2x16xf32>
    %829 = arith.select %815, %828, %798 : vector<2x16xi1>, vector<2x16xf32>
    %830 = vector.broadcast %810 : vector<2x1xf32> to vector<2x16xf32>
    %831 = arith.addf %829, %830 : vector<2x16xf32>
    %832 = arith.select %826, %831, %829 : vector<2x16xi1>, vector<2x16xf32>
    %c3_i32_281 = arith.constant 3 : i32
    %833 = vector.broadcast %c3_i32_281 : i32 to vector<2x4xi32>
    %834 = arith.cmpi eq, %728, %833 : vector<2x4xi32>
    %cst_282 = arith.constant 4.000000e+30 : f32
    %835 = vector.broadcast %cst_282 : f32 to vector<2x4xf32>
    %836 = arith.select %834, %726, %835 : vector<2x4xi1>, vector<2x4xf32>
    %cst_283 = arith.constant dense<0x7F800000> : vector<2xf32>
    %837 = vector.multi_reduction <minimumf>, %836, %cst_283 [1] : vector<2x4xf32> to vector<2xf32>
    %838 = vector.shape_cast %837 : vector<2xf32> to vector<2x1xf32>
    %c3_i32_284 = arith.constant 3 : i32
    %839 = vector.broadcast %c3_i32_284 : i32 to vector<2x4xi32>
    %840 = arith.cmpi eq, %728, %839 : vector<2x4xi32>
    %cst_285 = arith.constant 4.000000e+30 : f32
    %841 = vector.broadcast %cst_285 : f32 to vector<2x4xf32>
    %842 = arith.select %840, %727, %841 : vector<2x4xi1>, vector<2x4xf32>
    %cst_286 = arith.constant dense<0x7F800000> : vector<2xf32>
    %843 = vector.multi_reduction <minimumf>, %842, %cst_286 [1] : vector<2x4xf32> to vector<2xf32>
    %844 = vector.shape_cast %843 : vector<2xf32> to vector<2x1xf32>
    %c12_i32_287 = arith.constant 12 : i32
    %845 = vector.broadcast %c12_i32_287 : i32 to vector<2x16xi32>
    %846 = arith.cmpi sge, %729, %845 : vector<2x16xi32>
    %c16_i32_288 = arith.constant 16 : i32
    %847 = vector.broadcast %c16_i32_288 : i32 to vector<2x16xi32>
    %848 = arith.cmpi slt, %729, %847 : vector<2x16xi32>
    %849 = arith.andi %846, %848 : vector<2x16xi1>
    %c3_i32_289 = arith.constant 3 : i32
    %850 = vector.broadcast %c3_i32_289 : i32 to vector<2x16xi32>
    %851 = arith.cmpi eq, %729, %850 : vector<2x16xi32>
    %c7_i32_290 = arith.constant 7 : i32
    %852 = vector.broadcast %c7_i32_290 : i32 to vector<2x16xi32>
    %853 = arith.cmpi eq, %729, %852 : vector<2x16xi32>
    %854 = arith.ori %851, %853 : vector<2x16xi1>
    %c11_i32_291 = arith.constant 11 : i32
    %855 = vector.broadcast %c11_i32_291 : i32 to vector<2x16xi32>
    %856 = arith.cmpi eq, %729, %855 : vector<2x16xi32>
    %857 = arith.ori %854, %856 : vector<2x16xi1>
    %c15_i32_292 = arith.constant 15 : i32
    %858 = vector.broadcast %c15_i32_292 : i32 to vector<2x16xi32>
    %859 = arith.cmpi eq, %729, %858 : vector<2x16xi32>
    %860 = arith.ori %857, %859 : vector<2x16xi1>
    %861 = vector.broadcast %838 : vector<2x1xf32> to vector<2x16xf32>
    %862 = arith.addf %832, %861 : vector<2x16xf32>
    %863 = arith.select %849, %862, %832 : vector<2x16xi1>, vector<2x16xf32>
    %864 = vector.broadcast %844 : vector<2x1xf32> to vector<2x16xf32>
    %865 = arith.addf %863, %864 : vector<2x16xf32>
    %866 = arith.select %860, %865, %863 : vector<2x16xi1>, vector<2x16xf32>
    %867 = tpu.iota {dimensions = array<i32: 1>} : vector<2x16xi32>
    %868 = tpu.iota {dimensions = array<i32: 1>} : vector<2x4xi32>
    %cst_293 = arith.constant 0.000000e+00 : f32
    %869 = vector.broadcast %cst_293 : f32 to vector<2x4xf32>
    %cst_294 = arith.constant dense<0x7F800000> : vector<2xf32>
    %870 = vector.multi_reduction <minimumf>, %866, %cst_294 [1] : vector<2x16xf32> to vector<2xf32>
    %871 = vector.shape_cast %870 : vector<2xf32> to vector<2x1xf32>
    %c0_i32_295 = arith.constant 0 : i32
    %872 = vector.broadcast %c0_i32_295 : i32 to vector<2x4xi32>
    %873 = arith.cmpi eq, %868, %872 : vector<2x4xi32>
    %874 = vector.shape_cast %871 : vector<2x1xf32> to vector<2x1xf32>
    %875 = vector.broadcast %874 : vector<2x1xf32> to vector<2x4xf32>
    %876 = arith.select %873, %875, %869 : vector<2x4xi1>, vector<2x4xf32>
    %877 = vector.broadcast %871 : vector<2x1xf32> to vector<2x16xf32>
    %878 = arith.cmpf ole, %866, %877 : vector<2x16xf32>
    %c16_i32_296 = arith.constant 16 : i32
    %879 = vector.broadcast %c16_i32_296 : i32 to vector<2x16xi32>
    %880 = arith.select %878, %867, %879 : vector<2x16xi1>, vector<2x16xi32>
    %cst_297 = arith.constant dense<2147483647> : vector<2xi32>
    %881 = vector.multi_reduction <minsi>, %880, %cst_297 [1] : vector<2x16xi32> to vector<2xi32>
    %882 = vector.shape_cast %881 : vector<2xi32> to vector<2x1xi32>
    %883 = vector.broadcast %882 : vector<2x1xi32> to vector<2x16xi32>
    %884 = arith.cmpi eq, %867, %883 : vector<2x16xi32>
    %cst_298 = arith.constant 4.000000e+30 : f32
    %885 = vector.broadcast %cst_298 : f32 to vector<2x16xf32>
    %886 = arith.select %884, %885, %866 : vector<2x16xi1>, vector<2x16xf32>
    %cst_299 = arith.constant dense<0x7F800000> : vector<2xf32>
    %887 = vector.multi_reduction <minimumf>, %886, %cst_299 [1] : vector<2x16xf32> to vector<2xf32>
    %888 = vector.shape_cast %887 : vector<2xf32> to vector<2x1xf32>
    %c1_i32_300 = arith.constant 1 : i32
    %889 = vector.broadcast %c1_i32_300 : i32 to vector<2x4xi32>
    %890 = arith.cmpi eq, %868, %889 : vector<2x4xi32>
    %891 = vector.shape_cast %888 : vector<2x1xf32> to vector<2x1xf32>
    %892 = vector.broadcast %891 : vector<2x1xf32> to vector<2x4xf32>
    %893 = arith.select %890, %892, %876 : vector<2x4xi1>, vector<2x4xf32>
    %894 = vector.broadcast %888 : vector<2x1xf32> to vector<2x16xf32>
    %895 = arith.cmpf ole, %886, %894 : vector<2x16xf32>
    %c16_i32_301 = arith.constant 16 : i32
    %896 = vector.broadcast %c16_i32_301 : i32 to vector<2x16xi32>
    %897 = arith.select %895, %867, %896 : vector<2x16xi1>, vector<2x16xi32>
    %cst_302 = arith.constant dense<2147483647> : vector<2xi32>
    %898 = vector.multi_reduction <minsi>, %897, %cst_302 [1] : vector<2x16xi32> to vector<2xi32>
    %899 = vector.shape_cast %898 : vector<2xi32> to vector<2x1xi32>
    %900 = vector.broadcast %899 : vector<2x1xi32> to vector<2x16xi32>
    %901 = arith.cmpi eq, %867, %900 : vector<2x16xi32>
    %cst_303 = arith.constant 4.000000e+30 : f32
    %902 = vector.broadcast %cst_303 : f32 to vector<2x16xf32>
    %903 = arith.select %901, %902, %886 : vector<2x16xi1>, vector<2x16xf32>
    %cst_304 = arith.constant dense<0x7F800000> : vector<2xf32>
    %904 = vector.multi_reduction <minimumf>, %903, %cst_304 [1] : vector<2x16xf32> to vector<2xf32>
    %905 = vector.shape_cast %904 : vector<2xf32> to vector<2x1xf32>
    %c2_i32_305 = arith.constant 2 : i32
    %906 = vector.broadcast %c2_i32_305 : i32 to vector<2x4xi32>
    %907 = arith.cmpi eq, %868, %906 : vector<2x4xi32>
    %908 = vector.shape_cast %905 : vector<2x1xf32> to vector<2x1xf32>
    %909 = vector.broadcast %908 : vector<2x1xf32> to vector<2x4xf32>
    %910 = arith.select %907, %909, %893 : vector<2x4xi1>, vector<2x4xf32>
    %911 = vector.broadcast %905 : vector<2x1xf32> to vector<2x16xf32>
    %912 = arith.cmpf ole, %903, %911 : vector<2x16xf32>
    %c16_i32_306 = arith.constant 16 : i32
    %913 = vector.broadcast %c16_i32_306 : i32 to vector<2x16xi32>
    %914 = arith.select %912, %867, %913 : vector<2x16xi1>, vector<2x16xi32>
    %cst_307 = arith.constant dense<2147483647> : vector<2xi32>
    %915 = vector.multi_reduction <minsi>, %914, %cst_307 [1] : vector<2x16xi32> to vector<2xi32>
    %916 = vector.shape_cast %915 : vector<2xi32> to vector<2x1xi32>
    %917 = vector.broadcast %916 : vector<2x1xi32> to vector<2x16xi32>
    %918 = arith.cmpi eq, %867, %917 : vector<2x16xi32>
    %cst_308 = arith.constant 4.000000e+30 : f32
    %919 = vector.broadcast %cst_308 : f32 to vector<2x16xf32>
    %920 = arith.select %918, %919, %903 : vector<2x16xi1>, vector<2x16xf32>
    %cst_309 = arith.constant dense<0x7F800000> : vector<2xf32>
    %921 = vector.multi_reduction <minimumf>, %920, %cst_309 [1] : vector<2x16xf32> to vector<2xf32>
    %922 = vector.shape_cast %921 : vector<2xf32> to vector<2x1xf32>
    %c3_i32_310 = arith.constant 3 : i32
    %923 = vector.broadcast %c3_i32_310 : i32 to vector<2x4xi32>
    %924 = arith.cmpi eq, %868, %923 : vector<2x4xi32>
    %925 = vector.shape_cast %922 : vector<2x1xf32> to vector<2x1xf32>
    %926 = vector.broadcast %925 : vector<2x1xf32> to vector<2x4xf32>
    %927 = arith.select %924, %926, %910 : vector<2x4xi1>, vector<2x4xf32>
    %c0_311 = arith.constant 0 : index
    %c0_312 = arith.constant 0 : index
    %928 = vector.load %arg7[%c0_311, %c0_312] : memref<32x4xf32, #tpu.memory_space<vmem>>, vector<2x4xf32>
    tpu.vector_store %arg7[%c0_311, %c0_312], %927 {strides = array<i32>} : memref<32x4xf32, #tpu.memory_space<vmem>>, vector<2x4xf32>,
    %c0_313 = arith.constant 0 : index
    %c0_314 = arith.constant 0 : index
    %929 = vector.load %arg7[%c0_313, %c0_314] : memref<32x4xf32, #tpu.memory_space<vmem>>, vector<1x4xf32>
    %c1 = arith.constant 1 : index
    %c0_315 = arith.constant 0 : index
    %930 = vector.load %arg7[%c1, %c0_315] : memref<32x4xf32, #tpu.memory_space<vmem>>, vector<1x4xf32>
    %931 = tpu.iota {dimensions = array<i32: 1>} : vector<1x4xi32>
    %932 = tpu.iota {dimensions = array<i32: 1>} : vector<1x16xi32>
    %cst_316 = arith.constant 0.000000e+00 : f32
    %933 = vector.broadcast %cst_316 : f32 to vector<1x16xf32>
    %c0_i32_317 = arith.constant 0 : i32
    %934 = vector.broadcast %c0_i32_317 : i32 to vector<1x4xi32>
    %935 = arith.cmpi eq, %931, %934 : vector<1x4xi32>
    %cst_318 = arith.constant 4.000000e+30 : f32
    %936 = vector.broadcast %cst_318 : f32 to vector<1x4xf32>
    %937 = arith.select %935, %929, %936 : vector<1x4xi1>, vector<1x4xf32>
    %cst_319 = arith.constant dense<0x7F800000> : vector<1xf32>
    %938 = vector.multi_reduction <minimumf>, %937, %cst_319 [1] : vector<1x4xf32> to vector<1xf32>
    %939 = vector.shape_cast %938 : vector<1xf32> to vector<1x1xf32>
    %c0_i32_320 = arith.constant 0 : i32
    %940 = vector.broadcast %c0_i32_320 : i32 to vector<1x4xi32>
    %941 = arith.cmpi eq, %931, %940 : vector<1x4xi32>
    %cst_321 = arith.constant 4.000000e+30 : f32
    %942 = vector.broadcast %cst_321 : f32 to vector<1x4xf32>
    %943 = arith.select %941, %930, %942 : vector<1x4xi1>, vector<1x4xf32>
    %cst_322 = arith.constant dense<0x7F800000> : vector<1xf32>
    %944 = vector.multi_reduction <minimumf>, %943, %cst_322 [1] : vector<1x4xf32> to vector<1xf32>
    %945 = vector.shape_cast %944 : vector<1xf32> to vector<1x1xf32>
    %c0_i32_323 = arith.constant 0 : i32
    %946 = vector.broadcast %c0_i32_323 : i32 to vector<1x16xi32>
    %947 = arith.cmpi sge, %932, %946 : vector<1x16xi32>
    %c4_i32_324 = arith.constant 4 : i32
    %948 = vector.broadcast %c4_i32_324 : i32 to vector<1x16xi32>
    %949 = arith.cmpi slt, %932, %948 : vector<1x16xi32>
    %950 = arith.andi %947, %949 : vector<1x16xi1>
    %c0_i32_325 = arith.constant 0 : i32
    %951 = vector.broadcast %c0_i32_325 : i32 to vector<1x16xi32>
    %952 = arith.cmpi eq, %932, %951 : vector<1x16xi32>
    %c4_i32_326 = arith.constant 4 : i32
    %953 = vector.broadcast %c4_i32_326 : i32 to vector<1x16xi32>
    %954 = arith.cmpi eq, %932, %953 : vector<1x16xi32>
    %955 = arith.ori %952, %954 : vector<1x16xi1>
    %c8_i32_327 = arith.constant 8 : i32
    %956 = vector.broadcast %c8_i32_327 : i32 to vector<1x16xi32>
    %957 = arith.cmpi eq, %932, %956 : vector<1x16xi32>
    %958 = arith.ori %955, %957 : vector<1x16xi1>
    %c12_i32_328 = arith.constant 12 : i32
    %959 = vector.broadcast %c12_i32_328 : i32 to vector<1x16xi32>
    %960 = arith.cmpi eq, %932, %959 : vector<1x16xi32>
    %961 = arith.ori %958, %960 : vector<1x16xi1>
    %962 = vector.broadcast %939 : vector<1x1xf32> to vector<1x16xf32>
    %963 = arith.addf %933, %962 : vector<1x16xf32>
    %964 = arith.select %950, %963, %933 : vector<1x16xi1>, vector<1x16xf32>
    %965 = vector.broadcast %945 : vector<1x1xf32> to vector<1x16xf32>
    %966 = arith.addf %964, %965 : vector<1x16xf32>
    %967 = arith.select %961, %966, %964 : vector<1x16xi1>, vector<1x16xf32>
    %c1_i32_329 = arith.constant 1 : i32
    %968 = vector.broadcast %c1_i32_329 : i32 to vector<1x4xi32>
    %969 = arith.cmpi eq, %931, %968 : vector<1x4xi32>
    %cst_330 = arith.constant 4.000000e+30 : f32
    %970 = vector.broadcast %cst_330 : f32 to vector<1x4xf32>
    %971 = arith.select %969, %929, %970 : vector<1x4xi1>, vector<1x4xf32>
    %cst_331 = arith.constant dense<0x7F800000> : vector<1xf32>
    %972 = vector.multi_reduction <minimumf>, %971, %cst_331 [1] : vector<1x4xf32> to vector<1xf32>
    %973 = vector.shape_cast %972 : vector<1xf32> to vector<1x1xf32>
    %c1_i32_332 = arith.constant 1 : i32
    %974 = vector.broadcast %c1_i32_332 : i32 to vector<1x4xi32>
    %975 = arith.cmpi eq, %931, %974 : vector<1x4xi32>
    %cst_333 = arith.constant 4.000000e+30 : f32
    %976 = vector.broadcast %cst_333 : f32 to vector<1x4xf32>
    %977 = arith.select %975, %930, %976 : vector<1x4xi1>, vector<1x4xf32>
    %cst_334 = arith.constant dense<0x7F800000> : vector<1xf32>
    %978 = vector.multi_reduction <minimumf>, %977, %cst_334 [1] : vector<1x4xf32> to vector<1xf32>
    %979 = vector.shape_cast %978 : vector<1xf32> to vector<1x1xf32>
    %c4_i32_335 = arith.constant 4 : i32
    %980 = vector.broadcast %c4_i32_335 : i32 to vector<1x16xi32>
    %981 = arith.cmpi sge, %932, %980 : vector<1x16xi32>
    %c8_i32_336 = arith.constant 8 : i32
    %982 = vector.broadcast %c8_i32_336 : i32 to vector<1x16xi32>
    %983 = arith.cmpi slt, %932, %982 : vector<1x16xi32>
    %984 = arith.andi %981, %983 : vector<1x16xi1>
    %c1_i32_337 = arith.constant 1 : i32
    %985 = vector.broadcast %c1_i32_337 : i32 to vector<1x16xi32>
    %986 = arith.cmpi eq, %932, %985 : vector<1x16xi32>
    %c5_i32_338 = arith.constant 5 : i32
    %987 = vector.broadcast %c5_i32_338 : i32 to vector<1x16xi32>
    %988 = arith.cmpi eq, %932, %987 : vector<1x16xi32>
    %989 = arith.ori %986, %988 : vector<1x16xi1>
    %c9_i32_339 = arith.constant 9 : i32
    %990 = vector.broadcast %c9_i32_339 : i32 to vector<1x16xi32>
    %991 = arith.cmpi eq, %932, %990 : vector<1x16xi32>
    %992 = arith.ori %989, %991 : vector<1x16xi1>
    %c13_i32_340 = arith.constant 13 : i32
    %993 = vector.broadcast %c13_i32_340 : i32 to vector<1x16xi32>
    %994 = arith.cmpi eq, %932, %993 : vector<1x16xi32>
    %995 = arith.ori %992, %994 : vector<1x16xi1>
    %996 = vector.broadcast %973 : vector<1x1xf32> to vector<1x16xf32>
    %997 = arith.addf %967, %996 : vector<1x16xf32>
    %998 = arith.select %984, %997, %967 : vector<1x16xi1>, vector<1x16xf32>
    %999 = vector.broadcast %979 : vector<1x1xf32> to vector<1x16xf32>
    %1000 = arith.addf %998, %999 : vector<1x16xf32>
    %1001 = arith.select %995, %1000, %998 : vector<1x16xi1>, vector<1x16xf32>
    %c2_i32_341 = arith.constant 2 : i32
    %1002 = vector.broadcast %c2_i32_341 : i32 to vector<1x4xi32>
    %1003 = arith.cmpi eq, %931, %1002 : vector<1x4xi32>
    %cst_342 = arith.constant 4.000000e+30 : f32
    %1004 = vector.broadcast %cst_342 : f32 to vector<1x4xf32>
    %1005 = arith.select %1003, %929, %1004 : vector<1x4xi1>, vector<1x4xf32>
    %cst_343 = arith.constant dense<0x7F800000> : vector<1xf32>
    %1006 = vector.multi_reduction <minimumf>, %1005, %cst_343 [1] : vector<1x4xf32> to vector<1xf32>
    %1007 = vector.shape_cast %1006 : vector<1xf32> to vector<1x1xf32>
    %c2_i32_344 = arith.constant 2 : i32
    %1008 = vector.broadcast %c2_i32_344 : i32 to vector<1x4xi32>
    %1009 = arith.cmpi eq, %931, %1008 : vector<1x4xi32>
    %cst_345 = arith.constant 4.000000e+30 : f32
    %1010 = vector.broadcast %cst_345 : f32 to vector<1x4xf32>
    %1011 = arith.select %1009, %930, %1010 : vector<1x4xi1>, vector<1x4xf32>
    %cst_346 = arith.constant dense<0x7F800000> : vector<1xf32>
    %1012 = vector.multi_reduction <minimumf>, %1011, %cst_346 [1] : vector<1x4xf32> to vector<1xf32>
    %1013 = vector.shape_cast %1012 : vector<1xf32> to vector<1x1xf32>
    %c8_i32_347 = arith.constant 8 : i32
    %1014 = vector.broadcast %c8_i32_347 : i32 to vector<1x16xi32>
    %1015 = arith.cmpi sge, %932, %1014 : vector<1x16xi32>
    %c12_i32_348 = arith.constant 12 : i32
    %1016 = vector.broadcast %c12_i32_348 : i32 to vector<1x16xi32>
    %1017 = arith.cmpi slt, %932, %1016 : vector<1x16xi32>
    %1018 = arith.andi %1015, %1017 : vector<1x16xi1>
    %c2_i32_349 = arith.constant 2 : i32
    %1019 = vector.broadcast %c2_i32_349 : i32 to vector<1x16xi32>
    %1020 = arith.cmpi eq, %932, %1019 : vector<1x16xi32>
    %c6_i32_350 = arith.constant 6 : i32
    %1021 = vector.broadcast %c6_i32_350 : i32 to vector<1x16xi32>
    %1022 = arith.cmpi eq, %932, %1021 : vector<1x16xi32>
    %1023 = arith.ori %1020, %1022 : vector<1x16xi1>
    %c10_i32_351 = arith.constant 10 : i32
    %1024 = vector.broadcast %c10_i32_351 : i32 to vector<1x16xi32>
    %1025 = arith.cmpi eq, %932, %1024 : vector<1x16xi32>
    %1026 = arith.ori %1023, %1025 : vector<1x16xi1>
    %c14_i32_352 = arith.constant 14 : i32
    %1027 = vector.broadcast %c14_i32_352 : i32 to vector<1x16xi32>
    %1028 = arith.cmpi eq, %932, %1027 : vector<1x16xi32>
    %1029 = arith.ori %1026, %1028 : vector<1x16xi1>
    %1030 = vector.broadcast %1007 : vector<1x1xf32> to vector<1x16xf32>
    %1031 = arith.addf %1001, %1030 : vector<1x16xf32>
    %1032 = arith.select %1018, %1031, %1001 : vector<1x16xi1>, vector<1x16xf32>
    %1033 = vector.broadcast %1013 : vector<1x1xf32> to vector<1x16xf32>
    %1034 = arith.addf %1032, %1033 : vector<1x16xf32>
    %1035 = arith.select %1029, %1034, %1032 : vector<1x16xi1>, vector<1x16xf32>
    %c3_i32_353 = arith.constant 3 : i32
    %1036 = vector.broadcast %c3_i32_353 : i32 to vector<1x4xi32>
    %1037 = arith.cmpi eq, %931, %1036 : vector<1x4xi32>
    %cst_354 = arith.constant 4.000000e+30 : f32
    %1038 = vector.broadcast %cst_354 : f32 to vector<1x4xf32>
    %1039 = arith.select %1037, %929, %1038 : vector<1x4xi1>, vector<1x4xf32>
    %cst_355 = arith.constant dense<0x7F800000> : vector<1xf32>
    %1040 = vector.multi_reduction <minimumf>, %1039, %cst_355 [1] : vector<1x4xf32> to vector<1xf32>
    %1041 = vector.shape_cast %1040 : vector<1xf32> to vector<1x1xf32>
    %c3_i32_356 = arith.constant 3 : i32
    %1042 = vector.broadcast %c3_i32_356 : i32 to vector<1x4xi32>
    %1043 = arith.cmpi eq, %931, %1042 : vector<1x4xi32>
    %cst_357 = arith.constant 4.000000e+30 : f32
    %1044 = vector.broadcast %cst_357 : f32 to vector<1x4xf32>
    %1045 = arith.select %1043, %930, %1044 : vector<1x4xi1>, vector<1x4xf32>
    %cst_358 = arith.constant dense<0x7F800000> : vector<1xf32>
    %1046 = vector.multi_reduction <minimumf>, %1045, %cst_358 [1] : vector<1x4xf32> to vector<1xf32>
    %1047 = vector.shape_cast %1046 : vector<1xf32> to vector<1x1xf32>
    %c12_i32_359 = arith.constant 12 : i32
    %1048 = vector.broadcast %c12_i32_359 : i32 to vector<1x16xi32>
    %1049 = arith.cmpi sge, %932, %1048 : vector<1x16xi32>
    %c16_i32_360 = arith.constant 16 : i32
    %1050 = vector.broadcast %c16_i32_360 : i32 to vector<1x16xi32>
    %1051 = arith.cmpi slt, %932, %1050 : vector<1x16xi32>
    %1052 = arith.andi %1049, %1051 : vector<1x16xi1>
    %c3_i32_361 = arith.constant 3 : i32
    %1053 = vector.broadcast %c3_i32_361 : i32 to vector<1x16xi32>
    %1054 = arith.cmpi eq, %932, %1053 : vector<1x16xi32>
    %c7_i32_362 = arith.constant 7 : i32
    %1055 = vector.broadcast %c7_i32_362 : i32 to vector<1x16xi32>
    %1056 = arith.cmpi eq, %932, %1055 : vector<1x16xi32>
    %1057 = arith.ori %1054, %1056 : vector<1x16xi1>
    %c11_i32_363 = arith.constant 11 : i32
    %1058 = vector.broadcast %c11_i32_363 : i32 to vector<1x16xi32>
    %1059 = arith.cmpi eq, %932, %1058 : vector<1x16xi32>
    %1060 = arith.ori %1057, %1059 : vector<1x16xi1>
    %c15_i32_364 = arith.constant 15 : i32
    %1061 = vector.broadcast %c15_i32_364 : i32 to vector<1x16xi32>
    %1062 = arith.cmpi eq, %932, %1061 : vector<1x16xi32>
    %1063 = arith.ori %1060, %1062 : vector<1x16xi1>
    %1064 = vector.broadcast %1041 : vector<1x1xf32> to vector<1x16xf32>
    %1065 = arith.addf %1035, %1064 : vector<1x16xf32>
    %1066 = arith.select %1052, %1065, %1035 : vector<1x16xi1>, vector<1x16xf32>
    %1067 = vector.broadcast %1047 : vector<1x1xf32> to vector<1x16xf32>
    %1068 = arith.addf %1066, %1067 : vector<1x16xf32>
    %1069 = arith.select %1063, %1068, %1066 : vector<1x16xi1>, vector<1x16xf32>
    %1070 = tpu.iota {dimensions = array<i32: 1>} : vector<1x16xi32>
    %1071 = tpu.iota {dimensions = array<i32: 1>} : vector<1x4xi32>
    %cst_365 = arith.constant 0.000000e+00 : f32
    %1072 = vector.broadcast %cst_365 : f32 to vector<1x4xf32>
    %cst_366 = arith.constant dense<0x7F800000> : vector<1xf32>
    %1073 = vector.multi_reduction <minimumf>, %1069, %cst_366 [1] : vector<1x16xf32> to vector<1xf32>
    %1074 = vector.shape_cast %1073 : vector<1xf32> to vector<1x1xf32>
    %c0_i32_367 = arith.constant 0 : i32
    %1075 = vector.broadcast %c0_i32_367 : i32 to vector<1x4xi32>
    %1076 = arith.cmpi eq, %1071, %1075 : vector<1x4xi32>
    %1077 = vector.shape_cast %1074 : vector<1x1xf32> to vector<1x1xf32>
    %1078 = vector.broadcast %1077 : vector<1x1xf32> to vector<1x4xf32>
    %1079 = arith.select %1076, %1078, %1072 : vector<1x4xi1>, vector<1x4xf32>
    %1080 = vector.broadcast %1074 : vector<1x1xf32> to vector<1x16xf32>
    %1081 = arith.cmpf ole, %1069, %1080 : vector<1x16xf32>
    %c16_i32_368 = arith.constant 16 : i32
    %1082 = vector.broadcast %c16_i32_368 : i32 to vector<1x16xi32>
    %1083 = arith.select %1081, %1070, %1082 : vector<1x16xi1>, vector<1x16xi32>
    %cst_369 = arith.constant dense<2147483647> : vector<1xi32>
    %1084 = vector.multi_reduction <minsi>, %1083, %cst_369 [1] : vector<1x16xi32> to vector<1xi32>
    %1085 = vector.shape_cast %1084 : vector<1xi32> to vector<1x1xi32>
    %1086 = vector.broadcast %1085 : vector<1x1xi32> to vector<1x16xi32>
    %1087 = arith.cmpi eq, %1070, %1086 : vector<1x16xi32>
    %cst_370 = arith.constant 4.000000e+30 : f32
    %1088 = vector.broadcast %cst_370 : f32 to vector<1x16xf32>
    %1089 = arith.select %1087, %1088, %1069 : vector<1x16xi1>, vector<1x16xf32>
    %cst_371 = arith.constant dense<0x7F800000> : vector<1xf32>
    %1090 = vector.multi_reduction <minimumf>, %1089, %cst_371 [1] : vector<1x16xf32> to vector<1xf32>
    %1091 = vector.shape_cast %1090 : vector<1xf32> to vector<1x1xf32>
    %c1_i32_372 = arith.constant 1 : i32
    %1092 = vector.broadcast %c1_i32_372 : i32 to vector<1x4xi32>
    %1093 = arith.cmpi eq, %1071, %1092 : vector<1x4xi32>
    %1094 = vector.shape_cast %1091 : vector<1x1xf32> to vector<1x1xf32>
    %1095 = vector.broadcast %1094 : vector<1x1xf32> to vector<1x4xf32>
    %1096 = arith.select %1093, %1095, %1079 : vector<1x4xi1>, vector<1x4xf32>
    %1097 = vector.broadcast %1091 : vector<1x1xf32> to vector<1x16xf32>
    %1098 = arith.cmpf ole, %1089, %1097 : vector<1x16xf32>
    %c16_i32_373 = arith.constant 16 : i32
    %1099 = vector.broadcast %c16_i32_373 : i32 to vector<1x16xi32>
    %1100 = arith.select %1098, %1070, %1099 : vector<1x16xi1>, vector<1x16xi32>
    %cst_374 = arith.constant dense<2147483647> : vector<1xi32>
    %1101 = vector.multi_reduction <minsi>, %1100, %cst_374 [1] : vector<1x16xi32> to vector<1xi32>
    %1102 = vector.shape_cast %1101 : vector<1xi32> to vector<1x1xi32>
    %1103 = vector.broadcast %1102 : vector<1x1xi32> to vector<1x16xi32>
    %1104 = arith.cmpi eq, %1070, %1103 : vector<1x16xi32>
    %cst_375 = arith.constant 4.000000e+30 : f32
    %1105 = vector.broadcast %cst_375 : f32 to vector<1x16xf32>
    %1106 = arith.select %1104, %1105, %1089 : vector<1x16xi1>, vector<1x16xf32>
    %cst_376 = arith.constant dense<0x7F800000> : vector<1xf32>
    %1107 = vector.multi_reduction <minimumf>, %1106, %cst_376 [1] : vector<1x16xf32> to vector<1xf32>
    %1108 = vector.shape_cast %1107 : vector<1xf32> to vector<1x1xf32>
    %c2_i32_377 = arith.constant 2 : i32
    %1109 = vector.broadcast %c2_i32_377 : i32 to vector<1x4xi32>
    %1110 = arith.cmpi eq, %1071, %1109 : vector<1x4xi32>
    %1111 = vector.shape_cast %1108 : vector<1x1xf32> to vector<1x1xf32>
    %1112 = vector.broadcast %1111 : vector<1x1xf32> to vector<1x4xf32>
    %1113 = arith.select %1110, %1112, %1096 : vector<1x4xi1>, vector<1x4xf32>
    %1114 = vector.broadcast %1108 : vector<1x1xf32> to vector<1x16xf32>
    %1115 = arith.cmpf ole, %1106, %1114 : vector<1x16xf32>
    %c16_i32_378 = arith.constant 16 : i32
    %1116 = vector.broadcast %c16_i32_378 : i32 to vector<1x16xi32>
    %1117 = arith.select %1115, %1070, %1116 : vector<1x16xi1>, vector<1x16xi32>
    %cst_379 = arith.constant dense<2147483647> : vector<1xi32>
    %1118 = vector.multi_reduction <minsi>, %1117, %cst_379 [1] : vector<1x16xi32> to vector<1xi32>
    %1119 = vector.shape_cast %1118 : vector<1xi32> to vector<1x1xi32>
    %1120 = vector.broadcast %1119 : vector<1x1xi32> to vector<1x16xi32>
    %1121 = arith.cmpi eq, %1070, %1120 : vector<1x16xi32>
    %cst_380 = arith.constant 4.000000e+30 : f32
    %1122 = vector.broadcast %cst_380 : f32 to vector<1x16xf32>
    %1123 = arith.select %1121, %1122, %1106 : vector<1x16xi1>, vector<1x16xf32>
    %cst_381 = arith.constant dense<0x7F800000> : vector<1xf32>
    %1124 = vector.multi_reduction <minimumf>, %1123, %cst_381 [1] : vector<1x16xf32> to vector<1xf32>
    %1125 = vector.shape_cast %1124 : vector<1xf32> to vector<1x1xf32>
    %c3_i32_382 = arith.constant 3 : i32
    %1126 = vector.broadcast %c3_i32_382 : i32 to vector<1x4xi32>
    %1127 = arith.cmpi eq, %1071, %1126 : vector<1x4xi32>
    %1128 = vector.shape_cast %1125 : vector<1x1xf32> to vector<1x1xf32>
    %1129 = vector.broadcast %1128 : vector<1x1xf32> to vector<1x4xf32>
    %1130 = arith.select %1127, %1129, %1113 : vector<1x4xi1>, vector<1x4xf32>
    %c0_383 = arith.constant 0 : index
    %c0_384 = arith.constant 0 : index
    %1131 = vector.load %arg7[%c0_383, %c0_384] : memref<32x4xf32, #tpu.memory_space<vmem>>, vector<1x4xf32>
    tpu.vector_store %arg7[%c0_383, %c0_384], %1130 {strides = array<i32>} : memref<32x4xf32, #tpu.memory_space<vmem>>, vector<1x4xf32>,
    %c0_385 = arith.constant 0 : index
    %c0_386 = arith.constant 0 : index
    %1132 = vector.load %arg9[%c0_385, %c0_386] : memref<1x4xf32, #tpu.memory_space<vmem>>, vector<1x4xf32>
    %c0_387 = arith.constant 0 : index
    %c0_388 = arith.constant 0 : index
    %1133 = vector.load %arg7[%c0_387, %c0_388] : memref<32x4xf32, #tpu.memory_space<vmem>>, vector<1x4xf32>
    %1134 = tpu.iota {dimensions = array<i32: 1>} : vector<1x4xi32>
    %1135 = tpu.iota {dimensions = array<i32: 1>} : vector<1x16xi32>
    %cst_389 = arith.constant 0.000000e+00 : f32
    %1136 = vector.broadcast %cst_389 : f32 to vector<1x16xf32>
    %c0_i32_390 = arith.constant 0 : i32
    %1137 = vector.broadcast %c0_i32_390 : i32 to vector<1x4xi32>
    %1138 = arith.cmpi eq, %1134, %1137 : vector<1x4xi32>
    %cst_391 = arith.constant 4.000000e+30 : f32
    %1139 = vector.broadcast %cst_391 : f32 to vector<1x4xf32>
    %1140 = arith.select %1138, %1132, %1139 : vector<1x4xi1>, vector<1x4xf32>
    %cst_392 = arith.constant dense<0x7F800000> : vector<1xf32>
    %1141 = vector.multi_reduction <minimumf>, %1140, %cst_392 [1] : vector<1x4xf32> to vector<1xf32>
    %1142 = vector.shape_cast %1141 : vector<1xf32> to vector<1x1xf32>
    %c0_i32_393 = arith.constant 0 : i32
    %1143 = vector.broadcast %c0_i32_393 : i32 to vector<1x4xi32>
    %1144 = arith.cmpi eq, %1134, %1143 : vector<1x4xi32>
    %cst_394 = arith.constant 4.000000e+30 : f32
    %1145 = vector.broadcast %cst_394 : f32 to vector<1x4xf32>
    %1146 = arith.select %1144, %1133, %1145 : vector<1x4xi1>, vector<1x4xf32>
    %cst_395 = arith.constant dense<0x7F800000> : vector<1xf32>
    %1147 = vector.multi_reduction <minimumf>, %1146, %cst_395 [1] : vector<1x4xf32> to vector<1xf32>
    %1148 = vector.shape_cast %1147 : vector<1xf32> to vector<1x1xf32>
    %c0_i32_396 = arith.constant 0 : i32
    %1149 = vector.broadcast %c0_i32_396 : i32 to vector<1x16xi32>
    %1150 = arith.cmpi sge, %1135, %1149 : vector<1x16xi32>
    %c4_i32_397 = arith.constant 4 : i32
    %1151 = vector.broadcast %c4_i32_397 : i32 to vector<1x16xi32>
    %1152 = arith.cmpi slt, %1135, %1151 : vector<1x16xi32>
    %1153 = arith.andi %1150, %1152 : vector<1x16xi1>
    %c0_i32_398 = arith.constant 0 : i32
    %1154 = vector.broadcast %c0_i32_398 : i32 to vector<1x16xi32>
    %1155 = arith.cmpi eq, %1135, %1154 : vector<1x16xi32>
    %c4_i32_399 = arith.constant 4 : i32
    %1156 = vector.broadcast %c4_i32_399 : i32 to vector<1x16xi32>
    %1157 = arith.cmpi eq, %1135, %1156 : vector<1x16xi32>
    %1158 = arith.ori %1155, %1157 : vector<1x16xi1>
    %c8_i32_400 = arith.constant 8 : i32
    %1159 = vector.broadcast %c8_i32_400 : i32 to vector<1x16xi32>
    %1160 = arith.cmpi eq, %1135, %1159 : vector<1x16xi32>
    %1161 = arith.ori %1158, %1160 : vector<1x16xi1>
    %c12_i32_401 = arith.constant 12 : i32
    %1162 = vector.broadcast %c12_i32_401 : i32 to vector<1x16xi32>
    %1163 = arith.cmpi eq, %1135, %1162 : vector<1x16xi32>
    %1164 = arith.ori %1161, %1163 : vector<1x16xi1>
    %1165 = vector.broadcast %1142 : vector<1x1xf32> to vector<1x16xf32>
    %1166 = arith.addf %1136, %1165 : vector<1x16xf32>
    %1167 = arith.select %1153, %1166, %1136 : vector<1x16xi1>, vector<1x16xf32>
    %1168 = vector.broadcast %1148 : vector<1x1xf32> to vector<1x16xf32>
    %1169 = arith.addf %1167, %1168 : vector<1x16xf32>
    %1170 = arith.select %1164, %1169, %1167 : vector<1x16xi1>, vector<1x16xf32>
    %c1_i32_402 = arith.constant 1 : i32
    %1171 = vector.broadcast %c1_i32_402 : i32 to vector<1x4xi32>
    %1172 = arith.cmpi eq, %1134, %1171 : vector<1x4xi32>
    %cst_403 = arith.constant 4.000000e+30 : f32
    %1173 = vector.broadcast %cst_403 : f32 to vector<1x4xf32>
    %1174 = arith.select %1172, %1132, %1173 : vector<1x4xi1>, vector<1x4xf32>
    %cst_404 = arith.constant dense<0x7F800000> : vector<1xf32>
    %1175 = vector.multi_reduction <minimumf>, %1174, %cst_404 [1] : vector<1x4xf32> to vector<1xf32>
    %1176 = vector.shape_cast %1175 : vector<1xf32> to vector<1x1xf32>
    %c1_i32_405 = arith.constant 1 : i32
    %1177 = vector.broadcast %c1_i32_405 : i32 to vector<1x4xi32>
    %1178 = arith.cmpi eq, %1134, %1177 : vector<1x4xi32>
    %cst_406 = arith.constant 4.000000e+30 : f32
    %1179 = vector.broadcast %cst_406 : f32 to vector<1x4xf32>
    %1180 = arith.select %1178, %1133, %1179 : vector<1x4xi1>, vector<1x4xf32>
    %cst_407 = arith.constant dense<0x7F800000> : vector<1xf32>
    %1181 = vector.multi_reduction <minimumf>, %1180, %cst_407 [1] : vector<1x4xf32> to vector<1xf32>
    %1182 = vector.shape_cast %1181 : vector<1xf32> to vector<1x1xf32>
    %c4_i32_408 = arith.constant 4 : i32
    %1183 = vector.broadcast %c4_i32_408 : i32 to vector<1x16xi32>
    %1184 = arith.cmpi sge, %1135, %1183 : vector<1x16xi32>
    %c8_i32_409 = arith.constant 8 : i32
    %1185 = vector.broadcast %c8_i32_409 : i32 to vector<1x16xi32>
    %1186 = arith.cmpi slt, %1135, %1185 : vector<1x16xi32>
    %1187 = arith.andi %1184, %1186 : vector<1x16xi1>
    %c1_i32_410 = arith.constant 1 : i32
    %1188 = vector.broadcast %c1_i32_410 : i32 to vector<1x16xi32>
    %1189 = arith.cmpi eq, %1135, %1188 : vector<1x16xi32>
    %c5_i32_411 = arith.constant 5 : i32
    %1190 = vector.broadcast %c5_i32_411 : i32 to vector<1x16xi32>
    %1191 = arith.cmpi eq, %1135, %1190 : vector<1x16xi32>
    %1192 = arith.ori %1189, %1191 : vector<1x16xi1>
    %c9_i32_412 = arith.constant 9 : i32
    %1193 = vector.broadcast %c9_i32_412 : i32 to vector<1x16xi32>
    %1194 = arith.cmpi eq, %1135, %1193 : vector<1x16xi32>
    %1195 = arith.ori %1192, %1194 : vector<1x16xi1>
    %c13_i32_413 = arith.constant 13 : i32
    %1196 = vector.broadcast %c13_i32_413 : i32 to vector<1x16xi32>
    %1197 = arith.cmpi eq, %1135, %1196 : vector<1x16xi32>
    %1198 = arith.ori %1195, %1197 : vector<1x16xi1>
    %1199 = vector.broadcast %1176 : vector<1x1xf32> to vector<1x16xf32>
    %1200 = arith.addf %1170, %1199 : vector<1x16xf32>
    %1201 = arith.select %1187, %1200, %1170 : vector<1x16xi1>, vector<1x16xf32>
    %1202 = vector.broadcast %1182 : vector<1x1xf32> to vector<1x16xf32>
    %1203 = arith.addf %1201, %1202 : vector<1x16xf32>
    %1204 = arith.select %1198, %1203, %1201 : vector<1x16xi1>, vector<1x16xf32>
    %c2_i32_414 = arith.constant 2 : i32
    %1205 = vector.broadcast %c2_i32_414 : i32 to vector<1x4xi32>
    %1206 = arith.cmpi eq, %1134, %1205 : vector<1x4xi32>
    %cst_415 = arith.constant 4.000000e+30 : f32
    %1207 = vector.broadcast %cst_415 : f32 to vector<1x4xf32>
    %1208 = arith.select %1206, %1132, %1207 : vector<1x4xi1>, vector<1x4xf32>
    %cst_416 = arith.constant dense<0x7F800000> : vector<1xf32>
    %1209 = vector.multi_reduction <minimumf>, %1208, %cst_416 [1] : vector<1x4xf32> to vector<1xf32>
    %1210 = vector.shape_cast %1209 : vector<1xf32> to vector<1x1xf32>
    %c2_i32_417 = arith.constant 2 : i32
    %1211 = vector.broadcast %c2_i32_417 : i32 to vector<1x4xi32>
    %1212 = arith.cmpi eq, %1134, %1211 : vector<1x4xi32>
    %cst_418 = arith.constant 4.000000e+30 : f32
    %1213 = vector.broadcast %cst_418 : f32 to vector<1x4xf32>
    %1214 = arith.select %1212, %1133, %1213 : vector<1x4xi1>, vector<1x4xf32>
    %cst_419 = arith.constant dense<0x7F800000> : vector<1xf32>
    %1215 = vector.multi_reduction <minimumf>, %1214, %cst_419 [1] : vector<1x4xf32> to vector<1xf32>
    %1216 = vector.shape_cast %1215 : vector<1xf32> to vector<1x1xf32>
    %c8_i32_420 = arith.constant 8 : i32
    %1217 = vector.broadcast %c8_i32_420 : i32 to vector<1x16xi32>
    %1218 = arith.cmpi sge, %1135, %1217 : vector<1x16xi32>
    %c12_i32_421 = arith.constant 12 : i32
    %1219 = vector.broadcast %c12_i32_421 : i32 to vector<1x16xi32>
    %1220 = arith.cmpi slt, %1135, %1219 : vector<1x16xi32>
    %1221 = arith.andi %1218, %1220 : vector<1x16xi1>
    %c2_i32_422 = arith.constant 2 : i32
    %1222 = vector.broadcast %c2_i32_422 : i32 to vector<1x16xi32>
    %1223 = arith.cmpi eq, %1135, %1222 : vector<1x16xi32>
    %c6_i32_423 = arith.constant 6 : i32
    %1224 = vector.broadcast %c6_i32_423 : i32 to vector<1x16xi32>
    %1225 = arith.cmpi eq, %1135, %1224 : vector<1x16xi32>
    %1226 = arith.ori %1223, %1225 : vector<1x16xi1>
    %c10_i32_424 = arith.constant 10 : i32
    %1227 = vector.broadcast %c10_i32_424 : i32 to vector<1x16xi32>
    %1228 = arith.cmpi eq, %1135, %1227 : vector<1x16xi32>
    %1229 = arith.ori %1226, %1228 : vector<1x16xi1>
    %c14_i32_425 = arith.constant 14 : i32
    %1230 = vector.broadcast %c14_i32_425 : i32 to vector<1x16xi32>
    %1231 = arith.cmpi eq, %1135, %1230 : vector<1x16xi32>
    %1232 = arith.ori %1229, %1231 : vector<1x16xi1>
    %1233 = vector.broadcast %1210 : vector<1x1xf32> to vector<1x16xf32>
    %1234 = arith.addf %1204, %1233 : vector<1x16xf32>
    %1235 = arith.select %1221, %1234, %1204 : vector<1x16xi1>, vector<1x16xf32>
    %1236 = vector.broadcast %1216 : vector<1x1xf32> to vector<1x16xf32>
    %1237 = arith.addf %1235, %1236 : vector<1x16xf32>
    %1238 = arith.select %1232, %1237, %1235 : vector<1x16xi1>, vector<1x16xf32>
    %c3_i32_426 = arith.constant 3 : i32
    %1239 = vector.broadcast %c3_i32_426 : i32 to vector<1x4xi32>
    %1240 = arith.cmpi eq, %1134, %1239 : vector<1x4xi32>
    %cst_427 = arith.constant 4.000000e+30 : f32
    %1241 = vector.broadcast %cst_427 : f32 to vector<1x4xf32>
    %1242 = arith.select %1240, %1132, %1241 : vector<1x4xi1>, vector<1x4xf32>
    %cst_428 = arith.constant dense<0x7F800000> : vector<1xf32>
    %1243 = vector.multi_reduction <minimumf>, %1242, %cst_428 [1] : vector<1x4xf32> to vector<1xf32>
    %1244 = vector.shape_cast %1243 : vector<1xf32> to vector<1x1xf32>
    %c3_i32_429 = arith.constant 3 : i32
    %1245 = vector.broadcast %c3_i32_429 : i32 to vector<1x4xi32>
    %1246 = arith.cmpi eq, %1134, %1245 : vector<1x4xi32>
    %cst_430 = arith.constant 4.000000e+30 : f32
    %1247 = vector.broadcast %cst_430 : f32 to vector<1x4xf32>
    %1248 = arith.select %1246, %1133, %1247 : vector<1x4xi1>, vector<1x4xf32>
    %cst_431 = arith.constant dense<0x7F800000> : vector<1xf32>
    %1249 = vector.multi_reduction <minimumf>, %1248, %cst_431 [1] : vector<1x4xf32> to vector<1xf32>
    %1250 = vector.shape_cast %1249 : vector<1xf32> to vector<1x1xf32>
    %c12_i32_432 = arith.constant 12 : i32
    %1251 = vector.broadcast %c12_i32_432 : i32 to vector<1x16xi32>
    %1252 = arith.cmpi sge, %1135, %1251 : vector<1x16xi32>
    %c16_i32_433 = arith.constant 16 : i32
    %1253 = vector.broadcast %c16_i32_433 : i32 to vector<1x16xi32>
    %1254 = arith.cmpi slt, %1135, %1253 : vector<1x16xi32>
    %1255 = arith.andi %1252, %1254 : vector<1x16xi1>
    %c3_i32_434 = arith.constant 3 : i32
    %1256 = vector.broadcast %c3_i32_434 : i32 to vector<1x16xi32>
    %1257 = arith.cmpi eq, %1135, %1256 : vector<1x16xi32>
    %c7_i32_435 = arith.constant 7 : i32
    %1258 = vector.broadcast %c7_i32_435 : i32 to vector<1x16xi32>
    %1259 = arith.cmpi eq, %1135, %1258 : vector<1x16xi32>
    %1260 = arith.ori %1257, %1259 : vector<1x16xi1>
    %c11_i32_436 = arith.constant 11 : i32
    %1261 = vector.broadcast %c11_i32_436 : i32 to vector<1x16xi32>
    %1262 = arith.cmpi eq, %1135, %1261 : vector<1x16xi32>
    %1263 = arith.ori %1260, %1262 : vector<1x16xi1>
    %c15_i32_437 = arith.constant 15 : i32
    %1264 = vector.broadcast %c15_i32_437 : i32 to vector<1x16xi32>
    %1265 = arith.cmpi eq, %1135, %1264 : vector<1x16xi32>
    %1266 = arith.ori %1263, %1265 : vector<1x16xi1>
    %1267 = vector.broadcast %1244 : vector<1x1xf32> to vector<1x16xf32>
    %1268 = arith.addf %1238, %1267 : vector<1x16xf32>
    %1269 = arith.select %1255, %1268, %1238 : vector<1x16xi1>, vector<1x16xf32>
    %1270 = vector.broadcast %1250 : vector<1x1xf32> to vector<1x16xf32>
    %1271 = arith.addf %1269, %1270 : vector<1x16xf32>
    %1272 = arith.select %1266, %1271, %1269 : vector<1x16xi1>, vector<1x16xf32>
    %1273 = tpu.iota {dimensions = array<i32: 1>} : vector<1x16xi32>
    %1274 = tpu.iota {dimensions = array<i32: 1>} : vector<1x4xi32>
    %cst_438 = arith.constant 0.000000e+00 : f32
    %1275 = vector.broadcast %cst_438 : f32 to vector<1x4xf32>
    %cst_439 = arith.constant dense<0x7F800000> : vector<1xf32>
    %1276 = vector.multi_reduction <minimumf>, %1272, %cst_439 [1] : vector<1x16xf32> to vector<1xf32>
    %1277 = vector.shape_cast %1276 : vector<1xf32> to vector<1x1xf32>
    %c0_i32_440 = arith.constant 0 : i32
    %1278 = vector.broadcast %c0_i32_440 : i32 to vector<1x4xi32>
    %1279 = arith.cmpi eq, %1274, %1278 : vector<1x4xi32>
    %1280 = vector.shape_cast %1277 : vector<1x1xf32> to vector<1x1xf32>
    %1281 = vector.broadcast %1280 : vector<1x1xf32> to vector<1x4xf32>
    %1282 = arith.select %1279, %1281, %1275 : vector<1x4xi1>, vector<1x4xf32>
    %1283 = vector.broadcast %1277 : vector<1x1xf32> to vector<1x16xf32>
    %1284 = arith.cmpf ole, %1272, %1283 : vector<1x16xf32>
    %c16_i32_441 = arith.constant 16 : i32
    %1285 = vector.broadcast %c16_i32_441 : i32 to vector<1x16xi32>
    %1286 = arith.select %1284, %1273, %1285 : vector<1x16xi1>, vector<1x16xi32>
    %cst_442 = arith.constant dense<2147483647> : vector<1xi32>
    %1287 = vector.multi_reduction <minsi>, %1286, %cst_442 [1] : vector<1x16xi32> to vector<1xi32>
    %1288 = vector.shape_cast %1287 : vector<1xi32> to vector<1x1xi32>
    %1289 = vector.broadcast %1288 : vector<1x1xi32> to vector<1x16xi32>
    %1290 = arith.cmpi eq, %1273, %1289 : vector<1x16xi32>
    %cst_443 = arith.constant 4.000000e+30 : f32
    %1291 = vector.broadcast %cst_443 : f32 to vector<1x16xf32>
    %1292 = arith.select %1290, %1291, %1272 : vector<1x16xi1>, vector<1x16xf32>
    %cst_444 = arith.constant dense<0x7F800000> : vector<1xf32>
    %1293 = vector.multi_reduction <minimumf>, %1292, %cst_444 [1] : vector<1x16xf32> to vector<1xf32>
    %1294 = vector.shape_cast %1293 : vector<1xf32> to vector<1x1xf32>
    %c1_i32_445 = arith.constant 1 : i32
    %1295 = vector.broadcast %c1_i32_445 : i32 to vector<1x4xi32>
    %1296 = arith.cmpi eq, %1274, %1295 : vector<1x4xi32>
    %1297 = vector.shape_cast %1294 : vector<1x1xf32> to vector<1x1xf32>
    %1298 = vector.broadcast %1297 : vector<1x1xf32> to vector<1x4xf32>
    %1299 = arith.select %1296, %1298, %1282 : vector<1x4xi1>, vector<1x4xf32>
    %1300 = vector.broadcast %1294 : vector<1x1xf32> to vector<1x16xf32>
    %1301 = arith.cmpf ole, %1292, %1300 : vector<1x16xf32>
    %c16_i32_446 = arith.constant 16 : i32
    %1302 = vector.broadcast %c16_i32_446 : i32 to vector<1x16xi32>
    %1303 = arith.select %1301, %1273, %1302 : vector<1x16xi1>, vector<1x16xi32>
    %cst_447 = arith.constant dense<2147483647> : vector<1xi32>
    %1304 = vector.multi_reduction <minsi>, %1303, %cst_447 [1] : vector<1x16xi32> to vector<1xi32>
    %1305 = vector.shape_cast %1304 : vector<1xi32> to vector<1x1xi32>
    %1306 = vector.broadcast %1305 : vector<1x1xi32> to vector<1x16xi32>
    %1307 = arith.cmpi eq, %1273, %1306 : vector<1x16xi32>
    %cst_448 = arith.constant 4.000000e+30 : f32
    %1308 = vector.broadcast %cst_448 : f32 to vector<1x16xf32>
    %1309 = arith.select %1307, %1308, %1292 : vector<1x16xi1>, vector<1x16xf32>
    %cst_449 = arith.constant dense<0x7F800000> : vector<1xf32>
    %1310 = vector.multi_reduction <minimumf>, %1309, %cst_449 [1] : vector<1x16xf32> to vector<1xf32>
    %1311 = vector.shape_cast %1310 : vector<1xf32> to vector<1x1xf32>
    %c2_i32_450 = arith.constant 2 : i32
    %1312 = vector.broadcast %c2_i32_450 : i32 to vector<1x4xi32>
    %1313 = arith.cmpi eq, %1274, %1312 : vector<1x4xi32>
    %1314 = vector.shape_cast %1311 : vector<1x1xf32> to vector<1x1xf32>
    %1315 = vector.broadcast %1314 : vector<1x1xf32> to vector<1x4xf32>
    %1316 = arith.select %1313, %1315, %1299 : vector<1x4xi1>, vector<1x4xf32>
    %1317 = vector.broadcast %1311 : vector<1x1xf32> to vector<1x16xf32>
    %1318 = arith.cmpf ole, %1309, %1317 : vector<1x16xf32>
    %c16_i32_451 = arith.constant 16 : i32
    %1319 = vector.broadcast %c16_i32_451 : i32 to vector<1x16xi32>
    %1320 = arith.select %1318, %1273, %1319 : vector<1x16xi1>, vector<1x16xi32>
    %cst_452 = arith.constant dense<2147483647> : vector<1xi32>
    %1321 = vector.multi_reduction <minsi>, %1320, %cst_452 [1] : vector<1x16xi32> to vector<1xi32>
    %1322 = vector.shape_cast %1321 : vector<1xi32> to vector<1x1xi32>
    %1323 = vector.broadcast %1322 : vector<1x1xi32> to vector<1x16xi32>
    %1324 = arith.cmpi eq, %1273, %1323 : vector<1x16xi32>
    %cst_453 = arith.constant 4.000000e+30 : f32
    %1325 = vector.broadcast %cst_453 : f32 to vector<1x16xf32>
    %1326 = arith.select %1324, %1325, %1309 : vector<1x16xi1>, vector<1x16xf32>
    %cst_454 = arith.constant dense<0x7F800000> : vector<1xf32>
    %1327 = vector.multi_reduction <minimumf>, %1326, %cst_454 [1] : vector<1x16xf32> to vector<1xf32>
    %1328 = vector.shape_cast %1327 : vector<1xf32> to vector<1x1xf32>
    %c3_i32_455 = arith.constant 3 : i32
    %1329 = vector.broadcast %c3_i32_455 : i32 to vector<1x4xi32>
    %1330 = arith.cmpi eq, %1274, %1329 : vector<1x4xi32>
    %1331 = vector.shape_cast %1328 : vector<1x1xf32> to vector<1x1xf32>
    %1332 = vector.broadcast %1331 : vector<1x1xf32> to vector<1x4xf32>
    %1333 = arith.select %1330, %1332, %1316 : vector<1x4xi1>, vector<1x4xf32>
    %c0_456 = arith.constant 0 : index
    %c0_457 = arith.constant 0 : index
    %1334 = vector.load %arg9[%c0_456, %c0_457] : memref<1x4xf32, #tpu.memory_space<vmem>>, vector<1x4xf32>
    tpu.vector_store %arg9[%c0_456, %c0_457], %1333 {strides = array<i32>} : memref<1x4xf32, #tpu.memory_space<vmem>>, vector<1x4xf32>,
    %c0_i32_458 = arith.constant 0 : i32
    %1335 = arith.cmpi eq, %arg2, %c0_i32_458 : i32
    %1336 = arith.extui %1335 : i1 to i32
    %c0_i32_459 = arith.constant 0 : i32
    %1337 = arith.cmpi ne, %1336, %c0_i32_459 : i32
    scf.if %1337 {
      %c0_460 = arith.constant 0 : index
      %c0_461 = arith.constant 0 : index
      %1338 = vector.load %arg8[%c0_460, %c0_461] : memref<1x1xf32, #tpu.memory_space<vmem>>, vector<1x1xf32>
      %c0_462 = arith.constant 0 : index
      %c0_463 = arith.constant 0 : index
      %c0_464 = arith.constant 0 : index
      %1339 = vector.load %arg5[%c0_462, %c0_463, %c0_464] : memref<1x1x1xf32, #tpu.memory_space<vmem>>, vector<1x1x1xf32>
      %1340 = vector.shape_cast %1339 : vector<1x1x1xf32> to vector<1x1xf32>
      %1341 = vector.shape_cast %1338 : vector<1x1xf32> to vector<1x1x1xf32>
      tpu.vector_store %arg5[%c0_462, %c0_463, %c0_464], %1341 {strides = array<i32>} : memref<1x1x1xf32, #tpu.memory_space<vmem>>, vector<1x1x1xf32>,
      %c0_465 = arith.constant 0 : index
      %c0_466 = arith.constant 0 : index
      %1342 = vector.load %arg9[%c0_465, %c0_466] : memref<1x4xf32, #tpu.memory_space<vmem>>, vector<1x4xf32>
      %c0_467 = arith.constant 0 : index
      %c0_468 = arith.constant 0 : index
      %c0_469 = arith.constant 0 : index
      %1343 = vector.load %arg6[%c0_467, %c0_468, %c0_469] : memref<1x1x4xf32, #tpu.memory_space<vmem>>, vector<1x1x4xf32>
      %1344 = vector.shape_cast %1343 : vector<1x1x4xf32> to vector<1x4xf32>
      %1345 = vector.shape_cast %1342 : vector<1x4xf32> to vector<1x1x4xf32>
      tpu.vector_store %arg6[%c0_467, %c0_468, %c0_469], %1345 {strides = array<i32>} : memref<1x1x4xf32, #tpu.memory_space<vmem>>, vector<1x1x4xf32>,
    } else {
    }
    return
  }
  func.func @transform_0(%arg0: i32, %arg1: i32, %arg2: i32) -> (i32, i32, i32) {
    %c1_i32 = arith.constant 1 : i32
    %0 = arith.muli %arg1, %c1_i32 : i32
    %1 = arith.addi %0, %arg2 : i32
    %c0_i32 = arith.constant 0 : i32
    %c0_i32_0 = arith.constant 0 : i32
    return %arg0, %1, %c0_i32 : i32, i32, i32
  }
  func.func @transform_1(%arg0: i32, %arg1: i32, %arg2: i32) -> (i32, i32, i32) {
    %c1_i32 = arith.constant 1 : i32
    %0 = arith.muli %arg1, %c1_i32 : i32
    %1 = arith.addi %0, %arg2 : i32
    %c0_i32 = arith.constant 0 : i32
    %c0_i32_0 = arith.constant 0 : i32
    return %arg0, %1, %c0_i32 : i32, i32, i32
  }
  func.func @transform_2(%arg0: i32, %arg1: i32, %arg2: i32) -> (i32, i32, i32) {
    %c0_i32 = arith.constant 0 : i32
    %c0_i32_0 = arith.constant 0 : i32
    return %arg0, %arg1, %c0_i32 : i32, i32, i32
  }
  func.func @transform_3(%arg0: i32, %arg1: i32, %arg2: i32) -> (i32, i32, i32) {
    %c0_i32 = arith.constant 0 : i32
    %c0_i32_0 = arith.constant 0 : i32
    return %arg0, %arg1, %c0_i32 : i32, i32, i32
  }
}

</mosaic_0001>

<llo_original>
// kernel: tpu_custom_call.1
$region0: #{tpu_custom_call.1}
  #allocation0 [shape = 'u32[]', space=smem, size = 0x4, offset = 0x4, fixed_abs, tag = 'smem constant byte address 0x4 - core index']
  #allocation1 [shape = 'u32[144,128]{1,0:T(1,128)}', space=vmem, size = 0x12000, scoped, tag = 'internal scratch']
  #allocation2 [shape = 'f32[32,4]{1,0:T(8,128)}', space=vmem, size = 0x4000, scoped, tag = 'scratch operand']
  #allocation3 [shape = 'f32[1,1]{1,0:T(1,128)}', space=vmem, size = 0x200, scoped, tag = 'scratch operand']
  #allocation4 [shape = 'f32[1,4]{1,0:T(1,128)}', space=vmem, size = 0x200, scoped, tag = 'scratch operand']
  %s0 = inlined_call_operand.hbm [shape: f32[2,32,32], index: 0, kind: input, shape index: {}]
  %s1 = inlined_call_operand.vmem [shape: s32[2,32,1], index: 1, kind: output, shape index: {0}]
  %s2 = inlined_call_operand.vmem [shape: f32[2,1,1], index: 2, kind: output, shape index: {1}]
  %s3 = inlined_call_operand.hbm [shape: f32[2,1,4], index: 3, kind: output, shape index: {2}]
  %4 = xla_tuple %s1, %s2, %s3
  %s5 = sld [smem:[#allocation0]]
  $region65: #{tpu_custom_call.1} parent=0
    _
  %s7 = ssub.s32 1, %s5
  %s8 = scalar_select 0, %s7, %s5
  $region1: #{tpu_custom_call.1} parent=0
    #allocation5 [shape = 'u8[32768]{0}', space=vmem, size = 0x8000, scoped, tag = 'input window, operand 0']
    #allocation6 [shape = 's32[2]{0}', space=sflag, size = 0x8, scoped, tag = 'scoped memory for tpu_custom_call.1']
    #allocation7 [shape = 's32[2]{0}', space=sflag, size = 0x8, scoped, tag = 'scoped memory for tpu_custom_call.1']
    #allocation8 [shape = 'u8[1024]{0}', space=vmem, size = 0x400, scoped, tag = 'output window, operand 2']
    %9 = vsyncpa [#allocation6], 0
    %s10 = scalar_lea.sflag [#allocation6], 1
    %11 = vsyncpa %s10, 0
    %12 = vsyncpa [#allocation7], 0
    %s13 = scalar_lea.sflag [#allocation7], 1
    %14 = vsyncpa %s13, 0
    loop: start=0, step=1, limit=4
    $region2: #{tpu_custom_call.1} parent=1 // loop_pre_header
      _
    $region3: #{tpu_custom_call.1} parent=1 // loop_header
      %s16 = sphi 0, %s20
      %p17 = scmp.ge.s32.totalorder %s16, 4
      %s23 = sphi 0, %s42
      %s24 = sphi 0, %s38
      %s25 = sphi 0, %s34
      %s26 = sphi 0, %s23
      %s27 = sphi 0, %s24
      %s28 = sphi 0, %s25
      %s29 = sphi 0, %s26
      %s30 = sphi 0, %s27
      %s31 = sphi 0, %s28
      %s49 = sphi 0, %s51
      %s52 = sphi 0, %s49
      %s53 = sphi 0, %s52
      %s69 = sphi 0, %s53
      %s79 = sphi 0, %s81
      %s82 = sphi 0, %s79
      %s83 = sphi 0, %s82
      %s99 = sphi 0, %s83
      %s107 = sphi 0, %s109
      %s110 = sphi 0, %s107
      %s111 = sphi 0, %s110
      %s127 = sphi 0, %s111
      %s135 = sphi 0, %s137
      %s138 = sphi 0, %s135
      %s139 = sphi 0, %s138
      %s155 = sphi 0, %s139
    $region4: #{tpu_custom_call.1} parent=1 // loop_header_branch
      %19 = sbr.rel (%p17) target = $region8
    $region5: #{tpu_custom_call.1} parent=1 // loop_body
      %s21 = ssub.s32 %s16, 1
      %s22 = ssub.s32 %s16, 2
      %s32 = sadd.s32 1, %s25
      %p33 = scmp.ge.s32.totalorder %s32, 1
      %s34 = scalar_select %p33, 0, %s32
      %s35 = sadd.s32 1, %s24
      %s36 = scalar_select %p33, %s35, %s24
      %p37 = scmp.ge.s32.totalorder %s36, 1
      %s38 = scalar_select %p37, 0, %s36
      %s39 = sadd.s32 1, %s23
      %s40 = scalar_select %p37, %s39, %s23
      %p41 = scmp.ge.s32.totalorder %s40, 2
      %s42 = scalar_select %p41, 0, %s40
      %s43 = sadd.s32 %s24, %s25
      %s44 = sadd.s32 %s38, %s34
      %s45 = ssub.s32 %s23, %s42
      %s46 = ssub.s32 %s43, %s44
      %s47 = sor.u32 %s45, %s46
      %p48 = scmp.eq.s32.totalorder %s47, 0
      %s50 = sadd.s32 %s49, 1
      %s51 = scalar_select %p48, %s49, %s50
      %p54 = pneg %p48
      %p55 = scmp.eq.s32.totalorder %s16, 1
      %p56 = por %p54, %p55
      %p57 = scmp.ne.s32.totalorder %s49, %s52
      %p58 = scmp.eq.s32.totalorder %s16, 0
      %p59 = por %p57, %p58
      %p60 = scmp.ne.s32.totalorder %s49, %s52
      %p61 = scmp.eq.s32.totalorder %s21, 1
      %p62 = por %p60, %p61
      %p63 = scmp.ne.s32.totalorder %s52, %s53
      %p64 = scmp.eq.s32.totalorder %s21, 0
      %p65 = por %p63, %p64
      %p66 = scmp.ne.s32.totalorder %s52, %s53
      %p67 = scmp.eq.s32.totalorder %s22, 1
      %p68 = por %p66, %p67
      %p70 = scmp.ne.s32.totalorder %s53, %s69
      %p71 = scmp.eq.s32.totalorder %s22, 0
      %p72 = por %p70, %p71
      %s73 = sadd.s32 %s24, %s25
      %s74 = sadd.s32 %s38, %s34
      %s75 = ssub.s32 %s23, %s42
      %s76 = ssub.s32 %s73, %s74
      %s77 = sor.u32 %s75, %s76
      %p78 = scmp.eq.s32.totalorder %s77, 0
      %s80 = sadd.s32 %s79, 1
      %s81 = scalar_select %p78, %s79, %s80
      %p84 = pneg %p78
      %p85 = scmp.eq.s32.totalorder %s16, 1
      %p86 = por %p84, %p85
      %p87 = scmp.ne.s32.totalorder %s79, %s82
      %p88 = scmp.eq.s32.totalorder %s16, 0
      %p89 = por %p87, %p88
      %p90 = scmp.ne.s32.totalorder %s79, %s82
      %p91 = scmp.eq.s32.totalorder %s21, 1
      %p92 = por %p90, %p91
      %p93 = scmp.ne.s32.totalorder %s82, %s83
      %p94 = scmp.eq.s32.totalorder %s21, 0
      %p95 = por %p93, %p94
      %p96 = scmp.ne.s32.totalorder %s82, %s83
      %p97 = scmp.eq.s32.totalorder %s22, 1
      %p98 = por %p96, %p97
      %p100 = scmp.ne.s32.totalorder %s83, %s99
      %p101 = scmp.eq.s32.totalorder %s22, 0
      %p102 = por %p100, %p101
      %s103 = ssub.s32 %s23, %s42
      %s104 = ssub.s32 %s24, %s38
      %s105 = sor.u32 %s103, %s104
      %p106 = scmp.eq.s32.totalorder %s105, 0
      %s108 = sadd.s32 %s107, 1
      %s109 = scalar_select %p106, %s107, %s108
      %p112 = pneg %p106
      %p113 = scmp.eq.s32.totalorder %s16, 1
      %p114 = por %p112, %p113
      %p115 = scmp.ne.s32.totalorder %s107, %s110
      %p116 = scmp.eq.s32.totalorder %s16, 0
      %p117 = por %p115, %p116
      %p118 = scmp.ne.s32.totalorder %s107, %s110
      %p119 = scmp.eq.s32.totalorder %s21, 1
      %p120 = por %p118, %p119
      %p121 = scmp.ne.s32.totalorder %s110, %s111
      %p122 = scmp.eq.s32.totalorder %s21, 0
      %p123 = por %p121, %p122
      %p124 = scmp.ne.s32.totalorder %s110, %s111
      %p125 = scmp.eq.s32.totalorder %s22, 1
      %p126 = por %p124, %p125
      %p128 = scmp.ne.s32.totalorder %s111, %s127
      %p129 = scmp.eq.s32.totalorder %s22, 0
      %p130 = por %p128, %p129
      %s131 = ssub.s32 %s23, %s42
      %s132 = ssub.s32 %s24, %s38
      %s133 = sor.u32 %s131, %s132
      %p134 = scmp.eq.s32.totalorder %s133, 0
      %s136 = sadd.s32 %s135, 1
      %s137 = scalar_select %p134, %s135, %s136
      %p140 = pneg %p134
      %p141 = scmp.eq.s32.totalorder %s16, 1
      %p142 = por %p140, %p141
      %p143 = scmp.ne.s32.totalorder %s135, %s138
      %p144 = scmp.eq.s32.totalorder %s16, 0
      %p145 = por %p143, %p144
      %p146 = scmp.ne.s32.totalorder %s135, %s138
      %p147 = scmp.eq.s32.totalorder %s21, 1
      %p148 = por %p146, %p147
      %p149 = scmp.ne.s32.totalorder %s138, %s139
      %p150 = scmp.eq.s32.totalorder %s21, 0
      %p151 = por %p149, %p150
      %p152 = scmp.ne.s32.totalorder %s138, %s139
      %p153 = scmp.eq.s32.totalorder %s22, 1
      %p154 = por %p152, %p153
      %p156 = scmp.ne.s32.totalorder %s139, %s155
      %p157 = scmp.eq.s32.totalorder %s22, 0
      %p158 = por %p156, %p157
      %p159 = scmp.le.s32.totalorder 1, %s16
      %p160 = scmp.lt.s32.totalorder %s16, 3
      %p161 = pnand %p159, %p160
      %p162 = pneg %p161
      // Predicated region
      $region9: #{tpu_custom_call.1} parent=5 // pred_check
        _
      $region10: #{tpu_custom_call.1} parent=5 // pred_check_branch
        %164 = sbr.rel (%p161) target = $region12
      $region11: #{tpu_custom_call.1} parent=5 // pred_region
        %s165 = ssub.s32 %s16, 1
      $region12: #{tpu_custom_call.1} parent=5 // pred_fallthru
        _
      %p166 = scmp.lt.s32.totalorder %s16, 2
      // Predicated region
      $region13: #{tpu_custom_call.1} parent=5 // pred_check
        %p167 = pneg %p166
      $region14: #{tpu_custom_call.1} parent=5 // pred_check_branch
        %169 = sbr.rel (%p167) target = $region16
      $region15: #{tpu_custom_call.1} parent=5 // pred_region
        // Predicated region
        $region17: #{tpu_custom_call.1} parent=15 // pred_check
          %p170 = pneg %p59
        $region18: #{tpu_custom_call.1} parent=15 // pred_check_branch
          %172 = sbr.rel (%p170) target = $region20
        $region19: #{tpu_custom_call.1} parent=15 // pred_region
          %s173 = sand.u32 %s49, 1
          %s174 = scalar_lea.sflag [#allocation6], %s173
          %s175 = sand.u32 %s49, 1
          %s176 = smul.addr %s175, 32
          %s177 = scalar_lea.vmem [#allocation5], %s176
          %s178 = sadd.s32 %s24, %s25
          %s179 = smul.u32 4, %s178
          %s181 = ssub.s32 512, 512
          %182 = vsyncadd %s174, %s181
          %s183 = smul.addr %s23, 4
          %s184 = sadd.s32 %s179, %s183
          %s185 = smul.addr %s184, 128
          %s186 = scalar_lea.hbm %s0, %s185
          %s187 = sshll.u32 %s177, 4
          %s188 = int_to_ptr.vmem [resolvable:$true] %s187
          %193 = dma.hbm_to_vmem [thread:$0]  %s186, 512, %s188, %s174, 128, 128, 8
        $region20: #{tpu_custom_call.1} parent=15 // pred_fallthru
          _
      $region16: #{tpu_custom_call.1} parent=5 // pred_fallthru
        _
      %p194 = scmp.le.s32.totalorder 1, %s16
      %p195 = scmp.lt.s32.totalorder %s16, 3
      %p196 = pnand %p194, %p195
      %p197 = pneg %p196
      // Predicated region
      $region21: #{tpu_custom_call.1} parent=5 // pred_check
        _
      $region22: #{tpu_custom_call.1} parent=5 // pred_check_branch
        %199 = sbr.rel (%p196) target = $region24
      $region23: #{tpu_custom_call.1} parent=5 // pred_region
        %s200 = ssub.s32 %s16, 1
        %s201 = sand.u32 %s52, 1
        %s202 = scalar_lea.sflag [#allocation6], %s201
        %s203 = sand.u32 %s52, 1
        %s204 = smul.addr %s203, 32
        %s205 = scalar_lea.vmem [#allocation5], %s204
        // Predicated region
        $region25: #{tpu_custom_call.1} parent=23 // pred_check
          %p206 = pneg %p65
        $region26: #{tpu_custom_call.1} parent=23 // pred_check_branch
          %208 = sbr.rel (%p206) target = $region28
        $region27: #{tpu_custom_call.1} parent=23 // pred_region
          %209 = dma.done %s202, 512
        $region28: #{tpu_custom_call.1} parent=23 // pred_fallthru
          _
        %s210 = sand.u32 %s52, 1
        %s211 = scalar_lea.sflag [#allocation6], %s210
        %s212 = sand.u32 %s52, 1
        %s213 = smul.addr %s212, 32
        %s214 = scalar_lea.vmem [#allocation5], %s213
        %p215 = pneg %p65
        %p216 = pneg %p62
        %p217 = pneg %p95
        %p218 = pneg %p92
        %s219 = sadd.s32 %s27, %s28
        %s220 = smul.u32 4, %s219
        %p221 = scmp.lt.s32.totalorder %s26, 1
        %s222 = scalar_select %p221, %s26, 1
        %p223 = scmp.lt.s32.totalorder %s220, 3
        %s224 = scalar_select %p223, %s220, 3
        %s225 = smul.addr %s222, 4
        %s226 = sadd.s32 %s224, %s225
        %s227 = smul.addr %s226, 8
        %s228 = scalar_lea.vmem %s1, %s227
        %p229 = pneg %p123
        %p230 = pneg %p120
        %p231 = scmp.lt.s32.totalorder %s26, 1
        %s232 = scalar_select %p231, %s26, 1
        %p233 = scmp.lt.s32.totalorder %s27, 0
        %s234 = scalar_select %p233, %s27, 0
        %s235 = sadd.s32 %s234, %s232
        %s236 = scalar_lea.vmem %s2, %s235
        %p237 = pneg %p151
        %p238 = pneg %p148
        %s239 = sand.u32 %s138, 1
        %s240 = scalar_lea.sflag [#allocation7], %s239
        %s241 = sand.u32 %s138, 1
        %s242 = scalar_lea.vmem [#allocation8], %s241
        %s243 = sadd.s32 %s27, %s28
        %s244 = smul.u32 4, %s243
        %s245 = sadd.s32 %s27, %s28
        %s246 = smul.u32 4, %s245
        %p247 = scmp.lt.s32.totalorder %s26, 1
        %s248 = scalar_select %p247, %s26, 1
        %p249 = scmp.lt.s32.totalorder %s246, 3
        %s250 = scalar_select %p249, %s246, 3
        %s251 = smul.addr %s248, 4
        %s252 = sadd.s32 %s250, %s251
        %s253 = smul.addr %s252, 8
        %s254 = scalar_lea.vmem %s1, %s253
        %s255 = sadd.s32 %s27, %s28
        %s256 = smul.u32 4, %s255
        %p257 = scmp.lt.s32.totalorder %s26, 1
        %s258 = scalar_select %p257, %s26, 1
        %p259 = scmp.lt.s32.totalorder %s27, 0
        %s260 = scalar_select %p259, %s27, 0
        %s261 = sadd.s32 %s260, %s258
        %s262 = scalar_lea.vmem %s2, %s261
        %v263 = vld [vmem:[%s205] sm:$0xff]
        %v264 = vld [vmem:[%s205 + $0x8] sm:$0xff]
        %v265 = vld [vmem:[%s205 + $0x10] sm:$0xff]
        %v266 = vld [vmem:[%s205 + $0x18] sm:$0xff]
        %vm267 = vcmask 261120
        %v268 = vsel %vm267, %v263, inf
        %269 = vmin.xlane.f32.xlu0 %v268
        %v270 = vpop.xlane.xlu0 %269
        %v271 = vsel %vm267, %v264, inf
        %272 = vmin.xlane.f32.xlu0 %v271
        %v273 = vpop.xlane.xlu0 %272
        %v274 = vsel %vm267, %v265, inf
        %275 = vmin.xlane.f32.xlu0 %v274
        %v276 = vpop.xlane.xlu0 %275
        %v277 = vsel %vm267, %v266, inf
        %278 = vmin.xlane.f32.xlu0 %v277
        %v279 = vpop.xlane.xlu0 %278
        %v280 = vsel %vm267, %v263, -inf
        %281 = vmax.xlane.f32.xlu0 %v280
        %v282 = vpop.xlane.xlu0 %281
        %v283 = vsel %vm267, %v264, -inf
        %284 = vmax.xlane.f32.xlu0 %v283
        %v285 = vpop.xlane.xlu0 %284
        %v286 = vsel %vm267, %v265, -inf
        %287 = vmax.xlane.f32.xlu0 %v286
        %v288 = vpop.xlane.xlu0 %287
        %v289 = vsel %vm267, %v266, -inf
        %290 = vmax.xlane.f32.xlu0 %v289
        %v291 = vpop.xlane.xlu0 %290
        %v292 = vsub.f32 %v282, %v270
        %v293 = vsub.f32 %v285, %v273
        %v294 = vsub.f32 %v288, %v276
        %v295 = vsub.f32 %v291, %v279
        %v296 = vlog2.pop %v292
        %v297 = vmul.f32 %v296, 0.6931472
        %v298 = vlog2.pop %v293
        %v299 = vmul.f32 %v298, 0.6931472
        %v300 = vlog2.pop %v294
        %v301 = vmul.f32 %v300, 0.6931472
        %v302 = vlog2.pop %v295
        %v303 = vmul.f32 %v302, 0.6931472
        %v304 = vlaneseq
        %v305 = vand.u32 %v304, 127
        %vm306 = vcmp.ge.f32.partialorder %v263, %v282
        %vm307 = vcmp.ge.f32.partialorder %v264, %v285
        %vm308 = vcmp.ge.f32.partialorder %v265, %v288
        %vm309 = vcmp.ge.f32.partialorder %v266, %v291
        %v310 = vsel %vm306, %v305, 32
        %v311 = vsel %vm307, %v305, 32
        %v312 = vsel %vm308, %v305, 32
        %v313 = vsel %vm309, %v305, 32
        %v314 = vsel %vm267, %v310, 2147483647
        %v315 = vand.u32 %v314, 65535
        %v316 = vshra.s32 %v314, 16
        %v317 = vcvt.s32.f32 %v315
        %v318 = vcvt.s32.f32 %v316
        %319 = vmin.xlane.f32.xlu0 %v318
        %v320 = vpop.xlane.xlu0 %319
        %vm321 = vcmp.eq.f32.partialorder %v318, %v320
        %v322 = vsel %vm321, %v317, inf
        %323 = vmin.xlane.f32.xlu0 %v322
        %v324 = vpop.xlane.xlu0 %323
        %v325 = vcvt.f32.s32 %v324
        %v326 = vcvt.f32.s32 %v320
        %v327 = vshll.u32 %v326, 16
        %v328 = vadd.s32 %v327, %v325
        %v329 = vsel %vm267, %v311, 2147483647
        %v330 = vand.u32 %v329, 65535
        %v331 = vshra.s32 %v329, 16
        %v332 = vcvt.s32.f32 %v330
        %v333 = vcvt.s32.f32 %v331
        %334 = vmin.xlane.f32.xlu0 %v333
        %v335 = vpop.xlane.xlu0 %334
        %vm336 = vcmp.eq.f32.partialorder %v333, %v335
        %v337 = vsel %vm336, %v332, inf
        %338 = vmin.xlane.f32.xlu0 %v337
        %v339 = vpop.xlane.xlu0 %338
        %v340 = vcvt.f32.s32 %v339
        %v341 = vcvt.f32.s32 %v335
        %v342 = vshll.u32 %v341, 16
        %v343 = vadd.s32 %v342, %v340
        %v344 = vsel %vm267, %v312, 2147483647
        %v345 = vand.u32 %v344, 65535
        %v346 = vshra.s32 %v344, 16
        %v347 = vcvt.s32.f32 %v345
        %v348 = vcvt.s32.f32 %v346
        %349 = vmin.xlane.f32.xlu0 %v348
        %v350 = vpop.xlane.xlu0 %349
        %vm351 = vcmp.eq.f32.partialorder %v348, %v350
        %v352 = vsel %vm351, %v347, inf
        %353 = vmin.xlane.f32.xlu0 %v352
        %v354 = vpop.xlane.xlu0 %353
        %v355 = vcvt.f32.s32 %v354
        %v356 = vcvt.f32.s32 %v350
        %v357 = vshll.u32 %v356, 16
        %v358 = vadd.s32 %v357, %v355
        %v359 = vsel %vm267, %v313, 2147483647
        %v360 = vand.u32 %v359, 65535
        %v361 = vshra.s32 %v359, 16
        %v362 = vcvt.s32.f32 %v360
        %v363 = vcvt.s32.f32 %v361
        %364 = vmin.xlane.f32.xlu0 %v363
        %v365 = vpop.xlane.xlu0 %364
        %vm366 = vcmp.eq.f32.partialorder %v363, %v365
        %v367 = vsel %vm366, %v362, inf
        %368 = vmin.xlane.f32.xlu0 %v367
        %v369 = vpop.xlane.xlu0 %368
        %v370 = vcvt.f32.s32 %v369
        %v371 = vcvt.f32.s32 %v365
        %v372 = vshll.u32 %v371, 16
        %v373 = vadd.s32 %v372, %v370
        %vm374 = vcmask 7168
        %375 = vst.msk [vmem:[%s254] sm:$0xff] %vm374, %v328
        %376 = vst.msk [vmem:[%s254 + $0x8] sm:$0xff] %vm374, %v343
        %377 = vst.msk [vmem:[%s254 + $0x10] sm:$0xff] %vm374, %v358
        %378 = vst.msk [vmem:[%s254 + $0x18] sm:$0xff] %vm374, %v373
        %s379 = sadd.s32 %s27, %s28
        %v380 = vlaneseq
        %v381 = vshrl.u32 %v380, 7
        %v382 = vadd.s32 %v381, 8
        %v383 = vadd.s32 %v381, 16
        %v384 = vadd.s32 %v381, 24
        %s385 = smul.u32 %s379, 32
        %v386 = vstv %s385
        %v387 = vadd.s32 %v381, %v386
        %v388 = vadd.s32 %v382, %v386
        %v389 = vadd.s32 %v383, %v386
        %v390 = vadd.s32 %v384, %v386
        %vm391 = vcmp.lt.s32.totalorder %v387, 24
        %vm392 = vcmp.lt.s32.totalorder %v388, 24
        %vm393 = vcmp.lt.s32.totalorder %v389, 24
        %vm394 = vcmp.lt.s32.totalorder %v390, 24
        %v395 = vadd.f32 %v292, 0.001
        %v396 = vadd.f32 %v293, 0.001
        %v397 = vadd.f32 %v294, 0.001
        %v398 = vadd.f32 %v295, 0.001
        %v399 = vlog2.pop %v395
        %v400 = vmul.f32 %v399, 0.6931472
        %v401 = vlog2.pop %v396
        %v402 = vmul.f32 %v401, 0.6931472
        %v403 = vlog2.pop %v397
        %v404 = vmul.f32 %v403, 0.6931472
        %v405 = vlog2.pop %v398
        %v406 = vmul.f32 %v405, 0.6931472
        %v407 = vsub.f32 %v297, %v400
        %v408 = vsub.f32 %v299, %v402
        %v409 = vsub.f32 %v301, %v404
        %v410 = vsub.f32 %v303, %v406
        %v411 = vsel %vm391, %v407, 0.0
        %v412 = vsel %vm392, %v408, 0.0
        %v413 = vsel %vm393, %v409, 0.0
        %v414 = vsel %vm394, %v410, 0.0
        %v415 = vadd.f32 %v411, %v412
        %v416 = vadd.f32 %v415, %v413
        %v417 = vadd.f32 %v416, %v414
        %v418 = vrot.slane %v417, 4
        %v419 = vadd.f32 %v417, %v418
        %v420 = vrot.slane %v419, 2
        %v421 = vadd.f32 %v419, %v420
        %v422 = vrot.slane %v421, 1
        %v423 = vadd.f32 %v421, %v422
        %p424 = scmp.eq.s32.totalorder %s28, 0
        // Predicated region
        $region29: #{tpu_custom_call.1} parent=23 // pred_check
          %p425 = pneg %p424
        $region30: #{tpu_custom_call.1} parent=23 // pred_check_branch
          %427 = sbr.rel (%p425) target = $region32
        $region31: #{tpu_custom_call.1} parent=23 // pred_region
          %vm428 = vcmask 0
          %429 = vst.msk [vmem:[#allocation3] sm:$0x1] %vm428, 0.0
          %vm430 = vcmp.eq.s32.totalorder %v305, 0
          %v431 = vsel %vm430, 0.0, 1e+30
          %vm432 = vcmask 24576
          %433 = vst.msk [vmem:[#allocation4] sm:$0x1] %vm432, %v431
        $region32: #{tpu_custom_call.1} parent=23 // pred_fallthru
          _
        %v434 = vld [vmem:[#allocation3] sm:$0x1]
        %v435 = vadd.f32 %v434, %v423
        %vm436 = vcmask 0
        %437 = vst.msk [vmem:[#allocation3] sm:$0x1] %vm436, %v435
        %v438 = vsub.f32 %v263, %v270
        %v439 = vsub.f32 %v264, %v273
        %v440 = vsub.f32 %v265, %v276
        %v441 = vsub.f32 %v266, %v279
        %v442 = vadd.f32 %v438, 0.001
        %v443 = vadd.f32 %v439, 0.001
        %v444 = vadd.f32 %v440, 0.001
        %v445 = vadd.f32 %v441, 0.001
        %v446 = vlog2.pop %v442
        %v447 = vmul.f32 %v446, 0.6931472
        %v448 = vlog2.pop %v443
        %v449 = vmul.f32 %v448, 0.6931472
        %v450 = vlog2.pop %v444
        %v451 = vmul.f32 %v450, 0.6931472
        %v452 = vlog2.pop %v445
        %v453 = vmul.f32 %v452, 0.6931472
        %v454 = vsub.f32 %v297, %v447
        %v455 = vsub.f32 %v299, %v449
        %v456 = vsub.f32 %v301, %v451
        %v457 = vsub.f32 %v303, %v453
        %vm458 = vcmp.eq.s32.totalorder %v305, 0
        %v459 = vsel %vm458, 0.0, 1e+30
        %v460 = vsel %vm391, 1, 0
        %v461 = vsel %vm392, 1, 0
        %v462 = vsel %vm393, 1, 0
        %v463 = vsel %vm394, 1, 0
        %vm464 = vcmp.eq.s32.totalorder %v460, 1
        %vm465 = vcmp.eq.s32.totalorder %v461, 1
        %vm466 = vcmp.eq.s32.totalorder %v462, 1
        %vm467 = vcmp.eq.s32.totalorder %v463, 1
        %v468 = vsel %vm464, %v454, %v459
        %v469 = vsel %vm465, %v455, %v459
        %v470 = vsel %vm466, %v456, %v459
        %v471 = vsel %vm467, %v457, %v459
        %v472 = vsel %vm267, %v468, inf
        %473 = vmin.xlane.f32.xlu0 %v472
        %v474 = vpop.xlane.xlu0 %473
        %v475 = vsel %vm267, %v469, inf
        %476 = vmin.xlane.f32.xlu0 %v475
        %v477 = vpop.xlane.xlu0 %476
        %v478 = vsel %vm267, %v470, inf
        %479 = vmin.xlane.f32.xlu0 %v478
        %v480 = vpop.xlane.xlu0 %479
        %v481 = vsel %vm267, %v471, inf
        %482 = vmin.xlane.f32.xlu0 %v481
        %v483 = vpop.xlane.xlu0 %482
        %v484 = vsel %vm458, %v474, 0.0
        %v485 = vsel %vm458, %v477, 0.0
        %v486 = vsel %vm458, %v480, 0.0
        %v487 = vsel %vm458, %v483, 0.0
        %vm488 = vcmp.le.f32.partialorder %v468, %v474
        %vm489 = vcmp.le.f32.partialorder %v469, %v477
        %vm490 = vcmp.le.f32.partialorder %v470, %v480
        %vm491 = vcmp.le.f32.partialorder %v471, %v483
        %v492 = vsel %vm488, %v305, 32
        %v493 = vsel %vm489, %v305, 32
        %v494 = vsel %vm490, %v305, 32
        %v495 = vsel %vm491, %v305, 32
        %v496 = vsel %vm267, %v492, 2147483647
        %v497 = vand.u32 %v496, 65535
        %v498 = vshra.s32 %v496, 16
        %v499 = vcvt.s32.f32 %v497
        %v500 = vcvt.s32.f32 %v498
        %501 = vmin.xlane.f32.xlu0 %v500
        %v502 = vpop.xlane.xlu0 %501
        %vm503 = vcmp.eq.f32.partialorder %v500, %v502
        %v504 = vsel %vm503, %v499, inf
        %505 = vmin.xlane.f32.xlu0 %v504
        %v506 = vpop.xlane.xlu0 %505
        %v507 = vcvt.f32.s32 %v506
        %v508 = vcvt.f32.s32 %v502
        %v509 = vshll.u32 %v508, 16
        %v510 = vadd.s32 %v509, %v507
        %v511 = vsel %vm267, %v493, 2147483647
        %v512 = vand.u32 %v511, 65535
        %v513 = vshra.s32 %v511, 16
        %v514 = vcvt.s32.f32 %v512
        %v515 = vcvt.s32.f32 %v513
        %516 = vmin.xlane.f32.xlu0 %v515
        %v517 = vpop.xlane.xlu0 %516
        %vm518 = vcmp.eq.f32.partialorder %v515, %v517
        %v519 = vsel %vm518, %v514, inf
        %520 = vmin.xlane.f32.xlu0 %v519
        %v521 = vpop.xlane.xlu0 %520
        %v522 = vcvt.f32.s32 %v521
        %v523 = vcvt.f32.s32 %v517
        %v524 = vshll.u32 %v523, 16
        %v525 = vadd.s32 %v524, %v522
        %v526 = vsel %vm267, %v494, 2147483647
        %v527 = vand.u32 %v526, 65535
        %v528 = vshra.s32 %v526, 16
        %v529 = vcvt.s32.f32 %v527
        %v530 = vcvt.s32.f32 %v528
        %531 = vmin.xlane.f32.xlu0 %v530
        %v532 = vpop.xlane.xlu0 %531
        %vm533 = vcmp.eq.f32.partialorder %v530, %v532
        %v534 = vsel %vm533, %v529, inf
        %535 = vmin.xlane.f32.xlu0 %v534
        %v536 = vpop.xlane.xlu0 %535
        %v537 = vcvt.f32.s32 %v536
        %v538 = vcvt.f32.s32 %v532
        %v539 = vshll.u32 %v538, 16
        %v540 = vadd.s32 %v539, %v537
        %v541 = vsel %vm267, %v495, 2147483647
        %v542 = vand.u32 %v541, 65535
        %v543 = vshra.s32 %v541, 16
        %v544 = vcvt.s32.f32 %v542
        %v545 = vcvt.s32.f32 %v543
        %546 = vmin.xlane.f32.xlu0 %v545
        %v547 = vpop.xlane.xlu0 %546
        %vm548 = vcmp.eq.f32.partialorder %v545, %v547
        %v549 = vsel %vm548, %v544, inf
        %550 = vmin.xlane.f32.xlu0 %v549
        %v551 = vpop.xlane.xlu0 %550
        %v552 = vcvt.f32.s32 %v551
        %v553 = vcvt.f32.s32 %v547
        %v554 = vshll.u32 %v553, 16
        %v555 = vadd.s32 %v554, %v552
        %vm556 = vcmp.eq.s32.totalorder %v305, %v510
        %vm557 = vcmp.eq.s32.totalorder %v305, %v525
        %vm558 = vcmp.eq.s32.totalorder %v305, %v540
        %vm559 = vcmp.eq.s32.totalorder %v305, %v555
        %v560 = vsel %vm556, 4e+30, %v468
        %v561 = vsel %vm557, 4e+30, %v469
        %v562 = vsel %vm558, 4e+30, %v470
        %v563 = vsel %vm559, 4e+30, %v471
        %v564 = vsel %vm267, %v560, inf
        %565 = vmin.xlane.f32.xlu0 %v564
        %v566 = vpop.xlane.xlu0 %565
        %v567 = vsel %vm267, %v561, inf
        %568 = vmin.xlane.f32.xlu0 %v567
        %v569 = vpop.xlane.xlu0 %568
        %v570 = vsel %vm267, %v562, inf
        %571 = vmin.xlane.f32.xlu0 %v570
        %v572 = vpop.xlane.xlu0 %571
        %v573 = vsel %vm267, %v563, inf
        %574 = vmin.xlane.f32.xlu0 %v573
        %v575 = vpop.xlane.xlu0 %574
        %vm576 = vcmp.eq.s32.totalorder %v305, 1
        %v577 = vsel %vm576, %v566, %v484
        %v578 = vsel %vm576, %v569, %v485
        %v579 = vsel %vm576, %v572, %v486
        %v580 = vsel %vm576, %v575, %v487
        %vm581 = vcmp.le.f32.partialorder %v560, %v566
        %vm582 = vcmp.le.f32.partialorder %v561, %v569
        %vm583 = vcmp.le.f32.partialorder %v562, %v572
        %vm584 = vcmp.le.f32.partialorder %v563, %v575
        %v585 = vsel %vm581, %v305, 32
        %v586 = vsel %vm582, %v305, 32
        %v587 = vsel %vm583, %v305, 32
        %v588 = vsel %vm584, %v305, 32
        %v589 = vsel %vm267, %v585, 2147483647
        %v590 = vand.u32 %v589, 65535
        %v591 = vshra.s32 %v589, 16
        %v592 = vcvt.s32.f32 %v590
        %v593 = vcvt.s32.f32 %v591
        %594 = vmin.xlane.f32.xlu0 %v593
        %v595 = vpop.xlane.xlu0 %594
        %vm596 = vcmp.eq.f32.partialorder %v593, %v595
        %v597 = vsel %vm596, %v592, inf
        %598 = vmin.xlane.f32.xlu0 %v597
        %v599 = vpop.xlane.xlu0 %598
        %v600 = vcvt.f32.s32 %v599
        %v601 = vcvt.f32.s32 %v595
        %v602 = vshll.u32 %v601, 16
        %v603 = vadd.s32 %v602, %v600
        %v604 = vsel %vm267, %v586, 2147483647
        %v605 = vand.u32 %v604, 65535
        %v606 = vshra.s32 %v604, 16
        %v607 = vcvt.s32.f32 %v605
        %v608 = vcvt.s32.f32 %v606
        %609 = vmin.xlane.f32.xlu0 %v608
        %v610 = vpop.xlane.xlu0 %609
        %vm611 = vcmp.eq.f32.partialorder %v608, %v610
        %v612 = vsel %vm611, %v607, inf
        %613 = vmin.xlane.f32.xlu0 %v612
        %v614 = vpop.xlane.xlu0 %613
        %v615 = vcvt.f32.s32 %v614
        %v616 = vcvt.f32.s32 %v610
        %v617 = vshll.u32 %v616, 16
        %v618 = vadd.s32 %v617, %v615
        %v619 = vsel %vm267, %v587, 2147483647
        %v620 = vand.u32 %v619, 65535
        %v621 = vshra.s32 %v619, 16
        %v622 = vcvt.s32.f32 %v620
        %v623 = vcvt.s32.f32 %v621
        %624 = vmin.xlane.f32.xlu0 %v623
        %v625 = vpop.xlane.xlu0 %624
        %vm626 = vcmp.eq.f32.partialorder %v623, %v625
        %v627 = vsel %vm626, %v622, inf
        %628 = vmin.xlane.f32.xlu0 %v627
        %v629 = vpop.xlane.xlu0 %628
        %v630 = vcvt.f32.s32 %v629
        %v631 = vcvt.f32.s32 %v625
        %v632 = vshll.u32 %v631, 16
        %v633 = vadd.s32 %v632, %v630
        %v634 = vsel %vm267, %v588, 2147483647
        %v635 = vand.u32 %v634, 65535
        %v636 = vshra.s32 %v634, 16
        %v637 = vcvt.s32.f32 %v635
        %v638 = vcvt.s32.f32 %v636
        %639 = vmin.xlane.f32.xlu0 %v638
        %v640 = vpop.xlane.xlu0 %639
        %vm641 = vcmp.eq.f32.partialorder %v638, %v640
        %v642 = vsel %vm641, %v637, inf
        %643 = vmin.xlane.f32.xlu0 %v642
        %v644 = vpop.xlane.xlu0 %643
        %v645 = vcvt.f32.s32 %v644
        %v646 = vcvt.f32.s32 %v640
        %v647 = vshll.u32 %v646, 16
        %v648 = vadd.s32 %v647, %v645
        %vm649 = vcmp.eq.s32.totalorder %v305, %v603
        %vm650 = vcmp.eq.s32.totalorder %v305, %v618
        %vm651 = vcmp.eq.s32.totalorder %v305, %v633
        %vm652 = vcmp.eq.s32.totalorder %v305, %v648
        %v653 = vsel %vm649, 4e+30, %v560
        %v654 = vsel %vm650, 4e+30, %v561
        %v655 = vsel %vm651, 4e+30, %v562
        %v656 = vsel %vm652, 4e+30, %v563
        %v657 = vsel %vm267, %v653, inf
        %658 = vmin.xlane.f32.xlu0 %v657
        %v659 = vpop.xlane.xlu0 %658
        %v660 = vsel %vm267, %v654, inf
        %661 = vmin.xlane.f32.xlu0 %v660
        %v662 = vpop.xlane.xlu0 %661
        %v663 = vsel %vm267, %v655, inf
        %664 = vmin.xlane.f32.xlu0 %v663
        %v665 = vpop.xlane.xlu0 %664
        %v666 = vsel %vm267, %v656, inf
        %667 = vmin.xlane.f32.xlu0 %v666
        %v668 = vpop.xlane.xlu0 %667
        %vm669 = vcmp.eq.s32.totalorder %v305, 2
        %v670 = vsel %vm669, %v659, %v577
        %v671 = vsel %vm669, %v662, %v578
        %v672 = vsel %vm669, %v665, %v579
        %v673 = vsel %vm669, %v668, %v580
        %vm674 = vcmp.le.f32.partialorder %v653, %v659
        %vm675 = vcmp.le.f32.partialorder %v654, %v662
        %vm676 = vcmp.le.f32.partialorder %v655, %v665
        %vm677 = vcmp.le.f32.partialorder %v656, %v668
        %v678 = vsel %vm674, %v305, 32
        %v679 = vsel %vm675, %v305, 32
        %v680 = vsel %vm676, %v305, 32
        %v681 = vsel %vm677, %v305, 32
        %v682 = vsel %vm267, %v678, 2147483647
        %v683 = vand.u32 %v682, 65535
        %v684 = vshra.s32 %v682, 16
        %v685 = vcvt.s32.f32 %v683
        %v686 = vcvt.s32.f32 %v684
        %687 = vmin.xlane.f32.xlu0 %v686
        %v688 = vpop.xlane.xlu0 %687
        %vm689 = vcmp.eq.f32.partialorder %v686, %v688
        %v690 = vsel %vm689, %v685, inf
        %691 = vmin.xlane.f32.xlu0 %v690
        %v692 = vpop.xlane.xlu0 %691
        %v693 = vcvt.f32.s32 %v692
        %v694 = vcvt.f32.s32 %v688
        %v695 = vshll.u32 %v694, 16
        %v696 = vadd.s32 %v695, %v693
        %v697 = vsel %vm267, %v679, 2147483647
        %v698 = vand.u32 %v697, 65535
        %v699 = vshra.s32 %v697, 16
        %v700 = vcvt.s32.f32 %v698
        %v701 = vcvt.s32.f32 %v699
        %702 = vmin.xlane.f32.xlu0 %v701
        %v703 = vpop.xlane.xlu0 %702
        %vm704 = vcmp.eq.f32.partialorder %v701, %v703
        %v705 = vsel %vm704, %v700, inf
        %706 = vmin.xlane.f32.xlu0 %v705
        %v707 = vpop.xlane.xlu0 %706
        %v708 = vcvt.f32.s32 %v707
        %v709 = vcvt.f32.s32 %v703
        %v710 = vshll.u32 %v709, 16
        %v711 = vadd.s32 %v710, %v708
        %v712 = vsel %vm267, %v680, 2147483647
        %v713 = vand.u32 %v712, 65535
        %v714 = vshra.s32 %v712, 16
        %v715 = vcvt.s32.f32 %v713
        %v716 = vcvt.s32.f32 %v714
        %717 = vmin.xlane.f32.xlu0 %v716
        %v718 = vpop.xlane.xlu0 %717
        %vm719 = vcmp.eq.f32.partialorder %v716, %v718
        %v720 = vsel %vm719, %v715, inf
        %721 = vmin.xlane.f32.xlu0 %v720
        %v722 = vpop.xlane.xlu0 %721
        %v723 = vcvt.f32.s32 %v722
        %v724 = vcvt.f32.s32 %v718
        %v725 = vshll.u32 %v724, 16
        %v726 = vadd.s32 %v725, %v723
        %v727 = vsel %vm267, %v681, 2147483647
        %v728 = vand.u32 %v727, 65535
        %v729 = vshra.s32 %v727, 16
        %v730 = vcvt.s32.f32 %v728
        %v731 = vcvt.s32.f32 %v729
        %732 = vmin.xlane.f32.xlu0 %v731
        %v733 = vpop.xlane.xlu0 %732
        %vm734 = vcmp.eq.f32.partialorder %v731, %v733
        %v735 = vsel %vm734, %v730, inf
        %736 = vmin.xlane.f32.xlu0 %v735
        %v737 = vpop.xlane.xlu0 %736
        %v738 = vcvt.f32.s32 %v737
        %v739 = vcvt.f32.s32 %v733
        %v740 = vshll.u32 %v739, 16
        %v741 = vadd.s32 %v740, %v738
        %vm742 = vcmp.eq.s32.totalorder %v305, %v696
        %vm743 = vcmp.eq.s32.totalorder %v305, %v711
        %vm744 = vcmp.eq.s32.totalorder %v305, %v726
        %vm745 = vcmp.eq.s32.totalorder %v305, %v741
        %v746 = vsel %vm742, 4e+30, %v653
        %v747 = vsel %vm743, 4e+30, %v654
        %v748 = vsel %vm744, 4e+30, %v655
        %v749 = vsel %vm745, 4e+30, %v656
        %v750 = vsel %vm267, %v746, inf
        %751 = vmin.xlane.f32.xlu0 %v750
        %v752 = vpop.xlane.xlu0 %751
        %v753 = vsel %vm267, %v747, inf
        %754 = vmin.xlane.f32.xlu0 %v753
        %v755 = vpop.xlane.xlu0 %754
        %v756 = vsel %vm267, %v748, inf
        %757 = vmin.xlane.f32.xlu0 %v756
        %v758 = vpop.xlane.xlu0 %757
        %v759 = vsel %vm267, %v749, inf
        %760 = vmin.xlane.f32.xlu0 %v759
        %v761 = vpop.xlane.xlu0 %760
        %vm762 = vcmp.eq.s32.totalorder %v305, 3
        %v763 = vsel %vm762, %v752, %v670
        %v764 = vsel %vm762, %v755, %v671
        %v765 = vsel %vm762, %v758, %v672
        %v766 = vsel %vm762, %v761, %v673
        %vm767 = vcmask 31744
        %768 = vst.msk [vmem:[#allocation2] sm:$0xff] %vm767, %v763
        %769 = vst.msk [vmem:[#allocation2 + $0x8] sm:$0xff] %vm767, %v764
        %770 = vst.msk [vmem:[#allocation2 + $0x10] sm:$0xff] %vm767, %v765
        %771 = vst.msk [vmem:[#allocation2 + $0x18] sm:$0xff] %vm767, %v766
        %v772 = vld [vmem:[#allocation2] sm:$0xff]
        %v773 = vld [vmem:[#allocation2 + $0x8] sm:$0xff]
        %v774 = vld [vmem:[#allocation2 + $0x10] sm:$0xff]
        %v775 = vld [vmem:[#allocation2 + $0x18] sm:$0xff]
        %v776 = vsel %vm458, %v772, 4e+30
        %v777 = vsel %vm458, %v773, 4e+30
        %v778 = vsel %vm767, %v776, inf
        %779 = vmin.xlane.f32.xlu0 %v778
        %v780 = vpop.xlane.xlu0 %779
        %v781 = vsel %vm767, %v777, inf
        %782 = vmin.xlane.f32.xlu0 %v781
        %v783 = vpop.xlane.xlu0 %782
        %v784 = vsel %vm458, %v774, 4e+30
        %v785 = vsel %vm458, %v775, 4e+30
        %v786 = vsel %vm767, %v784, inf
        %787 = vmin.xlane.f32.xlu0 %v786
        %v788 = vpop.xlane.xlu0 %787
        %v789 = vsel %vm767, %v785, inf
        %790 = vmin.xlane.f32.xlu0 %v789
        %v791 = vpop.xlane.xlu0 %790
        %vm792 = vcmp.ge.s32.totalorder %v305, 0
        %vm793 = vcmp.lt.s32.totalorder %v305, 4
        %vm794 = vmand %vm792, %vm793
        %vm795 = vcmp.eq.s32.totalorder %v305, 4
        %vm796 = vmor %vm458, %vm795
        %vm797 = vcmp.eq.s32.totalorder %v305, 8
        %vm798 = vmor %vm796, %vm797
        %vm799 = vcmp.eq.s32.totalorder %v305, 12
        %vm800 = vmor %vm798, %vm799
        %v801 = vadd.f32 %v780, 0.0
        %v802 = vadd.f32 %v783, 0.0
        %v803 = vsel %vm794, %v801, 0.0
        %v804 = vsel %vm794, %v802, 0.0
        %v805 = vadd.f32 %v803, %v788
        %v806 = vadd.f32 %v804, %v791
        %v807 = vsel %vm800, %v805, %v803
        %v808 = vsel %vm800, %v806, %v804
        %v809 = vsel %vm576, %v772, 4e+30
        %v810 = vsel %vm576, %v773, 4e+30
        %v811 = vsel %vm767, %v809, inf
        %812 = vmin.xlane.f32.xlu0 %v811
        %v813 = vpop.xlane.xlu0 %812
        %v814 = vsel %vm767, %v810, inf
        %815 = vmin.xlane.f32.xlu0 %v814
        %v816 = vpop.xlane.xlu0 %815
        %v817 = vsel %vm576, %v774, 4e+30
        %v818 = vsel %vm576, %v775, 4e+30
        %v819 = vsel %vm767, %v817, inf
        %820 = vmin.xlane.f32.xlu0 %v819
        %v821 = vpop.xlane.xlu0 %820
        %v822 = vsel %vm767, %v818, inf
        %823 = vmin.xlane.f32.xlu0 %v822
        %v824 = vpop.xlane.xlu0 %823
        %vm825 = vcmp.ge.s32.totalorder %v305, 4
        %vm826 = vcmp.lt.s32.totalorder %v305, 8
        %vm827 = vmand %vm825, %vm826
        %vm828 = vcmp.eq.s32.totalorder %v305, 5
        %vm829 = vmor %vm576, %vm828
        %vm830 = vcmp.eq.s32.totalorder %v305, 9
        %vm831 = vmor %vm829, %vm830
        %vm832 = vcmp.eq.s32.totalorder %v305, 13
        %vm833 = vmor %vm831, %vm832
        %v834 = vadd.f32 %v807, %v813
        %v835 = vadd.f32 %v808, %v816
        %v836 = vsel %vm827, %v834, %v807
        %v837 = vsel %vm827, %v835, %v808
        %v838 = vadd.f32 %v836, %v821
        %v839 = vadd.f32 %v837, %v824
        %v840 = vsel %vm833, %v838, %v836
        %v841 = vsel %vm833, %v839, %v837
        %v842 = vsel %vm669, %v772, 4e+30
        %v843 = vsel %vm669, %v773, 4e+30
        %v844 = vsel %vm767, %v842, inf
        %845 = vmin.xlane.f32.xlu0 %v844
        %v846 = vpop.xlane.xlu0 %845
        %v847 = vsel %vm767, %v843, inf
        %848 = vmin.xlane.f32.xlu0 %v847
        %v849 = vpop.xlane.xlu0 %848
        %v850 = vsel %vm669, %v774, 4e+30
        %v851 = vsel %vm669, %v775, 4e+30
        %v852 = vsel %vm767, %v850, inf
        %853 = vmin.xlane.f32.xlu0 %v852
        %v854 = vpop.xlane.xlu0 %853
        %v855 = vsel %vm767, %v851, inf
        %856 = vmin.xlane.f32.xlu0 %v855
        %v857 = vpop.xlane.xlu0 %856
        %vm858 = vcmp.ge.s32.totalorder %v305, 8
        %vm859 = vcmp.lt.s32.totalorder %v305, 12
        %vm860 = vmand %vm858, %vm859
        %vm861 = vcmp.eq.s32.totalorder %v305, 6
        %vm862 = vmor %vm669, %vm861
        %vm863 = vcmp.eq.s32.totalorder %v305, 10
        %vm864 = vmor %vm862, %vm863
        %vm865 = vcmp.eq.s32.totalorder %v305, 14
        %vm866 = vmor %vm864, %vm865
        %v867 = vadd.f32 %v840, %v846
        %v868 = vadd.f32 %v841, %v849
        %v869 = vsel %vm860, %v867, %v840
        %v870 = vsel %vm860, %v868, %v841
        %v871 = vadd.f32 %v869, %v854
        %v872 = vadd.f32 %v870, %v857
        %v873 = vsel %vm866, %v871, %v869
        %v874 = vsel %vm866, %v872, %v870
        %v875 = vsel %vm762, %v772, 4e+30
        %v876 = vsel %vm762, %v773, 4e+30
        %v877 = vsel %vm767, %v875, inf
        %878 = vmin.xlane.f32.xlu0 %v877
        %v879 = vpop.xlane.xlu0 %878
        %v880 = vsel %vm767, %v876, inf
        %881 = vmin.xlane.f32.xlu0 %v880
        %v882 = vpop.xlane.xlu0 %881
        %v883 = vsel %vm762, %v774, 4e+30
        %v884 = vsel %vm762, %v775, 4e+30
        %v885 = vsel %vm767, %v883, inf
        %886 = vmin.xlane.f32.xlu0 %v885
        %v887 = vpop.xlane.xlu0 %886
        %v888 = vsel %vm767, %v884, inf
        %889 = vmin.xlane.f32.xlu0 %v888
        %v890 = vpop.xlane.xlu0 %889
        %vm891 = vcmp.ge.s32.totalorder %v305, 12
        %vm892 = vcmp.lt.s32.totalorder %v305, 16
        %vm893 = vmand %vm891, %vm892
        %vm894 = vcmp.eq.s32.totalorder %v305, 7
        %vm895 = vmor %vm762, %vm894
        %vm896 = vcmp.eq.s32.totalorder %v305, 11
        %vm897 = vmor %vm895, %vm896
        %vm898 = vcmp.eq.s32.totalorder %v305, 15
        %vm899 = vmor %vm897, %vm898
        %v900 = vadd.f32 %v873, %v879
        %v901 = vadd.f32 %v874, %v882
        %v902 = vsel %vm893, %v900, %v873
        %v903 = vsel %vm893, %v901, %v874
        %v904 = vadd.f32 %v902, %v887
        %v905 = vadd.f32 %v903, %v890
        %v906 = vsel %vm899, %v904, %v902
        %v907 = vsel %vm899, %v905, %v903
        %vm908 = vcmask 130048
        %v909 = vsel %vm908, %v906, inf
        %910 = vmin.xlane.f32.xlu0 %v909
        %v911 = vpop.xlane.xlu0 %910
        %v912 = vsel %vm908, %v907, inf
        %913 = vmin.xlane.f32.xlu0 %v912
        %v914 = vpop.xlane.xlu0 %913
        %v915 = vsel %vm458, %v911, 0.0
        %v916 = vsel %vm458, %v914, 0.0
        %vm917 = vcmp.le.f32.partialorder %v906, %v911
        %vm918 = vcmp.le.f32.partialorder %v907, %v914
        %v919 = vsel %vm917, %v305, 16
        %v920 = vsel %vm918, %v305, 16
        %v921 = vsel %vm908, %v919, 2147483647
        %v922 = vand.u32 %v921, 65535
        %v923 = vshra.s32 %v921, 16
        %v924 = vcvt.s32.f32 %v922
        %v925 = vcvt.s32.f32 %v923
        %926 = vmin.xlane.f32.xlu0 %v925
        %v927 = vpop.xlane.xlu0 %926
        %vm928 = vcmp.eq.f32.partialorder %v925, %v927
        %v929 = vsel %vm928, %v924, inf
        %930 = vmin.xlane.f32.xlu0 %v929
        %v931 = vpop.xlane.xlu0 %930
        %v932 = vcvt.f32.s32 %v931
        %v933 = vcvt.f32.s32 %v927
        %v934 = vshll.u32 %v933, 16
        %v935 = vadd.s32 %v934, %v932
        %v936 = vsel %vm908, %v920, 2147483647
        %v937 = vand.u32 %v936, 65535
        %v938 = vshra.s32 %v936, 16
        %v939 = vcvt.s32.f32 %v937
        %v940 = vcvt.s32.f32 %v938
        %941 = vmin.xlane.f32.xlu0 %v940
        %v942 = vpop.xlane.xlu0 %941
        %vm943 = vcmp.eq.f32.partialorder %v940, %v942
        %v944 = vsel %vm943, %v939, inf
        %945 = vmin.xlane.f32.xlu0 %v944
        %v946 = vpop.xlane.xlu0 %945
        %v947 = vcvt.f32.s32 %v946
        %v948 = vcvt.f32.s32 %v942
        %v949 = vshll.u32 %v948, 16
        %v950 = vadd.s32 %v949, %v947
        %vm951 = vcmp.eq.s32.totalorder %v305, %v935
        %vm952 = vcmp.eq.s32.totalorder %v305, %v950
        %v953 = vsel %vm951, 4e+30, %v906
        %v954 = vsel %vm952, 4e+30, %v907
        %v955 = vsel %vm908, %v953, inf
        %956 = vmin.xlane.f32.xlu0 %v955
        %v957 = vpop.xlane.xlu0 %956
        %v958 = vsel %vm908, %v954, inf
        %959 = vmin.xlane.f32.xlu0 %v958
        %v960 = vpop.xlane.xlu0 %959
        %v961 = vsel %vm576, %v957, %v915
        %v962 = vsel %vm576, %v960, %v916
        %vm963 = vcmp.le.f32.partialorder %v953, %v957
        %vm964 = vcmp.le.f32.partialorder %v954, %v960
        %v965 = vsel %vm963, %v305, 16
        %v966 = vsel %vm964, %v305, 16
        %v967 = vsel %vm908, %v965, 2147483647
        %v968 = vand.u32 %v967, 65535
        %v969 = vshra.s32 %v967, 16
        %v970 = vcvt.s32.f32 %v968
        %v971 = vcvt.s32.f32 %v969
        %972 = vmin.xlane.f32.xlu0 %v971
        %v973 = vpop.xlane.xlu0 %972
        %vm974 = vcmp.eq.f32.partialorder %v971, %v973
        %v975 = vsel %vm974, %v970, inf
        %976 = vmin.xlane.f32.xlu0 %v975
        %v977 = vpop.xlane.xlu0 %976
        %v978 = vcvt.f32.s32 %v977
        %v979 = vcvt.f32.s32 %v973
        %v980 = vshll.u32 %v979, 16
        %v981 = vadd.s32 %v980, %v978
        %v982 = vsel %vm908, %v966, 2147483647
        %v983 = vand.u32 %v982, 65535
        %v984 = vshra.s32 %v982, 16
        %v985 = vcvt.s32.f32 %v983
        %v986 = vcvt.s32.f32 %v984
        %987 = vmin.xlane.f32.xlu0 %v986
        %v988 = vpop.xlane.xlu0 %987
        %vm989 = vcmp.eq.f32.partialorder %v986, %v988
        %v990 = vsel %vm989, %v985, inf
        %991 = vmin.xlane.f32.xlu0 %v990
        %v992 = vpop.xlane.xlu0 %991
        %v993 = vcvt.f32.s32 %v992
        %v994 = vcvt.f32.s32 %v988
        %v995 = vshll.u32 %v994, 16
        %v996 = vadd.s32 %v995, %v993
        %vm997 = vcmp.eq.s32.totalorder %v305, %v981
        %vm998 = vcmp.eq.s32.totalorder %v305, %v996
        %v999 = vsel %vm997, 4e+30, %v953
        %v1000 = vsel %vm998, 4e+30, %v954
        %v1001 = vsel %vm908, %v999, inf
        %1002 = vmin.xlane.f32.xlu0 %v1001
        %v1003 = vpop.xlane.xlu0 %1002
        %v1004 = vsel %vm908, %v1000, inf
        %1005 = vmin.xlane.f32.xlu0 %v1004
        %v1006 = vpop.xlane.xlu0 %1005
        %v1007 = vsel %vm669, %v1003, %v961
        %v1008 = vsel %vm669, %v1006, %v962
        %vm1009 = vcmp.le.f32.partialorder %v999, %v1003
        %vm1010 = vcmp.le.f32.partialorder %v1000, %v1006
        %v1011 = vsel %vm1009, %v305, 16
        %v1012 = vsel %vm1010, %v305, 16
        %v1013 = vsel %vm908, %v1011, 2147483647
        %v1014 = vand.u32 %v1013, 65535
        %v1015 = vshra.s32 %v1013, 16
        %v1016 = vcvt.s32.f32 %v1014
        %v1017 = vcvt.s32.f32 %v1015
        %1018 = vmin.xlane.f32.xlu0 %v1017
        %v1019 = vpop.xlane.xlu0 %1018
        %vm1020 = vcmp.eq.f32.partialorder %v1017, %v1019
        %v1021 = vsel %vm1020, %v1016, inf
        %1022 = vmin.xlane.f32.xlu0 %v1021
        %v1023 = vpop.xlane.xlu0 %1022
        %v1024 = vcvt.f32.s32 %v1023
        %v1025 = vcvt.f32.s32 %v1019
        %v1026 = vshll.u32 %v1025, 16
        %v1027 = vadd.s32 %v1026, %v1024
        %v1028 = vsel %vm908, %v1012, 2147483647
        %v1029 = vand.u32 %v1028, 65535
        %v1030 = vshra.s32 %v1028, 16
        %v1031 = vcvt.s32.f32 %v1029
        %v1032 = vcvt.s32.f32 %v1030
        %1033 = vmin.xlane.f32.xlu0 %v1032
        %v1034 = vpop.xlane.xlu0 %1033
        %vm1035 = vcmp.eq.f32.partialorder %v1032, %v1034
        %v1036 = vsel %vm1035, %v1031, inf
        %1037 = vmin.xlane.f32.xlu0 %v1036
        %v1038 = vpop.xlane.xlu0 %1037
        %v1039 = vcvt.f32.s32 %v1038
        %v1040 = vcvt.f32.s32 %v1034
        %v1041 = vshll.u32 %v1040, 16
        %v1042 = vadd.s32 %v1041, %v1039
        %vm1043 = vcmp.eq.s32.totalorder %v305, %v1027
        %vm1044 = vcmp.eq.s32.totalorder %v305, %v1042
        %v1045 = vsel %vm1043, 4e+30, %v999
        %v1046 = vsel %vm1044, 4e+30, %v1000
        %v1047 = vsel %vm908, %v1045, inf
        %1048 = vmin.xlane.f32.xlu0 %v1047
        %v1049 = vpop.xlane.xlu0 %1048
        %v1050 = vsel %vm908, %v1046, inf
        %1051 = vmin.xlane.f32.xlu0 %v1050
        %v1052 = vpop.xlane.xlu0 %1051
        %v1053 = vsel %vm762, %v1049, %v1007
        %v1054 = vsel %vm762, %v1052, %v1008
        %1055 = vst.msk [vmem:[#allocation2] sm:$0xff] %vm767, %v1053
        %1056 = vst.msk [vmem:[#allocation2 + $0x8] sm:$0xff] %vm767, %v1054
        %v1057 = vld [vmem:[#allocation2] sm:$0xff]
        %v1058 = vld [vmem:[#allocation2 + $0x8] sm:$0xff]
        %v1059 = vsel %vm458, %v1057, 4e+30
        %v1060 = vsel %vm767, %v1059, inf
        %1061 = vmin.xlane.f32.xlu0 %v1060
        %v1062 = vpop.xlane.xlu0 %1061
        %v1063 = vsel %vm458, %v1058, 4e+30
        %v1064 = vsel %vm767, %v1063, inf
        %1065 = vmin.xlane.f32.xlu0 %v1064
        %v1066 = vpop.xlane.xlu0 %1065
        %v1067 = vadd.f32 %v1062, 0.0
        %v1068 = vsel %vm794, %v1067, 0.0
        %v1069 = vadd.f32 %v1068, %v1066
        %v1070 = vsel %vm800, %v1069, %v1068
        %v1071 = vsel %vm576, %v1057, 4e+30
        %v1072 = vsel %vm767, %v1071, inf
        %1073 = vmin.xlane.f32.xlu0 %v1072
        %v1074 = vpop.xlane.xlu0 %1073
        %v1075 = vsel %vm576, %v1058, 4e+30
        %v1076 = vsel %vm767, %v1075, inf
        %1077 = vmin.xlane.f32.xlu0 %v1076
        %v1078 = vpop.xlane.xlu0 %1077
        %v1079 = vadd.f32 %v1070, %v1074
        %v1080 = vsel %vm827, %v1079, %v1070
        %v1081 = vadd.f32 %v1080, %v1078
        %v1082 = vsel %vm833, %v1081, %v1080
        %v1083 = vsel %vm669, %v1057, 4e+30
        %v1084 = vsel %vm767, %v1083, inf
        %1085 = vmin.xlane.f32.xlu0 %v1084
        %v1086 = vpop.xlane.xlu0 %1085
        %v1087 = vsel %vm669, %v1058, 4e+30
        %v1088 = vsel %vm767, %v1087, inf
        %1089 = vmin.xlane.f32.xlu0 %v1088
        %v1090 = vpop.xlane.xlu0 %1089
        %v1091 = vadd.f32 %v1082, %v1086
        %v1092 = vsel %vm860, %v1091, %v1082
        %v1093 = vadd.f32 %v1092, %v1090
        %v1094 = vsel %vm866, %v1093, %v1092
        %v1095 = vsel %vm762, %v1057, 4e+30
        %v1096 = vsel %vm767, %v1095, inf
        %1097 = vmin.xlane.f32.xlu0 %v1096
        %v1098 = vpop.xlane.xlu0 %1097
        %v1099 = vsel %vm762, %v1058, 4e+30
        %v1100 = vsel %vm767, %v1099, inf
        %1101 = vmin.xlane.f32.xlu0 %v1100
        %v1102 = vpop.xlane.xlu0 %1101
        %v1103 = vadd.f32 %v1094, %v1098
        %v1104 = vsel %vm893, %v1103, %v1094
        %v1105 = vadd.f32 %v1104, %v1102
        %v1106 = vsel %vm899, %v1105, %v1104
        %v1107 = vsel %vm908, %v1106, inf
        %1108 = vmin.xlane.f32.xlu0 %v1107
        %v1109 = vpop.xlane.xlu0 %1108
        %v1110 = vsel %vm458, %v1109, 0.0
        %vm1111 = vcmp.le.f32.partialorder %v1106, %v1109
        %v1112 = vsel %vm1111, %v305, 16
        %v1113 = vsel %vm908, %v1112, 2147483647
        %v1114 = vand.u32 %v1113, 65535
        %v1115 = vshra.s32 %v1113, 16
        %v1116 = vcvt.s32.f32 %v1114
        %v1117 = vcvt.s32.f32 %v1115
        %1118 = vmin.xlane.f32.xlu0 %v1117
        %v1119 = vpop.xlane.xlu0 %1118
        %vm1120 = vcmp.eq.f32.partialorder %v1117, %v1119
        %v1121 = vsel %vm1120, %v1116, inf
        %1122 = vmin.xlane.f32.xlu0 %v1121
        %v1123 = vpop.xlane.xlu0 %1122
        %v1124 = vcvt.f32.s32 %v1123
        %v1125 = vcvt.f32.s32 %v1119
        %v1126 = vshll.u32 %v1125, 16
        %v1127 = vadd.s32 %v1126, %v1124
        %vm1128 = vcmp.eq.s32.totalorder %v305, %v1127
        %v1129 = vsel %vm1128, 4e+30, %v1106
        %v1130 = vsel %vm908, %v1129, inf
        %1131 = vmin.xlane.f32.xlu0 %v1130
        %v1132 = vpop.xlane.xlu0 %1131
        %v1133 = vsel %vm576, %v1132, %v1110
        %vm1134 = vcmp.le.f32.partialorder %v1129, %v1132
        %v1135 = vsel %vm1134, %v305, 16
        %v1136 = vsel %vm908, %v1135, 2147483647
        %v1137 = vand.u32 %v1136, 65535
        %v1138 = vshra.s32 %v1136, 16
        %v1139 = vcvt.s32.f32 %v1137
        %v1140 = vcvt.s32.f32 %v1138
        %1141 = vmin.xlane.f32.xlu0 %v1140
        %v1142 = vpop.xlane.xlu0 %1141
        %vm1143 = vcmp.eq.f32.partialorder %v1140, %v1142
        %v1144 = vsel %vm1143, %v1139, inf
        %1145 = vmin.xlane.f32.xlu0 %v1144
        %v1146 = vpop.xlane.xlu0 %1145
        %v1147 = vcvt.f32.s32 %v1146
        %v1148 = vcvt.f32.s32 %v1142
        %v1149 = vshll.u32 %v1148, 16
        %v1150 = vadd.s32 %v1149, %v1147
        %vm1151 = vcmp.eq.s32.totalorder %v305, %v1150
        %v1152 = vsel %vm1151, 4e+30, %v1129
        %v1153 = vsel %vm908, %v1152, inf
        %1154 = vmin.xlane.f32.xlu0 %v1153
        %v1155 = vpop.xlane.xlu0 %1154
        %v1156 = vsel %vm669, %v1155, %v1133
        %vm1157 = vcmp.le.f32.partialorder %v1152, %v1155
        %v1158 = vsel %vm1157, %v305, 16
        %v1159 = vsel %vm908, %v1158, 2147483647
        %v1160 = vand.u32 %v1159, 65535
        %v1161 = vshra.s32 %v1159, 16
        %v1162 = vcvt.s32.f32 %v1160
        %v1163 = vcvt.s32.f32 %v1161
        %1164 = vmin.xlane.f32.xlu0 %v1163
        %v1165 = vpop.xlane.xlu0 %1164
        %vm1166 = vcmp.eq.f32.partialorder %v1163, %v1165
        %v1167 = vsel %vm1166, %v1162, inf
        %1168 = vmin.xlane.f32.xlu0 %v1167
        %v1169 = vpop.xlane.xlu0 %1168
        %v1170 = vcvt.f32.s32 %v1169
        %v1171 = vcvt.f32.s32 %v1165
        %v1172 = vshll.u32 %v1171, 16
        %v1173 = vadd.s32 %v1172, %v1170
        %vm1174 = vcmp.eq.s32.totalorder %v305, %v1173
        %v1175 = vsel %vm1174, 4e+30, %v1152
        %v1176 = vsel %vm908, %v1175, inf
        %1177 = vmin.xlane.f32.xlu0 %v1176
        %v1178 = vpop.xlane.xlu0 %1177
        %v1179 = vsel %vm762, %v1178, %v1156
        %1180 = vst.msk [vmem:[#allocation2] sm:$0xff] %vm767, %v1179
        %v1181 = vld [vmem:[#allocation2] sm:$0xf]
        %v1182 = vld [vmem:[#allocation2 + $0x4] sm:$0xf]
        %v1183 = vsel %vm458, %v1181, 4e+30
        %vm1184 = vcmask 27648
        %v1185 = vsel %vm1184, %v1183, inf
        %1186 = vmin.xlane.f32.xlu0 %v1185
        %v1187 = vpop.xlane.xlu0 %1186
        %v1188 = vsel %vm458, %v1182, 4e+30
        %v1189 = vsel %vm1184, %v1188, inf
        %1190 = vmin.xlane.f32.xlu0 %v1189
        %v1191 = vpop.xlane.xlu0 %1190
        %v1192 = vadd.f32 %v1187, 0.0
        %v1193 = vsel %vm794, %v1192, 0.0
        %v1194 = vadd.f32 %v1193, %v1191
        %v1195 = vsel %vm800, %v1194, %v1193
        %v1196 = vsel %vm576, %v1181, 4e+30
        %v1197 = vsel %vm1184, %v1196, inf
        %1198 = vmin.xlane.f32.xlu0 %v1197
        %v1199 = vpop.xlane.xlu0 %1198
        %v1200 = vsel %vm576, %v1182, 4e+30
        %v1201 = vsel %vm1184, %v1200, inf
        %1202 = vmin.xlane.f32.xlu0 %v1201
        %v1203 = vpop.xlane.xlu0 %1202
        %v1204 = vadd.f32 %v1195, %v1199
        %v1205 = vsel %vm827, %v1204, %v1195
        %v1206 = vadd.f32 %v1205, %v1203
        %v1207 = vsel %vm833, %v1206, %v1205
        %v1208 = vsel %vm669, %v1181, 4e+30
        %v1209 = vsel %vm1184, %v1208, inf
        %1210 = vmin.xlane.f32.xlu0 %v1209
        %v1211 = vpop.xlane.xlu0 %1210
        %v1212 = vsel %vm669, %v1182, 4e+30
        %v1213 = vsel %vm1184, %v1212, inf
        %1214 = vmin.xlane.f32.xlu0 %v1213
        %v1215 = vpop.xlane.xlu0 %1214
        %v1216 = vadd.f32 %v1207, %v1211
        %v1217 = vsel %vm860, %v1216, %v1207
        %v1218 = vadd.f32 %v1217, %v1215
        %v1219 = vsel %vm866, %v1218, %v1217
        %v1220 = vsel %vm762, %v1181, 4e+30
        %v1221 = vsel %vm1184, %v1220, inf
        %1222 = vmin.xlane.f32.xlu0 %v1221
        %v1223 = vpop.xlane.xlu0 %1222
        %v1224 = vsel %vm762, %v1182, 4e+30
        %v1225 = vsel %vm1184, %v1224, inf
        %1226 = vmin.xlane.f32.xlu0 %v1225
        %v1227 = vpop.xlane.xlu0 %1226
        %v1228 = vadd.f32 %v1219, %v1223
        %v1229 = vsel %vm893, %v1228, %v1219
        %v1230 = vadd.f32 %v1229, %v1227
        %v1231 = vsel %vm899, %v1230, %v1229
        %vm1232 = vcmask 125952
        %v1233 = vsel %vm1232, %v1231, inf
        %1234 = vmin.xlane.f32.xlu0 %v1233
        %v1235 = vpop.xlane.xlu0 %1234
        %v1236 = vsel %vm458, %v1235, 0.0
        %vm1237 = vcmp.le.f32.partialorder %v1231, %v1235
        %v1238 = vsel %vm1237, %v305, 16
        %v1239 = vsel %vm1232, %v1238, 2147483647
        %v1240 = vand.u32 %v1239, 65535
        %v1241 = vshra.s32 %v1239, 16
        %v1242 = vcvt.s32.f32 %v1240
        %v1243 = vcvt.s32.f32 %v1241
        %1244 = vmin.xlane.f32.xlu0 %v1243
        %v1245 = vpop.xlane.xlu0 %1244
        %vm1246 = vcmp.eq.f32.partialorder %v1243, %v1245
        %v1247 = vsel %vm1246, %v1242, inf
        %1248 = vmin.xlane.f32.xlu0 %v1247
        %v1249 = vpop.xlane.xlu0 %1248
        %v1250 = vcvt.f32.s32 %v1249
        %v1251 = vcvt.f32.s32 %v1245
        %v1252 = vshll.u32 %v1251, 16
        %v1253 = vadd.s32 %v1252, %v1250
        %vm1254 = vcmp.eq.s32.totalorder %v305, %v1253
        %v1255 = vsel %vm1254, 4e+30, %v1231
        %v1256 = vsel %vm1232, %v1255, inf
        %1257 = vmin.xlane.f32.xlu0 %v1256
        %v1258 = vpop.xlane.xlu0 %1257
        %v1259 = vsel %vm576, %v1258, %v1236
        %vm1260 = vcmp.le.f32.partialorder %v1255, %v1258
        %v1261 = vsel %vm1260, %v305, 16
        %v1262 = vsel %vm1232, %v1261, 2147483647
        %v1263 = vand.u32 %v1262, 65535
        %v1264 = vshra.s32 %v1262, 16
        %v1265 = vcvt.s32.f32 %v1263
        %v1266 = vcvt.s32.f32 %v1264
        %1267 = vmin.xlane.f32.xlu0 %v1266
        %v1268 = vpop.xlane.xlu0 %1267
        %vm1269 = vcmp.eq.f32.partialorder %v1266, %v1268
        %v1270 = vsel %vm1269, %v1265, inf
        %1271 = vmin.xlane.f32.xlu0 %v1270
        %v1272 = vpop.xlane.xlu0 %1271
        %v1273 = vcvt.f32.s32 %v1272
        %v1274 = vcvt.f32.s32 %v1268
        %v1275 = vshll.u32 %v1274, 16
        %v1276 = vadd.s32 %v1275, %v1273
        %vm1277 = vcmp.eq.s32.totalorder %v305, %v1276
        %v1278 = vsel %vm1277, 4e+30, %v1255
        %v1279 = vsel %vm1232, %v1278, inf
        %1280 = vmin.xlane.f32.xlu0 %v1279
        %v1281 = vpop.xlane.xlu0 %1280
        %v1282 = vsel %vm669, %v1281, %v1259
        %vm1283 = vcmp.le.f32.partialorder %v1278, %v1281
        %v1284 = vsel %vm1283, %v305, 16
        %v1285 = vsel %vm1232, %v1284, 2147483647
        %v1286 = vand.u32 %v1285, 65535
        %v1287 = vshra.s32 %v1285, 16
        %v1288 = vcvt.s32.f32 %v1286
        %v1289 = vcvt.s32.f32 %v1287
        %1290 = vmin.xlane.f32.xlu0 %v1289
        %v1291 = vpop.xlane.xlu0 %1290
        %vm1292 = vcmp.eq.f32.partialorder %v1289, %v1291
        %v1293 = vsel %vm1292, %v1288, inf
        %1294 = vmin.xlane.f32.xlu0 %v1293
        %v1295 = vpop.xlane.xlu0 %1294
        %v1296 = vcvt.f32.s32 %v1295
        %v1297 = vcvt.f32.s32 %v1291
        %v1298 = vshll.u32 %v1297, 16
        %v1299 = vadd.s32 %v1298, %v1296
        %vm1300 = vcmp.eq.s32.totalorder %v305, %v1299
        %v1301 = vsel %vm1300, 4e+30, %v1278
        %v1302 = vsel %vm1232, %v1301, inf
        %1303 = vmin.xlane.f32.xlu0 %v1302
        %v1304 = vpop.xlane.xlu0 %1303
        %v1305 = vsel %vm762, %v1304, %v1282
        %1306 = vst.msk [vmem:[#allocation2] sm:$0xf] %vm1184, %v1305
        %v1307 = vld [vmem:[#allocation2] sm:$0x3]
        %v1308 = vld [vmem:[#allocation2 + $0x2] sm:$0x3]
        %v1309 = vsel %vm458, %v1307, 4e+30
        %vm1310 = vcmask 25600
        %v1311 = vsel %vm1310, %v1309, inf
        %1312 = vmin.xlane.f32.xlu0 %v1311
        %v1313 = vpop.xlane.xlu0 %1312
        %v1314 = vsel %vm458, %v1308, 4e+30
        %v1315 = vsel %vm1310, %v1314, inf
        %1316 = vmin.xlane.f32.xlu0 %v1315
        %v1317 = vpop.xlane.xlu0 %1316
        %v1318 = vadd.f32 %v1313, 0.0
        %v1319 = vsel %vm794, %v1318, 0.0
        %v1320 = vadd.f32 %v1319, %v1317
        %v1321 = vsel %vm800, %v1320, %v1319
        %v1322 = vsel %vm576, %v1307, 4e+30
        %v1323 = vsel %vm1310, %v1322, inf
        %1324 = vmin.xlane.f32.xlu0 %v1323
        %v1325 = vpop.xlane.xlu0 %1324
        %v1326 = vsel %vm576, %v1308, 4e+30
        %v1327 = vsel %vm1310, %v1326, inf
        %1328 = vmin.xlane.f32.xlu0 %v1327
        %v1329 = vpop.xlane.xlu0 %1328
        %v1330 = vadd.f32 %v1321, %v1325
        %v1331 = vsel %vm827, %v1330, %v1321
        %v1332 = vadd.f32 %v1331, %v1329
        %v1333 = vsel %vm833, %v1332, %v1331
        %v1334 = vsel %vm669, %v1307, 4e+30
        %v1335 = vsel %vm1310, %v1334, inf
        %1336 = vmin.xlane.f32.xlu0 %v1335
        %v1337 = vpop.xlane.xlu0 %1336
        %v1338 = vsel %vm669, %v1308, 4e+30
        %v1339 = vsel %vm1310, %v1338, inf
        %1340 = vmin.xlane.f32.xlu0 %v1339
        %v1341 = vpop.xlane.xlu0 %1340
        %v1342 = vadd.f32 %v1333, %v1337
        %v1343 = vsel %vm860, %v1342, %v1333
        %v1344 = vadd.f32 %v1343, %v1341
        %v1345 = vsel %vm866, %v1344, %v1343
        %v1346 = vsel %vm762, %v1307, 4e+30
        %v1347 = vsel %vm1310, %v1346, inf
        %1348 = vmin.xlane.f32.xlu0 %v1347
        %v1349 = vpop.xlane.xlu0 %1348
        %v1350 = vsel %vm762, %v1308, 4e+30
        %v1351 = vsel %vm1310, %v1350, inf
        %1352 = vmin.xlane.f32.xlu0 %v1351
        %v1353 = vpop.xlane.xlu0 %1352
        %v1354 = vadd.f32 %v1345, %v1349
        %v1355 = vsel %vm893, %v1354, %v1345
        %v1356 = vadd.f32 %v1355, %v1353
        %v1357 = vsel %vm899, %v1356, %v1355
        %vm1358 = vcmask 123904
        %v1359 = vsel %vm1358, %v1357, inf
        %1360 = vmin.xlane.f32.xlu0 %v1359
        %v1361 = vpop.xlane.xlu0 %1360
        %v1362 = vsel %vm458, %v1361, 0.0
        %vm1363 = vcmp.le.f32.partialorder %v1357, %v1361
        %v1364 = vsel %vm1363, %v305, 16
        %v1365 = vsel %vm1358, %v1364, 2147483647
        %v1366 = vand.u32 %v1365, 65535
        %v1367 = vshra.s32 %v1365, 16
        %v1368 = vcvt.s32.f32 %v1366
        %v1369 = vcvt.s32.f32 %v1367
        %1370 = vmin.xlane.f32.xlu0 %v1369
        %v1371 = vpop.xlane.xlu0 %1370
        %vm1372 = vcmp.eq.f32.partialorder %v1369, %v1371
        %v1373 = vsel %vm1372, %v1368, inf
        %1374 = vmin.xlane.f32.xlu0 %v1373
        %v1375 = vpop.xlane.xlu0 %1374
        %v1376 = vcvt.f32.s32 %v1375
        %v1377 = vcvt.f32.s32 %v1371
        %v1378 = vshll.u32 %v1377, 16
        %v1379 = vadd.s32 %v1378, %v1376
        %vm1380 = vcmp.eq.s32.totalorder %v305, %v1379
        %v1381 = vsel %vm1380, 4e+30, %v1357
        %v1382 = vsel %vm1358, %v1381, inf
        %1383 = vmin.xlane.f32.xlu0 %v1382
        %v1384 = vpop.xlane.xlu0 %1383
        %v1385 = vsel %vm576, %v1384, %v1362
        %vm1386 = vcmp.le.f32.partialorder %v1381, %v1384
        %v1387 = vsel %vm1386, %v305, 16
        %v1388 = vsel %vm1358, %v1387, 2147483647
        %v1389 = vand.u32 %v1388, 65535
        %v1390 = vshra.s32 %v1388, 16
        %v1391 = vcvt.s32.f32 %v1389
        %v1392 = vcvt.s32.f32 %v1390
        %1393 = vmin.xlane.f32.xlu0 %v1392
        %v1394 = vpop.xlane.xlu0 %1393
        %vm1395 = vcmp.eq.f32.partialorder %v1392, %v1394
        %v1396 = vsel %vm1395, %v1391, inf
        %1397 = vmin.xlane.f32.xlu0 %v1396
        %v1398 = vpop.xlane.xlu0 %1397
        %v1399 = vcvt.f32.s32 %v1398
        %v1400 = vcvt.f32.s32 %v1394
        %v1401 = vshll.u32 %v1400, 16
        %v1402 = vadd.s32 %v1401, %v1399
        %vm1403 = vcmp.eq.s32.totalorder %v305, %v1402
        %v1404 = vsel %vm1403, 4e+30, %v1381
        %v1405 = vsel %vm1358, %v1404, inf
        %1406 = vmin.xlane.f32.xlu0 %v1405
        %v1407 = vpop.xlane.xlu0 %1406
        %v1408 = vsel %vm669, %v1407, %v1385
        %vm1409 = vcmp.le.f32.partialorder %v1404, %v1407
        %v1410 = vsel %vm1409, %v305, 16
        %v1411 = vsel %vm1358, %v1410, 2147483647
        %v1412 = vand.u32 %v1411, 65535
        %v1413 = vshra.s32 %v1411, 16
        %v1414 = vcvt.s32.f32 %v1412
        %v1415 = vcvt.s32.f32 %v1413
        %1416 = vmin.xlane.f32.xlu0 %v1415
        %v1417 = vpop.xlane.xlu0 %1416
        %vm1418 = vcmp.eq.f32.partialorder %v1415, %v1417
        %v1419 = vsel %vm1418, %v1414, inf
        %1420 = vmin.xlane.f32.xlu0 %v1419
        %v1421 = vpop.xlane.xlu0 %1420
        %v1422 = vcvt.f32.s32 %v1421
        %v1423 = vcvt.f32.s32 %v1417
        %v1424 = vshll.u32 %v1423, 16
        %v1425 = vadd.s32 %v1424, %v1422
        %vm1426 = vcmp.eq.s32.totalorder %v305, %v1425
        %v1427 = vsel %vm1426, 4e+30, %v1404
        %v1428 = vsel %vm1358, %v1427, inf
        %1429 = vmin.xlane.f32.xlu0 %v1428
        %v1430 = vpop.xlane.xlu0 %1429
        %v1431 = vsel %vm762, %v1430, %v1408
        %1432 = vst.msk [vmem:[#allocation2] sm:$0x3] %vm1310, %v1431
        %v1433 = vld [vmem:[#allocation2] sm:$0x1]
        %v1434 = vld [vmem:[#allocation2 + $0x1] sm:$0x1]
        %v1435 = vsel %vm458, %v1433, 4e+30
        %vm1436 = vcmask 24576
        %v1437 = vsel %vm1436, %v1435, inf
        %1438 = vmin.xlane.f32.xlu0 %v1437
        %v1439 = vpop.xlane.xlu0 %1438
        %v1440 = vsel %vm458, %v1434, 4e+30
        %v1441 = vsel %vm1436, %v1440, inf
        %1442 = vmin.xlane.f32.xlu0 %v1441
        %v1443 = vpop.xlane.xlu0 %1442
        %v1444 = vadd.f32 %v1439, 0.0
        %v1445 = vsel %vm794, %v1444, 0.0
        %v1446 = vadd.f32 %v1445, %v1443
        %v1447 = vsel %vm800, %v1446, %v1445
        %v1448 = vsel %vm576, %v1433, 4e+30
        %v1449 = vsel %vm1436, %v1448, inf
        %1450 = vmin.xlane.f32.xlu0 %v1449
        %v1451 = vpop.xlane.xlu0 %1450
        %v1452 = vsel %vm576, %v1434, 4e+30
        %v1453 = vsel %vm1436, %v1452, inf
        %1454 = vmin.xlane.f32.xlu0 %v1453
        %v1455 = vpop.xlane.xlu0 %1454
        %v1456 = vadd.f32 %v1447, %v1451
        %v1457 = vsel %vm827, %v1456, %v1447
        %v1458 = vadd.f32 %v1457, %v1455
        %v1459 = vsel %vm833, %v1458, %v1457
        %v1460 = vsel %vm669, %v1433, 4e+30
        %v1461 = vsel %vm1436, %v1460, inf
        %1462 = vmin.xlane.f32.xlu0 %v1461
        %v1463 = vpop.xlane.xlu0 %1462
        %v1464 = vsel %vm669, %v1434, 4e+30
        %v1465 = vsel %vm1436, %v1464, inf
        %1466 = vmin.xlane.f32.xlu0 %v1465
        %v1467 = vpop.xlane.xlu0 %1466
        %v1468 = vadd.f32 %v1459, %v1463
        %v1469 = vsel %vm860, %v1468, %v1459
        %v1470 = vadd.f32 %v1469, %v1467
        %v1471 = vsel %vm866, %v1470, %v1469
        %v1472 = vsel %vm762, %v1433, 4e+30
        %v1473 = vsel %vm1436, %v1472, inf
        %1474 = vmin.xlane.f32.xlu0 %v1473
        %v1475 = vpop.xlane.xlu0 %1474
        %v1476 = vsel %vm762, %v1434, 4e+30
        %v1477 = vsel %vm1436, %v1476, inf
        %1478 = vmin.xlane.f32.xlu0 %v1477
        %v1479 = vpop.xlane.xlu0 %1478
        %v1480 = vadd.f32 %v1471, %v1475
        %v1481 = vsel %vm893, %v1480, %v1471
        %v1482 = vadd.f32 %v1481, %v1479
        %v1483 = vsel %vm899, %v1482, %v1481
        %vm1484 = vcmask 122880
        %v1485 = vsel %vm1484, %v1483, inf
        %1486 = vmin.xlane.f32.xlu0 %v1485
        %v1487 = vpop.xlane.xlu0 %1486
        %v1488 = vsel %vm458, %v1487, 0.0
        %vm1489 = vcmp.le.f32.partialorder %v1483, %v1487
        %v1490 = vsel %vm1489, %v305, 16
        %v1491 = vsel %vm1484, %v1490, 2147483647
        %v1492 = vand.u32 %v1491, 65535
        %v1493 = vshra.s32 %v1491, 16
        %v1494 = vcvt.s32.f32 %v1492
        %v1495 = vcvt.s32.f32 %v1493
        %1496 = vmin.xlane.f32.xlu0 %v1495
        %v1497 = vpop.xlane.xlu0 %1496
        %vm1498 = vcmp.eq.f32.partialorder %v1495, %v1497
        %v1499 = vsel %vm1498, %v1494, inf
        %1500 = vmin.xlane.f32.xlu0 %v1499
        %v1501 = vpop.xlane.xlu0 %1500
        %v1502 = vcvt.f32.s32 %v1501
        %v1503 = vcvt.f32.s32 %v1497
        %v1504 = vshll.u32 %v1503, 16
        %v1505 = vadd.s32 %v1504, %v1502
        %vm1506 = vcmp.eq.s32.totalorder %v305, %v1505
        %v1507 = vsel %vm1506, 4e+30, %v1483
        %v1508 = vsel %vm1484, %v1507, inf
        %1509 = vmin.xlane.f32.xlu0 %v1508
        %v1510 = vpop.xlane.xlu0 %1509
        %v1511 = vsel %vm576, %v1510, %v1488
        %vm1512 = vcmp.le.f32.partialorder %v1507, %v1510
        %v1513 = vsel %vm1512, %v305, 16
        %v1514 = vsel %vm1484, %v1513, 2147483647
        %v1515 = vand.u32 %v1514, 65535
        %v1516 = vshra.s32 %v1514, 16
        %v1517 = vcvt.s32.f32 %v1515
        %v1518 = vcvt.s32.f32 %v1516
        %1519 = vmin.xlane.f32.xlu0 %v1518
        %v1520 = vpop.xlane.xlu0 %1519
        %vm1521 = vcmp.eq.f32.partialorder %v1518, %v1520
        %v1522 = vsel %vm1521, %v1517, inf
        %1523 = vmin.xlane.f32.xlu0 %v1522
        %v1524 = vpop.xlane.xlu0 %1523
        %v1525 = vcvt.f32.s32 %v1524
        %v1526 = vcvt.f32.s32 %v1520
        %v1527 = vshll.u32 %v1526, 16
        %v1528 = vadd.s32 %v1527, %v1525
        %vm1529 = vcmp.eq.s32.totalorder %v305, %v1528
        %v1530 = vsel %vm1529, 4e+30, %v1507
        %v1531 = vsel %vm1484, %v1530, inf
        %1532 = vmin.xlane.f32.xlu0 %v1531
        %v1533 = vpop.xlane.xlu0 %1532
        %v1534 = vsel %vm669, %v1533, %v1511
        %vm1535 = vcmp.le.f32.partialorder %v1530, %v1533
        %v1536 = vsel %vm1535, %v305, 16
        %v1537 = vsel %vm1484, %v1536, 2147483647
        %v1538 = vand.u32 %v1537, 65535
        %v1539 = vshra.s32 %v1537, 16
        %v1540 = vcvt.s32.f32 %v1538
        %v1541 = vcvt.s32.f32 %v1539
        %1542 = vmin.xlane.f32.xlu0 %v1541
        %v1543 = vpop.xlane.xlu0 %1542
        %vm1544 = vcmp.eq.f32.partialorder %v1541, %v1543
        %v1545 = vsel %vm1544, %v1540, inf
        %1546 = vmin.xlane.f32.xlu0 %v1545
        %v1547 = vpop.xlane.xlu0 %1546
        %v1548 = vcvt.f32.s32 %v1547
        %v1549 = vcvt.f32.s32 %v1543
        %v1550 = vshll.u32 %v1549, 16
        %v1551 = vadd.s32 %v1550, %v1548
        %vm1552 = vcmp.eq.s32.totalorder %v305, %v1551
        %v1553 = vsel %vm1552, 4e+30, %v1530
        %v1554 = vsel %vm1484, %v1553, inf
        %1555 = vmin.xlane.f32.xlu0 %v1554
        %v1556 = vpop.xlane.xlu0 %1555
        %v1557 = vsel %vm762, %v1556, %v1534
        %1558 = vst.msk [vmem:[#allocation2] sm:$0x1] %vm1436, %v1557
        %v1559 = vld [vmem:[#allocation4] sm:$0x1]
        %v1560 = vld [vmem:[#allocation2] sm:$0x1]
        %v1561 = vsel %vm458, %v1559, 4e+30
        %v1562 = vsel %vm1436, %v1561, inf
        %1563 = vmin.xlane.f32.xlu0 %v1562
        %v1564 = vpop.xlane.xlu0 %1563
        %v1565 = vsel %vm458, %v1560, 4e+30
        %v1566 = vsel %vm1436, %v1565, inf
        %1567 = vmin.xlane.f32.xlu0 %v1566
        %v1568 = vpop.xlane.xlu0 %1567
        %v1569 = vadd.f32 %v1564, 0.0
        %v1570 = vsel %vm794, %v1569, 0.0
        %v1571 = vadd.f32 %v1570, %v1568
        %v1572 = vsel %vm800, %v1571, %v1570
        %v1573 = vsel %vm576, %v1559, 4e+30
        %v1574 = vsel %vm1436, %v1573, inf
        %1575 = vmin.xlane.f32.xlu0 %v1574
        %v1576 = vpop.xlane.xlu0 %1575
        %v1577 = vsel %vm576, %v1560, 4e+30
        %v1578 = vsel %vm1436, %v1577, inf
        %1579 = vmin.xlane.f32.xlu0 %v1578
        %v1580 = vpop.xlane.xlu0 %1579
        %v1581 = vadd.f32 %v1572, %v1576
        %v1582 = vsel %vm827, %v1581, %v1572
        %v1583 = vadd.f32 %v1582, %v1580
        %v1584 = vsel %vm833, %v1583, %v1582
        %v1585 = vsel %vm669, %v1559, 4e+30
        %v1586 = vsel %vm1436, %v1585, inf
        %1587 = vmin.xlane.f32.xlu0 %v1586
        %v1588 = vpop.xlane.xlu0 %1587
        %v1589 = vsel %vm669, %v1560, 4e+30
        %v1590 = vsel %vm1436, %v1589, inf
        %1591 = vmin.xlane.f32.xlu0 %v1590
        %v1592 = vpop.xlane.xlu0 %1591
        %v1593 = vadd.f32 %v1584, %v1588
        %v1594 = vsel %vm860, %v1593, %v1584
        %v1595 = vadd.f32 %v1594, %v1592
        %v1596 = vsel %vm866, %v1595, %v1594
        %v1597 = vsel %vm762, %v1559, 4e+30
        %v1598 = vsel %vm1436, %v1597, inf
        %1599 = vmin.xlane.f32.xlu0 %v1598
        %v1600 = vpop.xlane.xlu0 %1599
        %v1601 = vsel %vm762, %v1560, 4e+30
        %v1602 = vsel %vm1436, %v1601, inf
        %1603 = vmin.xlane.f32.xlu0 %v1602
        %v1604 = vpop.xlane.xlu0 %1603
        %v1605 = vadd.f32 %v1596, %v1600
        %v1606 = vsel %vm893, %v1605, %v1596
        %v1607 = vadd.f32 %v1606, %v1604
        %v1608 = vsel %vm899, %v1607, %v1606
        %v1609 = vsel %vm1484, %v1608, inf
        %1610 = vmin.xlane.f32.xlu0 %v1609
        %v1611 = vpop.xlane.xlu0 %1610
        %v1612 = vsel %vm458, %v1611, 0.0
        %vm1613 = vcmp.le.f32.partialorder %v1608, %v1611
        %v1614 = vsel %vm1613, %v305, 16
        %v1615 = vsel %vm1484, %v1614, 2147483647
        %v1616 = vand.u32 %v1615, 65535
        %v1617 = vshra.s32 %v1615, 16
        %v1618 = vcvt.s32.f32 %v1616
        %v1619 = vcvt.s32.f32 %v1617
        %1620 = vmin.xlane.f32.xlu0 %v1619
        %v1621 = vpop.xlane.xlu0 %1620
        %vm1622 = vcmp.eq.f32.partialorder %v1619, %v1621
        %v1623 = vsel %vm1622, %v1618, inf
        %1624 = vmin.xlane.f32.xlu0 %v1623
        %v1625 = vpop.xlane.xlu0 %1624
        %v1626 = vcvt.f32.s32 %v1625
        %v1627 = vcvt.f32.s32 %v1621
        %v1628 = vshll.u32 %v1627, 16
        %v1629 = vadd.s32 %v1628, %v1626
        %vm1630 = vcmp.eq.s32.totalorder %v305, %v1629
        %v1631 = vsel %vm1630, 4e+30, %v1608
        %v1632 = vsel %vm1484, %v1631, inf
        %1633 = vmin.xlane.f32.xlu0 %v1632
        %v1634 = vpop.xlane.xlu0 %1633
        %v1635 = vsel %vm576, %v1634, %v1612
        %vm1636 = vcmp.le.f32.partialorder %v1631, %v1634
        %v1637 = vsel %vm1636, %v305, 16
        %v1638 = vsel %vm1484, %v1637, 2147483647
        %v1639 = vand.u32 %v1638, 65535
        %v1640 = vshra.s32 %v1638, 16
        %v1641 = vcvt.s32.f32 %v1639
        %v1642 = vcvt.s32.f32 %v1640
        %1643 = vmin.xlane.f32.xlu0 %v1642
        %v1644 = vpop.xlane.xlu0 %1643
        %vm1645 = vcmp.eq.f32.partialorder %v1642, %v1644
        %v1646 = vsel %vm1645, %v1641, inf
        %1647 = vmin.xlane.f32.xlu0 %v1646
        %v1648 = vpop.xlane.xlu0 %1647
        %v1649 = vcvt.f32.s32 %v1648
        %v1650 = vcvt.f32.s32 %v1644
        %v1651 = vshll.u32 %v1650, 16
        %v1652 = vadd.s32 %v1651, %v1649
        %vm1653 = vcmp.eq.s32.totalorder %v305, %v1652
        %v1654 = vsel %vm1653, 4e+30, %v1631
        %v1655 = vsel %vm1484, %v1654, inf
        %1656 = vmin.xlane.f32.xlu0 %v1655
        %v1657 = vpop.xlane.xlu0 %1656
        %v1658 = vsel %vm669, %v1657, %v1635
        %vm1659 = vcmp.le.f32.partialorder %v1654, %v1657
        %v1660 = vsel %vm1659, %v305, 16
        %v1661 = vsel %vm1484, %v1660, 2147483647
        %v1662 = vand.u32 %v1661, 65535
        %v1663 = vshra.s32 %v1661, 16
        %v1664 = vcvt.s32.f32 %v1662
        %v1665 = vcvt.s32.f32 %v1663
        %1666 = vmin.xlane.f32.xlu0 %v1665
        %v1667 = vpop.xlane.xlu0 %1666
        %vm1668 = vcmp.eq.f32.partialorder %v1665, %v1667
        %v1669 = vsel %vm1668, %v1664, inf
        %1670 = vmin.xlane.f32.xlu0 %v1669
        %v1671 = vpop.xlane.xlu0 %1670
        %v1672 = vcvt.f32.s32 %v1671
        %v1673 = vcvt.f32.s32 %v1667
        %v1674 = vshll.u32 %v1673, 16
        %v1675 = vadd.s32 %v1674, %v1672
        %vm1676 = vcmp.eq.s32.totalorder %v305, %v1675
        %v1677 = vsel %vm1676, 4e+30, %v1654
        %v1678 = vsel %vm1484, %v1677, inf
        %1679 = vmin.xlane.f32.xlu0 %v1678
        %v1680 = vpop.xlane.xlu0 %1679
        %v1681 = vsel %vm762, %v1680, %v1658
        %1682 = vst.msk [vmem:[#allocation4] sm:$0x1] %vm1436, %v1681
        // Predicated region
        $region33: #{tpu_custom_call.1} parent=23 // pred_check
          %p1683 = pneg %p424
        $region34: #{tpu_custom_call.1} parent=23 // pred_check_branch
          %1685 = sbr.rel (%p1683) target = $region36
        $region35: #{tpu_custom_call.1} parent=23 // pred_region
          %v1686 = vld [vmem:[#allocation3] sm:$0x1]
          %1687 = vst.msk [vmem:[%s262] sm:$0x1] %vm436, %v1686
          %v1688 = vld [vmem:[#allocation4] sm:$0x1]
          %1689 = vst.msk [vmem:[%s242] sm:$0x1] %vm1436, %v1688
        $region36: #{tpu_custom_call.1} parent=23 // pred_fallthru
          _
        %s1690 = sadd.s32 %s27, %s28
        %s1691 = smul.u32 4, %s1690
        %p1692 = scmp.lt.s32.totalorder %s26, 1
        %s1693 = scalar_select %p1692, %s26, 1
        %p1694 = scmp.lt.s32.totalorder %s1691, 3
        %s1695 = scalar_select %p1694, %s1691, 3
        %s1696 = smul.addr %s1693, 4
        %s1697 = sadd.s32 %s1695, %s1696
        %s1698 = smul.addr %s1697, 8
        %s1699 = scalar_lea.vmem %s1, %s1698
        %p1700 = scmp.lt.s32.totalorder %s26, 1
        %s1701 = scalar_select %p1700, %s26, 1
        %p1702 = scmp.lt.s32.totalorder %s27, 0
        %s1703 = scalar_select %p1702, %s27, 0
        %s1704 = sadd.s32 %s1703, %s1701
        %s1705 = scalar_lea.vmem %s2, %s1704
        %s1706 = sand.u32 %s138, 1
        %s1707 = scalar_lea.sflag [#allocation7], %s1706
        %s1708 = sand.u32 %s138, 1
        %s1709 = scalar_lea.vmem [#allocation8], %s1708
        // Predicated region
        $region37: #{tpu_custom_call.1} parent=23 // pred_check
          %p1710 = pneg %p92
        $region38: #{tpu_custom_call.1} parent=23 // pred_check_branch
          %1712 = sbr.rel (%p1710) target = $region40
        $region39: #{tpu_custom_call.1} parent=23 // pred_region
          %s1713 = sadd.s32 %s27, %s28
          %s1714 = smul.u32 4, %s1713
        $region40: #{tpu_custom_call.1} parent=23 // pred_fallthru
          _
        // Predicated region
        $region41: #{tpu_custom_call.1} parent=23 // pred_check
          %p1715 = pneg %p120
        $region42: #{tpu_custom_call.1} parent=23 // pred_check_branch
          %1717 = sbr.rel (%p1715) target = $region44
        $region43: #{tpu_custom_call.1} parent=23 // pred_region
          _
        $region44: #{tpu_custom_call.1} parent=23 // pred_fallthru
          _
        // Predicated region
        $region45: #{tpu_custom_call.1} parent=23 // pred_check
          %p1718 = pneg %p148
        $region46: #{tpu_custom_call.1} parent=23 // pred_check_branch
          %1720 = sbr.rel (%p1718) target = $region48
        $region47: #{tpu_custom_call.1} parent=23 // pred_region
          %s1722 = ssub.s32 16, 16
          %1723 = vsyncadd %s1707, %s1722
          %s1724 = sadd.s32 %s27, %s26
          %s1725 = smul.addr %s1724, 16
          %s1726 = scalar_lea.hbm %s3, %s1725
          %s1728 = sshll.u32 %s1709, 4
          %s1729 = int_to_ptr.vmem [resolvable:$true] %s1728
          %1731 = dma.vmem_to_hbm [thread:$0]  %s1729, 16, %s1726, %s1707
        $region48: #{tpu_custom_call.1} parent=23 // pred_fallthru
          _
      $region24: #{tpu_custom_call.1} parent=5 // pred_fallthru
        _
      %p1732 = scmp.le.s32.totalorder 2, %s16
      // Predicated region
      $region49: #{tpu_custom_call.1} parent=5 // pred_check
        %p1733 = pneg %p1732
      $region50: #{tpu_custom_call.1} parent=5 // pred_check_branch
        %1735 = sbr.rel (%p1733) target = $region52
      $region51: #{tpu_custom_call.1} parent=5 // pred_region
        %s1736 = ssub.s32 %s16, 2
        // Predicated region
        $region53: #{tpu_custom_call.1} parent=51 // pred_check
          %p1737 = pneg %p98
        $region54: #{tpu_custom_call.1} parent=51 // pred_check_branch
          %1739 = sbr.rel (%p1737) target = $region56
        $region55: #{tpu_custom_call.1} parent=51 // pred_region
          %s1740 = sadd.s32 %s30, %s31
          %s1741 = smul.u32 4, %s1740
          %p1742 = scmp.lt.s32.totalorder %s29, 1
          %s1743 = scalar_select %p1742, %s29, 1
          %p1744 = scmp.lt.s32.totalorder %s1741, 3
          %s1745 = scalar_select %p1744, %s1741, 3
          %s1746 = smul.addr %s1743, 4
          %s1747 = sadd.s32 %s1745, %s1746
          %s1748 = smul.addr %s1747, 8
          %s1749 = scalar_lea.vmem %s1, %s1748
        $region56: #{tpu_custom_call.1} parent=51 // pred_fallthru
          _
        // Predicated region
        $region57: #{tpu_custom_call.1} parent=51 // pred_check
          %p1750 = pneg %p126
        $region58: #{tpu_custom_call.1} parent=51 // pred_check_branch
          %1752 = sbr.rel (%p1750) target = $region60
        $region59: #{tpu_custom_call.1} parent=51 // pred_region
          %p1753 = scmp.lt.s32.totalorder %s29, 1
          %s1754 = scalar_select %p1753, %s29, 1
          %p1755 = scmp.lt.s32.totalorder %s30, 0
          %s1756 = scalar_select %p1755, %s30, 0
          %s1757 = sadd.s32 %s1756, %s1754
          %s1758 = scalar_lea.vmem %s2, %s1757
        $region60: #{tpu_custom_call.1} parent=51 // pred_fallthru
          _
        // Predicated region
        $region61: #{tpu_custom_call.1} parent=51 // pred_check
          %p1759 = pneg %p154
        $region62: #{tpu_custom_call.1} parent=51 // pred_check_branch
          %1761 = sbr.rel (%p1759) target = $region64
        $region63: #{tpu_custom_call.1} parent=51 // pred_region
          %s1762 = sand.u32 %s139, 1
          %s1763 = scalar_lea.sflag [#allocation7], %s1762
          %s1764 = sand.u32 %s139, 1
          %s1765 = scalar_lea.vmem [#allocation8], %s1764
          %1766 = dma.done %s1763, 16
        $region64: #{tpu_custom_call.1} parent=51 // pred_fallthru
          _
      $region52: #{tpu_custom_call.1} parent=5 // pred_fallthru
        _
    $region6: #{tpu_custom_call.1} parent=1 // loop_footer
      %s20 = sadd.s32 1, %s16
    $region7: #{tpu_custom_call.1} parent=1 // loop_footer_branch
      %15 = sbr.rel target = $region3
    $region8: #{tpu_custom_call.1} parent=1 // loop_exit
      _
    %1767 = vsyncpa [#allocation6], 1
    %s1768 = scalar_lea.sflag [#allocation6], 1
    %1769 = vsyncpa %s1768, 1
    %1770 = vsyncpa [#allocation7], 1
    %s1771 = scalar_lea.sflag [#allocation7], 1
    %1772 = vsyncpa %s1771, 1

</llo_original>
